<compile_context>
chip_gen: v7x
topology: tpu7x:2x2x1
jax: 0.10.0
libtpu: 0.0.40
codegen_flags: <defaults>
</compile_context>

<pallas_src>
import numpy as np

import jax
import jax.numpy as jnp
from jax.experimental import pallas as pl
from jax.experimental.pallas import tpu as pltpu


_BLOCK_PIXELS = 131072           # input pixels (H*W elements) per grid step
_MAX_FUSED_W = 512               # above this the dilation constants get too big
_VMEM_LIMIT = 32 * 1024 * 1024   # raise v5e's 16 MiB default; <= v6e/v7x defaults


def _fused_kernel(w_ref, b_ref, d_ref, x_ref, o_ref):
    """Fused channel contraction + pixel-shuffle for one block of input rows.

    w_ref : (4, Cin)     SMEM  -- row k = kh*2 + kw  (scalar weights)
    b_ref : (1,)         SMEM  -- scalar bias
    d_ref : (2, W, 2W)   VMEM  -- constant 0/1 dilation matrices (kw=0 / kw=1)
    x_ref : (Cin, TH, W) VMEM  -- TH input rows, W on lanes
    o_ref : (TH, 4W)     VMEM  -- row h = [ out[2h, :] | out[2h+1, :] ]
    """
    cin = x_ref.shape[0]
    b = b_ref[0]
    f32 = jnp.float32
    hi = jax.lax.Precision.HIGHEST   # exact f32 pass-through of the 0/1 matmul

    def plane(k):  # (TH, W) tap plane via scalar*vector FMAs (VPU)
        acc = w_ref[k, 0] * x_ref[0]
        for c in range(1, cin):
            acc = acc + w_ref[k, c] * x_ref[c]
        return acc

    # Lane interleave on the MXU:  row_kh[:, 2w+kw] = plane(kh*2+kw)[:, w] + b
    row0 = (jnp.dot(plane(0), d_ref[0], preferred_element_type=f32, precision=hi)
            + jnp.dot(plane(1), d_ref[1], preferred_element_type=f32, precision=hi)
            + b)
    row1 = (jnp.dot(plane(2), d_ref[0], preferred_element_type=f32, precision=hi)
            + jnp.dot(plane(3), d_ref[1], preferred_element_type=f32, precision=hi)
            + b)
    o_ref[...] = jnp.concatenate([row0, row1], axis=-1)


def _flat_kernel(w_ref, b_ref, x_ref, o_ref):
    """Fallback (large W): per-tile channel contraction, sub-pixel planes out.

    w_ref : (4, Cin)  VMEM ; b_ref : (1,) SMEM ; x_ref : (Cin, T) ; o_ref : (4, T)
    """
    x = x_ref[...]                       # (Cin, T)
    w = w_ref[...]                       # (4, Cin)
    cin = x.shape[0]
    acc = w[:, 0:1] * x[0:1, :]
    for c in range(1, cin):              # static unroll (Cin = 5)
        acc = acc + w[:, c:c + 1] * x[c:c + 1, :]
    o_ref[...] = acc + b_ref[0]


@jax.jit
def conv_transpose2d_s2k2(x_nchw, weight, bias):
    """ConvTranspose2d(Cin=5, Cout=1, k=2, s=2, p=0) forward.

    x_nchw : (1, Cin, H, W) float32
    weight : (Cin, 1, 2, 2) float32 (PyTorch ConvTranspose2d layout)
    bias   : (1,)           float32
    returns: (1, 1, 2H, 2W) float32
    """
    n, cin, h, w = x_nchw.shape
    assert n == 1 and weight.shape[1] == 1 and weight.shape[2:] == (2, 2)

    # (4, Cin) with row index k = kh*2 + kw.
    w_t = weight[:, 0, :, :].reshape(cin, 4).T.astype(jnp.float32)
    b = bias.reshape(1).astype(jnp.float32)
    x3 = x_nchw[0].astype(jnp.float32)           # (Cin, H, W): free squeeze, no copy

    if w <= _MAX_FUSED_W:
        # ---- fused path: kernel emits the final (2H, 2W) memory layout ----
        th = min(h, max(1, _BLOCK_PIXELS // max(w, 1)))
        if th < h:
            th = max(8, (th // 8) * 8)           # sublane-aligned row tiles
        grid = (pl.cdiv(h, th),)

        # Constant dilation matrices: D[kw][w', 2*w' + kw] = 1 (trace-time numpy,
        # so they are baked as constants -- no runtime op to build them).
        d_np = np.zeros((2, w, 2 * w), np.float32)
        ar = np.arange(w)
        d_np[0, ar, 2 * ar] = 1.0
        d_np[1, ar, 2 * ar + 1] = 1.0
        d = jnp.asarray(d_np)

        out2 = pl.pallas_call(
            _fused_kernel,
            out_shape=jax.ShapeDtypeStruct((h, 4 * w), jnp.float32),
            grid_spec=pltpu.PrefetchScalarGridSpec(
                num_scalar_prefetch=0,
                grid=grid,
                in_specs=[
                    pl.BlockSpec(memory_space=pltpu.SMEM),              # weights (4,Cin)
                    pl.BlockSpec(memory_space=pltpu.SMEM),              # bias (1,)
                    pl.BlockSpec((2, w, 2 * w), lambda i: (0, 0, 0)),   # dilation consts
                    pl.BlockSpec((cin, th, w), lambda i: (0, i, 0)),    # input row block
                ],
                out_specs=pl.BlockSpec((th, 4 * w), lambda i: (i, 0)),  # lane-dense out
            ),
            compiler_params=pltpu.CompilerParams(
                dimension_semantics=("parallel",) if grid[0] > 1 else ("arbitrary",),
                vmem_limit_bytes=_VMEM_LIMIT,
            ),
        )(w_t, b, d, x3)
        # (H, 4W) row-major == (2H, 2W) row-major: layout-preserving reshape only.
        return out2.reshape(1, 1, 2 * h, 2 * w)

    # ---- fallback for very large W: (4, HW) planes + XLA pixel-shuffle ----
    hw = h * w
    x_mat = x3.reshape(cin, hw)                  # pure reshape (N == 1)
    tile_hw = hw if hw <= _BLOCK_PIXELS else _BLOCK_PIXELS
    grid = (pl.cdiv(hw, tile_hw),)

    out_mat = pl.pallas_call(
        _flat_kernel,
        out_shape=jax.ShapeDtypeStruct((4, hw), jnp.float32),
        grid_spec=pltpu.PrefetchScalarGridSpec(
            num_scalar_prefetch=0,
            grid=grid,
            in_specs=[
                pl.BlockSpec((4, cin), lambda i: (0, 0)),
                pl.BlockSpec(memory_space=pltpu.SMEM),
                pl.BlockSpec((cin, tile_hw), lambda i: (0, i)),
            ],
            out_specs=pl.BlockSpec((4, tile_hw), lambda i: (0, i)),
        ),
        compiler_params=pltpu.CompilerParams(
            dimension_semantics=("parallel",) if grid[0] > 1 else ("arbitrary",),
            vmem_limit_bytes=_VMEM_LIMIT,
        ),
    )(w_t, b, x_mat)

    out = (out_mat.reshape(2, 2, h, w).transpose(2, 0, 3, 1).reshape(2 * h, 2 * w))
    return out[None, None, :, :]


if __name__ == "__main__":
    key = jax.random.PRNGKey(0)
    k_x, k_w, k_b = jax.random.split(key, 3)

    N, CIN, H, W = 1, 5, 64, 64  # matches the module spec input (1, 5, 64, 64)
    x = jax.random.normal(k_x, (N, CIN, H, W), dtype=jnp.float32)
    # ConvTranspose2d weight shape: (in_channels, out_channels, kH, kW)
    weight = jax.random.normal(k_w, (CIN, 1, 2, 2), dtype=jnp.float32) * 0.1
    bias = jax.random.normal(k_b, (1,), dtype=jnp.float32) * 0.1

    out = conv_transpose2d_s2k2(x, weight, bias)
    out = jax.block_until_ready(out)

    # Independent pure-JAX reference: explicit stride-2 scatter of the 4 taps.
    ref = jnp.zeros((2 * H, 2 * W), dtype=jnp.float32)
    for kh in range(2):
        for kw in range(2):
            plane = jnp.einsum("chw,c->hw", x[0], weight[:, 0, kh, kw]) + bias[0]
            ref = ref.at[kh::2, kw::2].set(plane)
    ref = ref[None, None, :, :]

    assert out.shape == (1, 1, 2 * H, 2 * W), out.shape
    assert jnp.allclose(out, ref, atol=1e-5, rtol=1e-5)

    print("KERNEL_OK")
</pallas_src>

<mosaic_0001>
module attributes {stable_mosaic.version = 11 : i64} {
  func.func @_fused_kernel(%arg0: i32, %arg1: memref<4x5xf32, #tpu.memory_space<smem>>, %arg2: memref<1xf32, #tpu.memory_space<smem>>, %arg3: memref<2x64x128xf32, #tpu.memory_space<vmem>>, %arg4: memref<5x64x64xf32, #tpu.memory_space<vmem>>, %arg5: memref<64x256xf32, #tpu.memory_space<vmem>>) attributes {dimension_semantics = [#tpu.dimension_semantics<arbitrary>], iteration_bounds = array<i64: 1>, scalar_prefetch = 0 : i64, scratch_operands = 0 : i64, tpu.core_type = #tpu.core_type<tc>, window_params = [{transform_indices = @transform_0, window_bounds = array<i64: 4, 5>}, {transform_indices = @transform_1, window_bounds = array<i64: 1>}, {pipeline_mode = #tpu.pipeline_mode<synchronous>, transform_indices = @transform_2, window_bounds = array<i64: 2, 64, 128>}, {transform_indices = @transform_3, window_bounds = array<i64: 5, 64, 64>}, {transform_indices = @transform_4, window_bounds = array<i64: 64, 256>}]} {
    %c0 = arith.constant 0 : index
    %0 = memref.load %arg2[%c0] : memref<1xf32, #tpu.memory_space<smem>>
    %c0_0 = arith.constant 0 : index
    %c0_1 = arith.constant 0 : index
    %1 = memref.load %arg1[%c0_0, %c0_1] : memref<4x5xf32, #tpu.memory_space<smem>>
    %c0_2 = arith.constant 0 : index
    %c0_3 = arith.constant 0 : index
    %c0_4 = arith.constant 0 : index
    %2 = vector.load %arg4[%c0_2, %c0_3, %c0_4] : memref<5x64x64xf32, #tpu.memory_space<vmem>>, vector<1x64x64xf32>
    %3 = vector.shape_cast %2 : vector<1x64x64xf32> to vector<64x64xf32>
    %4 = vector.broadcast %1 : f32 to vector<64x64xf32>
    %5 = arith.mulf %4, %3 : vector<64x64xf32>
    %c0_5 = arith.constant 0 : index
    %c1 = arith.constant 1 : index
    %6 = memref.load %arg1[%c0_5, %c1] : memref<4x5xf32, #tpu.memory_space<smem>>
    %c1_6 = arith.constant 1 : index
    %c0_7 = arith.constant 0 : index
    %c0_8 = arith.constant 0 : index
    %7 = vector.load %arg4[%c1_6, %c0_7, %c0_8] : memref<5x64x64xf32, #tpu.memory_space<vmem>>, vector<1x64x64xf32>
    %8 = vector.shape_cast %7 : vector<1x64x64xf32> to vector<64x64xf32>
    %9 = vector.broadcast %6 : f32 to vector<64x64xf32>
    %10 = arith.mulf %9, %8 : vector<64x64xf32>
    %11 = arith.addf %5, %10 : vector<64x64xf32>
    %c0_9 = arith.constant 0 : index
    %c2 = arith.constant 2 : index
    %12 = memref.load %arg1[%c0_9, %c2] : memref<4x5xf32, #tpu.memory_space<smem>>
    %c2_10 = arith.constant 2 : index
    %c0_11 = arith.constant 0 : index
    %c0_12 = arith.constant 0 : index
    %13 = vector.load %arg4[%c2_10, %c0_11, %c0_12] : memref<5x64x64xf32, #tpu.memory_space<vmem>>, vector<1x64x64xf32>
    %14 = vector.shape_cast %13 : vector<1x64x64xf32> to vector<64x64xf32>
    %15 = vector.broadcast %12 : f32 to vector<64x64xf32>
    %16 = arith.mulf %15, %14 : vector<64x64xf32>
    %17 = arith.addf %11, %16 : vector<64x64xf32>
    %c0_13 = arith.constant 0 : index
    %c3 = arith.constant 3 : index
    %18 = memref.load %arg1[%c0_13, %c3] : memref<4x5xf32, #tpu.memory_space<smem>>
    %c3_14 = arith.constant 3 : index
    %c0_15 = arith.constant 0 : index
    %c0_16 = arith.constant 0 : index
    %19 = vector.load %arg4[%c3_14, %c0_15, %c0_16] : memref<5x64x64xf32, #tpu.memory_space<vmem>>, vector<1x64x64xf32>
    %20 = vector.shape_cast %19 : vector<1x64x64xf32> to vector<64x64xf32>
    %21 = vector.broadcast %18 : f32 to vector<64x64xf32>
    %22 = arith.mulf %21, %20 : vector<64x64xf32>
    %23 = arith.addf %17, %22 : vector<64x64xf32>
    %c0_17 = arith.constant 0 : index
    %c4 = arith.constant 4 : index
    %24 = memref.load %arg1[%c0_17, %c4] : memref<4x5xf32, #tpu.memory_space<smem>>
    %c4_18 = arith.constant 4 : index
    %c0_19 = arith.constant 0 : index
    %c0_20 = arith.constant 0 : index
    %25 = vector.load %arg4[%c4_18, %c0_19, %c0_20] : memref<5x64x64xf32, #tpu.memory_space<vmem>>, vector<1x64x64xf32>
    %26 = vector.shape_cast %25 : vector<1x64x64xf32> to vector<64x64xf32>
    %27 = vector.broadcast %24 : f32 to vector<64x64xf32>
    %28 = arith.mulf %27, %26 : vector<64x64xf32>
    %29 = arith.addf %23, %28 : vector<64x64xf32>
    %c0_21 = arith.constant 0 : index
    %c0_22 = arith.constant 0 : index
    %c0_23 = arith.constant 0 : index
    %30 = vector.load %arg3[%c0_21, %c0_22, %c0_23] : memref<2x64x128xf32, #tpu.memory_space<vmem>>, vector<1x64x128xf32>
    %31 = vector.shape_cast %30 : vector<1x64x128xf32> to vector<64x128xf32>
    %cst = arith.constant dense<0.000000e+00> : vector<64x128xf32>
    %32 = tpu.matmul %29, %31, %cst {dimension_numbers = #tpu.dot_dimension_numbers<[1], [0], [0], [1], [0, 0, 1, 1], [], []>, precision = #tpu.contract_precision<fp32>} : vector<64x64xf32>, vector<64x128xf32>, vector<64x128xf32> -> vector<64x128xf32>
    %c1_24 = arith.constant 1 : index
    %c0_25 = arith.constant 0 : index
    %33 = memref.load %arg1[%c1_24, %c0_25] : memref<4x5xf32, #tpu.memory_space<smem>>
    %c0_26 = arith.constant 0 : index
    %c0_27 = arith.constant 0 : index
    %c0_28 = arith.constant 0 : index
    %34 = vector.load %arg4[%c0_26, %c0_27, %c0_28] : memref<5x64x64xf32, #tpu.memory_space<vmem>>, vector<1x64x64xf32>
    %35 = vector.shape_cast %34 : vector<1x64x64xf32> to vector<64x64xf32>
    %36 = vector.broadcast %33 : f32 to vector<64x64xf32>
    %37 = arith.mulf %36, %35 : vector<64x64xf32>
    %c1_29 = arith.constant 1 : index
    %c1_30 = arith.constant 1 : index
    %38 = memref.load %arg1[%c1_29, %c1_30] : memref<4x5xf32, #tpu.memory_space<smem>>
    %c1_31 = arith.constant 1 : index
    %c0_32 = arith.constant 0 : index
    %c0_33 = arith.constant 0 : index
    %39 = vector.load %arg4[%c1_31, %c0_32, %c0_33] : memref<5x64x64xf32, #tpu.memory_space<vmem>>, vector<1x64x64xf32>
    %40 = vector.shape_cast %39 : vector<1x64x64xf32> to vector<64x64xf32>
    %41 = vector.broadcast %38 : f32 to vector<64x64xf32>
    %42 = arith.mulf %41, %40 : vector<64x64xf32>
    %43 = arith.addf %37, %42 : vector<64x64xf32>
    %c1_34 = arith.constant 1 : index
    %c2_35 = arith.constant 2 : index
    %44 = memref.load %arg1[%c1_34, %c2_35] : memref<4x5xf32, #tpu.memory_space<smem>>
    %c2_36 = arith.constant 2 : index
    %c0_37 = arith.constant 0 : index
    %c0_38 = arith.constant 0 : index
    %45 = vector.load %arg4[%c2_36, %c0_37, %c0_38] : memref<5x64x64xf32, #tpu.memory_space<vmem>>, vector<1x64x64xf32>
    %46 = vector.shape_cast %45 : vector<1x64x64xf32> to vector<64x64xf32>
    %47 = vector.broadcast %44 : f32 to vector<64x64xf32>
    %48 = arith.mulf %47, %46 : vector<64x64xf32>
    %49 = arith.addf %43, %48 : vector<64x64xf32>
    %c1_39 = arith.constant 1 : index
    %c3_40 = arith.constant 3 : index
    %50 = memref.load %arg1[%c1_39, %c3_40] : memref<4x5xf32, #tpu.memory_space<smem>>
    %c3_41 = arith.constant 3 : index
    %c0_42 = arith.constant 0 : index
    %c0_43 = arith.constant 0 : index
    %51 = vector.load %arg4[%c3_41, %c0_42, %c0_43] : memref<5x64x64xf32, #tpu.memory_space<vmem>>, vector<1x64x64xf32>
    %52 = vector.shape_cast %51 : vector<1x64x64xf32> to vector<64x64xf32>
    %53 = vector.broadcast %50 : f32 to vector<64x64xf32>
    %54 = arith.mulf %53, %52 : vector<64x64xf32>
    %55 = arith.addf %49, %54 : vector<64x64xf32>
    %c1_44 = arith.constant 1 : index
    %c4_45 = arith.constant 4 : index
    %56 = memref.load %arg1[%c1_44, %c4_45] : memref<4x5xf32, #tpu.memory_space<smem>>
    %c4_46 = arith.constant 4 : index
    %c0_47 = arith.constant 0 : index
    %c0_48 = arith.constant 0 : index
    %57 = vector.load %arg4[%c4_46, %c0_47, %c0_48] : memref<5x64x64xf32, #tpu.memory_space<vmem>>, vector<1x64x64xf32>
    %58 = vector.shape_cast %57 : vector<1x64x64xf32> to vector<64x64xf32>
    %59 = vector.broadcast %56 : f32 to vector<64x64xf32>
    %60 = arith.mulf %59, %58 : vector<64x64xf32>
    %61 = arith.addf %55, %60 : vector<64x64xf32>
    %c1_49 = arith.constant 1 : index
    %c0_50 = arith.constant 0 : index
    %c0_51 = arith.constant 0 : index
    %62 = vector.load %arg3[%c1_49, %c0_50, %c0_51] : memref<2x64x128xf32, #tpu.memory_space<vmem>>, vector<1x64x128xf32>
    %63 = vector.shape_cast %62 : vector<1x64x128xf32> to vector<64x128xf32>
    %cst_52 = arith.constant dense<0.000000e+00> : vector<64x128xf32>
    %64 = tpu.matmul %61, %63, %cst_52 {dimension_numbers = #tpu.dot_dimension_numbers<[1], [0], [0], [1], [0, 0, 1, 1], [], []>, precision = #tpu.contract_precision<fp32>} : vector<64x64xf32>, vector<64x128xf32>, vector<64x128xf32> -> vector<64x128xf32>
    %65 = arith.addf %32, %64 : vector<64x128xf32>
    %66 = vector.broadcast %0 : f32 to vector<64x128xf32>
    %67 = arith.addf %65, %66 : vector<64x128xf32>
    %c2_53 = arith.constant 2 : index
    %c0_54 = arith.constant 0 : index
    %68 = memref.load %arg1[%c2_53, %c0_54] : memref<4x5xf32, #tpu.memory_space<smem>>
    %c0_55 = arith.constant 0 : index
    %c0_56 = arith.constant 0 : index
    %c0_57 = arith.constant 0 : index
    %69 = vector.load %arg4[%c0_55, %c0_56, %c0_57] : memref<5x64x64xf32, #tpu.memory_space<vmem>>, vector<1x64x64xf32>
    %70 = vector.shape_cast %69 : vector<1x64x64xf32> to vector<64x64xf32>
    %71 = vector.broadcast %68 : f32 to vector<64x64xf32>
    %72 = arith.mulf %71, %70 : vector<64x64xf32>
    %c2_58 = arith.constant 2 : index
    %c1_59 = arith.constant 1 : index
    %73 = memref.load %arg1[%c2_58, %c1_59] : memref<4x5xf32, #tpu.memory_space<smem>>
    %c1_60 = arith.constant 1 : index
    %c0_61 = arith.constant 0 : index
    %c0_62 = arith.constant 0 : index
    %74 = vector.load %arg4[%c1_60, %c0_61, %c0_62] : memref<5x64x64xf32, #tpu.memory_space<vmem>>, vector<1x64x64xf32>
    %75 = vector.shape_cast %74 : vector<1x64x64xf32> to vector<64x64xf32>
    %76 = vector.broadcast %73 : f32 to vector<64x64xf32>
    %77 = arith.mulf %76, %75 : vector<64x64xf32>
    %78 = arith.addf %72, %77 : vector<64x64xf32>
    %c2_63 = arith.constant 2 : index
    %c2_64 = arith.constant 2 : index
    %79 = memref.load %arg1[%c2_63, %c2_64] : memref<4x5xf32, #tpu.memory_space<smem>>
    %c2_65 = arith.constant 2 : index
    %c0_66 = arith.constant 0 : index
    %c0_67 = arith.constant 0 : index
    %80 = vector.load %arg4[%c2_65, %c0_66, %c0_67] : memref<5x64x64xf32, #tpu.memory_space<vmem>>, vector<1x64x64xf32>
    %81 = vector.shape_cast %80 : vector<1x64x64xf32> to vector<64x64xf32>
    %82 = vector.broadcast %79 : f32 to vector<64x64xf32>
    %83 = arith.mulf %82, %81 : vector<64x64xf32>
    %84 = arith.addf %78, %83 : vector<64x64xf32>
    %c2_68 = arith.constant 2 : index
    %c3_69 = arith.constant 3 : index
    %85 = memref.load %arg1[%c2_68, %c3_69] : memref<4x5xf32, #tpu.memory_space<smem>>
    %c3_70 = arith.constant 3 : index
    %c0_71 = arith.constant 0 : index
    %c0_72 = arith.constant 0 : index
    %86 = vector.load %arg4[%c3_70, %c0_71, %c0_72] : memref<5x64x64xf32, #tpu.memory_space<vmem>>, vector<1x64x64xf32>
    %87 = vector.shape_cast %86 : vector<1x64x64xf32> to vector<64x64xf32>
    %88 = vector.broadcast %85 : f32 to vector<64x64xf32>
    %89 = arith.mulf %88, %87 : vector<64x64xf32>
    %90 = arith.addf %84, %89 : vector<64x64xf32>
    %c2_73 = arith.constant 2 : index
    %c4_74 = arith.constant 4 : index
    %91 = memref.load %arg1[%c2_73, %c4_74] : memref<4x5xf32, #tpu.memory_space<smem>>
    %c4_75 = arith.constant 4 : index
    %c0_76 = arith.constant 0 : index
    %c0_77 = arith.constant 0 : index
    %92 = vector.load %arg4[%c4_75, %c0_76, %c0_77] : memref<5x64x64xf32, #tpu.memory_space<vmem>>, vector<1x64x64xf32>
    %93 = vector.shape_cast %92 : vector<1x64x64xf32> to vector<64x64xf32>
    %94 = vector.broadcast %91 : f32 to vector<64x64xf32>
    %95 = arith.mulf %94, %93 : vector<64x64xf32>
    %96 = arith.addf %90, %95 : vector<64x64xf32>
    %c0_78 = arith.constant 0 : index
    %c0_79 = arith.constant 0 : index
    %c0_80 = arith.constant 0 : index
    %97 = vector.load %arg3[%c0_78, %c0_79, %c0_80] : memref<2x64x128xf32, #tpu.memory_space<vmem>>, vector<1x64x128xf32>
    %98 = vector.shape_cast %97 : vector<1x64x128xf32> to vector<64x128xf32>
    %cst_81 = arith.constant dense<0.000000e+00> : vector<64x128xf32>
    %99 = tpu.matmul %96, %98, %cst_81 {dimension_numbers = #tpu.dot_dimension_numbers<[1], [0], [0], [1], [0, 0, 1, 1], [], []>, precision = #tpu.contract_precision<fp32>} : vector<64x64xf32>, vector<64x128xf32>, vector<64x128xf32> -> vector<64x128xf32>
    %c3_82 = arith.constant 3 : index
    %c0_83 = arith.constant 0 : index
    %100 = memref.load %arg1[%c3_82, %c0_83] : memref<4x5xf32, #tpu.memory_space<smem>>
    %c0_84 = arith.constant 0 : index
    %c0_85 = arith.constant 0 : index
    %c0_86 = arith.constant 0 : index
    %101 = vector.load %arg4[%c0_84, %c0_85, %c0_86] : memref<5x64x64xf32, #tpu.memory_space<vmem>>, vector<1x64x64xf32>
    %102 = vector.shape_cast %101 : vector<1x64x64xf32> to vector<64x64xf32>
    %103 = vector.broadcast %100 : f32 to vector<64x64xf32>
    %104 = arith.mulf %103, %102 : vector<64x64xf32>
    %c3_87 = arith.constant 3 : index
    %c1_88 = arith.constant 1 : index
    %105 = memref.load %arg1[%c3_87, %c1_88] : memref<4x5xf32, #tpu.memory_space<smem>>
    %c1_89 = arith.constant 1 : index
    %c0_90 = arith.constant 0 : index
    %c0_91 = arith.constant 0 : index
    %106 = vector.load %arg4[%c1_89, %c0_90, %c0_91] : memref<5x64x64xf32, #tpu.memory_space<vmem>>, vector<1x64x64xf32>
    %107 = vector.shape_cast %106 : vector<1x64x64xf32> to vector<64x64xf32>
    %108 = vector.broadcast %105 : f32 to vector<64x64xf32>
    %109 = arith.mulf %108, %107 : vector<64x64xf32>
    %110 = arith.addf %104, %109 : vector<64x64xf32>
    %c3_92 = arith.constant 3 : index
    %c2_93 = arith.constant 2 : index
    %111 = memref.load %arg1[%c3_92, %c2_93] : memref<4x5xf32, #tpu.memory_space<smem>>
    %c2_94 = arith.constant 2 : index
    %c0_95 = arith.constant 0 : index
    %c0_96 = arith.constant 0 : index
    %112 = vector.load %arg4[%c2_94, %c0_95, %c0_96] : memref<5x64x64xf32, #tpu.memory_space<vmem>>, vector<1x64x64xf32>
    %113 = vector.shape_cast %112 : vector<1x64x64xf32> to vector<64x64xf32>
    %114 = vector.broadcast %111 : f32 to vector<64x64xf32>
    %115 = arith.mulf %114, %113 : vector<64x64xf32>
    %116 = arith.addf %110, %115 : vector<64x64xf32>
    %c3_97 = arith.constant 3 : index
    %c3_98 = arith.constant 3 : index
    %117 = memref.load %arg1[%c3_97, %c3_98] : memref<4x5xf32, #tpu.memory_space<smem>>
    %c3_99 = arith.constant 3 : index
    %c0_100 = arith.constant 0 : index
    %c0_101 = arith.constant 0 : index
    %118 = vector.load %arg4[%c3_99, %c0_100, %c0_101] : memref<5x64x64xf32, #tpu.memory_space<vmem>>, vector<1x64x64xf32>
    %119 = vector.shape_cast %118 : vector<1x64x64xf32> to vector<64x64xf32>
    %120 = vector.broadcast %117 : f32 to vector<64x64xf32>
    %121 = arith.mulf %120, %119 : vector<64x64xf32>
    %122 = arith.addf %116, %121 : vector<64x64xf32>
    %c3_102 = arith.constant 3 : index
    %c4_103 = arith.constant 4 : index
    %123 = memref.load %arg1[%c3_102, %c4_103] : memref<4x5xf32, #tpu.memory_space<smem>>
    %c4_104 = arith.constant 4 : index
    %c0_105 = arith.constant 0 : index
    %c0_106 = arith.constant 0 : index
    %124 = vector.load %arg4[%c4_104, %c0_105, %c0_106] : memref<5x64x64xf32, #tpu.memory_space<vmem>>, vector<1x64x64xf32>
    %125 = vector.shape_cast %124 : vector<1x64x64xf32> to vector<64x64xf32>
    %126 = vector.broadcast %123 : f32 to vector<64x64xf32>
    %127 = arith.mulf %126, %125 : vector<64x64xf32>
    %128 = arith.addf %122, %127 : vector<64x64xf32>
    %c1_107 = arith.constant 1 : index
    %c0_108 = arith.constant 0 : index
    %c0_109 = arith.constant 0 : index
    %129 = vector.load %arg3[%c1_107, %c0_108, %c0_109] : memref<2x64x128xf32, #tpu.memory_space<vmem>>, vector<1x64x128xf32>
    %130 = vector.shape_cast %129 : vector<1x64x128xf32> to vector<64x128xf32>
    %cst_110 = arith.constant dense<0.000000e+00> : vector<64x128xf32>
    %131 = tpu.matmul %128, %130, %cst_110 {dimension_numbers = #tpu.dot_dimension_numbers<[1], [0], [0], [1], [0, 0, 1, 1], [], []>, precision = #tpu.contract_precision<fp32>} : vector<64x64xf32>, vector<64x128xf32>, vector<64x128xf32> -> vector<64x128xf32>
    %132 = arith.addf %99, %131 : vector<64x128xf32>
    %133 = vector.broadcast %0 : f32 to vector<64x128xf32>
    %134 = arith.addf %132, %133 : vector<64x128xf32>
    %135 = tpu.concatenate %67, %134 in 1 : vector<64x128xf32>, vector<64x128xf32> -> vector<64x256xf32>
    %c0_111 = arith.constant 0 : index
    %c0_112 = arith.constant 0 : index
    %136 = vector.load %arg5[%c0_111, %c0_112] : memref<64x256xf32, #tpu.memory_space<vmem>>, vector<64x256xf32>
    tpu.vector_store %arg5[%c0_111, %c0_112], %135 {strides = array<i32>} : memref<64x256xf32, #tpu.memory_space<vmem>>, vector<64x256xf32>,
    return
  }
  func.func @transform_0(%arg0: i32) -> (i32, i32) {
    %c0_i32 = arith.constant 0 : i32
    %c0_i32_0 = arith.constant 0 : i32
    %c0_i32_1 = arith.constant 0 : i32
    return %c0_i32, %c0_i32_0 : i32, i32
  }
  func.func @transform_1(%arg0: i32) -> i32 {
    %c0_i32 = arith.constant 0 : i32
    %c0_i32_0 = arith.constant 0 : i32
    return %c0_i32 : i32
  }
  func.func @transform_2(%arg0: i32) -> (i32, i32, i32) {
    %c0_i32 = arith.constant 0 : i32
    %c0_i32_0 = arith.constant 0 : i32
    %c0_i32_1 = arith.constant 0 : i32
    %c0_i32_2 = arith.constant 0 : i32
    return %c0_i32, %c0_i32_0, %c0_i32_1 : i32, i32, i32
  }
  func.func @transform_3(%arg0: i32) -> (i32, i32, i32) {
    %c0_i32 = arith.constant 0 : i32
    %c0_i32_0 = arith.constant 0 : i32
    %c0_i32_1 = arith.constant 0 : i32
    return %c0_i32, %arg0, %c0_i32_0 : i32, i32, i32
  }
  func.func @transform_4(%arg0: i32) -> (i32, i32) {
    %c0_i32 = arith.constant 0 : i32
    %c0_i32_0 = arith.constant 0 : i32
    return %arg0, %c0_i32 : i32, i32
  }
}

</mosaic_0001>

<llo_original>
// kernel: conv_transpose2d_s2k2.1
$region0: #{conv_transpose2d_s2k2.1}
  #allocation0 [shape = 'u32[]', space=smem, size = 0x4, offset = 0x4, fixed_abs, tag = 'smem constant byte address 0x4 - core index']
  #allocation1 [shape = 'u32[144,128]{1,0:T(1,128)}', space=vmem, size = 0x12000, scoped, tag = 'internal scratch']
  #allocation2 [shape = 'f32[1]{0:T(128)S(6)}', space=smem, size = 0x200, scoped, tag = 'scoped memory for conv_transpose2d_s2k2.1']
  %s0 = inlined_call_operand.vmem [shape: f32[4,5], index: 0, kind: input, shape index: {}]
  %s1 = inlined_call_operand.<no memory space> [shape: f32[1], index: 1, kind: input, shape index: {}]
  %s2 = inlined_call_operand.hbm [shape: f32[2,64,128], index: 2, kind: input, shape index: {}]
  %s3 = inlined_call_operand.hbm [shape: f32[5,64,64], index: 3, kind: input, shape index: {}]
  %s4 = inlined_call_operand.vmem [shape: f32[64,256], index: 4, kind: output, shape index: {}]
  %s5 = sld [smem:[#allocation0]]
  $region38: #{conv_transpose2d_s2k2.1} parent=0
    _
  %s7 = ssub.s32 1, %s5
  %s8 = scalar_select 0, %s7, %s5
  %9 = sst [smem:[#allocation2]] %s1
  $region1: #{conv_transpose2d_s2k2.1} parent=0
    #allocation3 [shape = 'u8[2048]{0}', space=smem, size = 0x800, scoped, tag = 'input window, operand 0, single buffered']
    #allocation4 [shape = 's32[1]{0}', space=sflag, size = 0x4, scoped, tag = 'scoped memory for conv_transpose2d_s2k2.1']
    #allocation5 [shape = 's32[1]{0}', space=sflag, size = 0x4, scoped, tag = 'scoped memory for conv_transpose2d_s2k2.1']
    #allocation6 [shape = 'u8[65536]{0}', space=vmem, size = 0x10000, scoped, tag = 'input window, operand 2, single buffered']
    #allocation7 [shape = 'u8[163840]{0}', space=vmem, size = 0x28000, scoped, tag = 'input window, operand 3, single buffered']
    #allocation8 [shape = 's32[1]{0}', space=sflag, size = 0x4, scoped, tag = 'scoped memory for conv_transpose2d_s2k2.1']
    %10 = vsyncpa [#allocation5], 0
    %11 = vsyncpa [#allocation4], 0
    %12 = vsyncpa [#allocation8], 0
    // Predicated region
    $region2: #{conv_transpose2d_s2k2.1} parent=1 // pred_check
      _
    $region3: #{conv_transpose2d_s2k2.1} parent=1 // pred_check_branch
      %14 = sbr.rel (0) target = $region5
    $region4: #{conv_transpose2d_s2k2.1} parent=1 // pred_region
      %s16 = ssub.s32 64, 64
      %17 = vsyncadd [#allocation5], %s16
      %s19 = sshll.u32 %s0, 4
      %s20 = int_to_ptr.vmem [resolvable:$true] %s19
      %22 = dma.vmem_to_smem %s20, 64, [#allocation3], [#allocation5]
    $region5: #{conv_transpose2d_s2k2.1} parent=1 // pred_fallthru
      _
    // Predicated region
    $region6: #{conv_transpose2d_s2k2.1} parent=1 // pred_check
      _
    $region7: #{conv_transpose2d_s2k2.1} parent=1 // pred_check_branch
      %24 = sbr.rel (0) target = $region9
    $region8: #{conv_transpose2d_s2k2.1} parent=1 // pred_region
      _
    $region9: #{conv_transpose2d_s2k2.1} parent=1 // pred_fallthru
      _
    // Predicated region
    $region10: #{conv_transpose2d_s2k2.1} parent=1 // pred_check
      _
    $region11: #{conv_transpose2d_s2k2.1} parent=1 // pred_check_branch
      %26 = sbr.rel (0) target = $region13
    $region12: #{conv_transpose2d_s2k2.1} parent=1 // pred_region
      %s28 = ssub.s32 2048, 2048
      %29 = vsyncadd [#allocation4], %s28
      %s30 = sshll.u32 [#allocation6], 4
      %s31 = int_to_ptr.vmem [resolvable:$true] %s30
      %36 = dma.hbm_to_vmem [thread:$0]  %s2, 2048, %s31, [#allocation4], 128, 128, 8
    $region13: #{conv_transpose2d_s2k2.1} parent=1 // pred_fallthru
      _
    // Predicated region
    $region14: #{conv_transpose2d_s2k2.1} parent=1 // pred_check
      _
    $region15: #{conv_transpose2d_s2k2.1} parent=1 // pred_check_branch
      %38 = sbr.rel (0) target = $region17
    $region16: #{conv_transpose2d_s2k2.1} parent=1 // pred_region
      %s40 = ssub.s32 5120, 5120
      %41 = vsyncadd [#allocation8], %s40
      %s42 = sshll.u32 [#allocation7], 4
      %s43 = int_to_ptr.vmem [resolvable:$true] %s42
      %48 = dma.hbm_to_vmem [thread:$0]  %s3, 5120, %s43, [#allocation8], 128, 128, 8
    $region17: #{conv_transpose2d_s2k2.1} parent=1 // pred_fallthru
      _
    // Predicated region
    $region18: #{conv_transpose2d_s2k2.1} parent=1 // pred_check
      _
    $region19: #{conv_transpose2d_s2k2.1} parent=1 // pred_check_branch
      %50 = sbr.rel (0) target = $region21
    $region20: #{conv_transpose2d_s2k2.1} parent=1 // pred_region
      %51 = dma.done [#allocation5], 64
    $region21: #{conv_transpose2d_s2k2.1} parent=1 // pred_fallthru
      _
    // Predicated region
    $region22: #{conv_transpose2d_s2k2.1} parent=1 // pred_check
      _
    $region23: #{conv_transpose2d_s2k2.1} parent=1 // pred_check_branch
      %53 = sbr.rel (0) target = $region25
    $region24: #{conv_transpose2d_s2k2.1} parent=1 // pred_region
      %54 = dma.done [#allocation4], 2048
    $region25: #{conv_transpose2d_s2k2.1} parent=1 // pred_fallthru
      _
    // Predicated region
    $region26: #{conv_transpose2d_s2k2.1} parent=1 // pred_check
      _
    $region27: #{conv_transpose2d_s2k2.1} parent=1 // pred_check_branch
      %56 = sbr.rel (0) target = $region29
    $region28: #{conv_transpose2d_s2k2.1} parent=1 // pred_region
      %57 = dma.done [#allocation8], 5120
    $region29: #{conv_transpose2d_s2k2.1} parent=1 // pred_fallthru
      _
    %58 = sfence
    %s59 = sld [smem:[#allocation2]]
    %s60 = sld [smem:[#allocation3]]
    %v61 = vld [vmem:[#allocation7] sm:$0xff]
    %v62 = vld [vmem:[#allocation7 + $0x8] sm:$0xff]
    %v63 = vld [vmem:[#allocation7 + $0x10] sm:$0xff]
    %v64 = vld [vmem:[#allocation7 + $0x18] sm:$0xff]
    %v65 = vld [vmem:[#allocation7 + $0x20] sm:$0xff]
    %v66 = vld [vmem:[#allocation7 + $0x28] sm:$0xff]
    %v67 = vld [vmem:[#allocation7 + $0x30] sm:$0xff]
    %v68 = vld [vmem:[#allocation7 + $0x38] sm:$0xff]
    %v69 = vstv %s60
    %v70 = vmul.f32 %v69, %v61
    %v71 = vmul.f32 %v69, %v62
    %v72 = vmul.f32 %v69, %v63
    %v73 = vmul.f32 %v69, %v64
    %v74 = vmul.f32 %v69, %v65
    %v75 = vmul.f32 %v69, %v66
    %v76 = vmul.f32 %v69, %v67
    %v77 = vmul.f32 %v69, %v68
    %s78 = sld [smem:[#allocation3 + $0x1]]
    %s79 = scalar_lea.vmem [#allocation7], 64
    %v80 = vld [vmem:[%s79] sm:$0xff]
    %v81 = vld [vmem:[%s79 + $0x8] sm:$0xff]
    %v82 = vld [vmem:[%s79 + $0x10] sm:$0xff]
    %v83 = vld [vmem:[%s79 + $0x18] sm:$0xff]
    %v84 = vld [vmem:[%s79 + $0x20] sm:$0xff]
    %v85 = vld [vmem:[%s79 + $0x28] sm:$0xff]
    %v86 = vld [vmem:[%s79 + $0x30] sm:$0xff]
    %v87 = vld [vmem:[%s79 + $0x38] sm:$0xff]
    %v88 = vstv %s78
    %v89 = vmul.f32 %v88, %v80
    %v90 = vmul.f32 %v88, %v81
    %v91 = vmul.f32 %v88, %v82
    %v92 = vmul.f32 %v88, %v83
    %v93 = vmul.f32 %v88, %v84
    %v94 = vmul.f32 %v88, %v85
    %v95 = vmul.f32 %v88, %v86
    %v96 = vmul.f32 %v88, %v87
    %v97 = vadd.f32 %v70, %v89
    %v98 = vadd.f32 %v71, %v90
    %v99 = vadd.f32 %v72, %v91
    %v100 = vadd.f32 %v73, %v92
    %v101 = vadd.f32 %v74, %v93
    %v102 = vadd.f32 %v75, %v94
    %v103 = vadd.f32 %v76, %v95
    %v104 = vadd.f32 %v77, %v96
    %s105 = sld [smem:[#allocation3 + $0x2]]
    %s106 = scalar_lea.vmem [#allocation7], 128
    %v107 = vld [vmem:[%s106] sm:$0xff]
    %v108 = vld [vmem:[%s106 + $0x8] sm:$0xff]
    %v109 = vld [vmem:[%s106 + $0x10] sm:$0xff]
    %v110 = vld [vmem:[%s106 + $0x18] sm:$0xff]
    %v111 = vld [vmem:[%s106 + $0x20] sm:$0xff]
    %v112 = vld [vmem:[%s106 + $0x28] sm:$0xff]
    %v113 = vld [vmem:[%s106 + $0x30] sm:$0xff]
    %v114 = vld [vmem:[%s106 + $0x38] sm:$0xff]
    %v115 = vstv %s105
    %v116 = vmul.f32 %v115, %v107
    %v117 = vmul.f32 %v115, %v108
    %v118 = vmul.f32 %v115, %v109
    %v119 = vmul.f32 %v115, %v110
    %v120 = vmul.f32 %v115, %v111
    %v121 = vmul.f32 %v115, %v112
    %v122 = vmul.f32 %v115, %v113
    %v123 = vmul.f32 %v115, %v114
    %v124 = vadd.f32 %v97, %v116
    %v125 = vadd.f32 %v98, %v117
    %v126 = vadd.f32 %v99, %v118
    %v127 = vadd.f32 %v100, %v119
    %v128 = vadd.f32 %v101, %v120
    %v129 = vadd.f32 %v102, %v121
    %v130 = vadd.f32 %v103, %v122
    %v131 = vadd.f32 %v104, %v123
    %s132 = sld [smem:[#allocation3 + $0x3]]
    %s133 = scalar_lea.vmem [#allocation7], 192
    %v134 = vld [vmem:[%s133] sm:$0xff]
    %v135 = vld [vmem:[%s133 + $0x8] sm:$0xff]
    %v136 = vld [vmem:[%s133 + $0x10] sm:$0xff]
    %v137 = vld [vmem:[%s133 + $0x18] sm:$0xff]
    %v138 = vld [vmem:[%s133 + $0x20] sm:$0xff]
    %v139 = vld [vmem:[%s133 + $0x28] sm:$0xff]
    %v140 = vld [vmem:[%s133 + $0x30] sm:$0xff]
    %v141 = vld [vmem:[%s133 + $0x38] sm:$0xff]
    %v142 = vstv %s132
    %v143 = vmul.f32 %v142, %v134
    %v144 = vmul.f32 %v142, %v135
    %v145 = vmul.f32 %v142, %v136
    %v146 = vmul.f32 %v142, %v137
    %v147 = vmul.f32 %v142, %v138
    %v148 = vmul.f32 %v142, %v139
    %v149 = vmul.f32 %v142, %v140
    %v150 = vmul.f32 %v142, %v141
    %v151 = vadd.f32 %v124, %v143
    %v152 = vadd.f32 %v125, %v144
    %v153 = vadd.f32 %v126, %v145
    %v154 = vadd.f32 %v127, %v146
    %v155 = vadd.f32 %v128, %v147
    %v156 = vadd.f32 %v129, %v148
    %v157 = vadd.f32 %v130, %v149
    %v158 = vadd.f32 %v131, %v150
    %s159 = sld [smem:[#allocation3 + $0x4]]
    %s160 = scalar_lea.vmem [#allocation7], 256
    %v161 = vld [vmem:[%s160] sm:$0xff]
    %v162 = vld [vmem:[%s160 + $0x8] sm:$0xff]
    %v163 = vld [vmem:[%s160 + $0x10] sm:$0xff]
    %v164 = vld [vmem:[%s160 + $0x18] sm:$0xff]
    %v165 = vld [vmem:[%s160 + $0x20] sm:$0xff]
    %v166 = vld [vmem:[%s160 + $0x28] sm:$0xff]
    %v167 = vld [vmem:[%s160 + $0x30] sm:$0xff]
    %v168 = vld [vmem:[%s160 + $0x38] sm:$0xff]
    %v169 = vstv %s159
    %v170 = vmul.f32 %v169, %v161
    %v171 = vmul.f32 %v169, %v162
    %v172 = vmul.f32 %v169, %v163
    %v173 = vmul.f32 %v169, %v164
    %v174 = vmul.f32 %v169, %v165
    %v175 = vmul.f32 %v169, %v166
    %v176 = vmul.f32 %v169, %v167
    %v177 = vmul.f32 %v169, %v168
    %v178 = vadd.f32 %v151, %v170
    %v179 = vadd.f32 %v152, %v171
    %v180 = vadd.f32 %v153, %v172
    %v181 = vadd.f32 %v154, %v173
    %v182 = vadd.f32 %v155, %v174
    %v183 = vadd.f32 %v156, %v175
    %v184 = vadd.f32 %v157, %v176
    %v185 = vadd.f32 %v158, %v177
    %v186 = vld [vmem:[#allocation6] sm:$0xff]
    %v187 = vld [vmem:[#allocation6 + $0x8] sm:$0xff]
    %v188 = vld [vmem:[#allocation6 + $0x10] sm:$0xff]
    %v189 = vld [vmem:[#allocation6 + $0x18] sm:$0xff]
    %v190 = vld [vmem:[#allocation6 + $0x20] sm:$0xff]
    %v191 = vld [vmem:[#allocation6 + $0x28] sm:$0xff]
    %v192 = vld [vmem:[#allocation6 + $0x30] sm:$0xff]
    %v193 = vld [vmem:[#allocation6 + $0x38] sm:$0xff]
    %s194 = sld [smem:[#allocation3 + $0x80]]
    %v195 = vstv %s194
    %v196 = vmul.f32 %v195, %v61
    %v197 = vmul.f32 %v195, %v62
    %v198 = vmul.f32 %v195, %v63
    %v199 = vmul.f32 %v195, %v64
    %v200 = vmul.f32 %v195, %v65
    %v201 = vmul.f32 %v195, %v66
    %v202 = vmul.f32 %v195, %v67
    %v203 = vmul.f32 %v195, %v68
    %s204 = sld [smem:[#allocation3 + $0x81]]
    %v205 = vstv %s204
    %v206 = vmul.f32 %v205, %v80
    %v207 = vmul.f32 %v205, %v81
    %v208 = vmul.f32 %v205, %v82
    %v209 = vmul.f32 %v205, %v83
    %v210 = vmul.f32 %v205, %v84
    %v211 = vmul.f32 %v205, %v85
    %v212 = vmul.f32 %v205, %v86
    %v213 = vmul.f32 %v205, %v87
    %v214 = vadd.f32 %v196, %v206
    %v215 = vadd.f32 %v197, %v207
    %v216 = vadd.f32 %v198, %v208
    %v217 = vadd.f32 %v199, %v209
    %v218 = vadd.f32 %v200, %v210
    %v219 = vadd.f32 %v201, %v211
    %v220 = vadd.f32 %v202, %v212
    %v221 = vadd.f32 %v203, %v213
    %s222 = sld [smem:[#allocation3 + $0x82]]
    %v223 = vstv %s222
    %v224 = vmul.f32 %v223, %v107
    %v225 = vmul.f32 %v223, %v108
    %v226 = vmul.f32 %v223, %v109
    %v227 = vmul.f32 %v223, %v110
    %v228 = vmul.f32 %v223, %v111
    %v229 = vmul.f32 %v223, %v112
    %v230 = vmul.f32 %v223, %v113
    %v231 = vmul.f32 %v223, %v114
    %v232 = vadd.f32 %v214, %v224
    %v233 = vadd.f32 %v215, %v225
    %v234 = vadd.f32 %v216, %v226
    %v235 = vadd.f32 %v217, %v227
    %v236 = vadd.f32 %v218, %v228
    %v237 = vadd.f32 %v219, %v229
    %v238 = vadd.f32 %v220, %v230
    %v239 = vadd.f32 %v221, %v231
    %s240 = sld [smem:[#allocation3 + $0x83]]
    %v241 = vstv %s240
    %v242 = vmul.f32 %v241, %v134
    %v243 = vmul.f32 %v241, %v135
    %v244 = vmul.f32 %v241, %v136
    %v245 = vmul.f32 %v241, %v137
    %v246 = vmul.f32 %v241, %v138
    %v247 = vmul.f32 %v241, %v139
    %v248 = vmul.f32 %v241, %v140
    %v249 = vmul.f32 %v241, %v141
    %v250 = vadd.f32 %v232, %v242
    %v251 = vadd.f32 %v233, %v243
    %v252 = vadd.f32 %v234, %v244
    %v253 = vadd.f32 %v235, %v245
    %v254 = vadd.f32 %v236, %v246
    %v255 = vadd.f32 %v237, %v247
    %v256 = vadd.f32 %v238, %v248
    %v257 = vadd.f32 %v239, %v249
    %s258 = sld [smem:[#allocation3 + $0x84]]
    %v259 = vstv %s258
    %v260 = vmul.f32 %v259, %v161
    %v261 = vmul.f32 %v259, %v162
    %v262 = vmul.f32 %v259, %v163
    %v263 = vmul.f32 %v259, %v164
    %v264 = vmul.f32 %v259, %v165
    %v265 = vmul.f32 %v259, %v166
    %v266 = vmul.f32 %v259, %v167
    %v267 = vmul.f32 %v259, %v168
    %v268 = vadd.f32 %v250, %v260
    %v269 = vadd.f32 %v251, %v261
    %v270 = vadd.f32 %v252, %v262
    %v271 = vadd.f32 %v253, %v263
    %v272 = vadd.f32 %v254, %v264
    %v273 = vadd.f32 %v255, %v265
    %v274 = vadd.f32 %v256, %v266
    %v275 = vadd.f32 %v257, %v267
    %s276 = scalar_lea.vmem [#allocation6], 64
    %v277 = vld [vmem:[%s276] sm:$0xff]
    %v278 = vld [vmem:[%s276 + $0x8] sm:$0xff]
    %v279 = vld [vmem:[%s276 + $0x10] sm:$0xff]
    %v280 = vld [vmem:[%s276 + $0x18] sm:$0xff]
    %v281 = vld [vmem:[%s276 + $0x20] sm:$0xff]
    %v282 = vld [vmem:[%s276 + $0x28] sm:$0xff]
    %v283 = vld [vmem:[%s276 + $0x30] sm:$0xff]
    %v284 = vld [vmem:[%s276 + $0x38] sm:$0xff]
    %vm285 = vcmask 523264
    %v287 = vsel %vm285, %v268, 0
    %v290 = vsel %vm285, %v269, 0
    %v293 = vsel %vm285, %v270, 0
    %v296 = vsel %vm285, %v271, 0
    %v299 = vsel %vm285, %v272, 0
    %v302 = vsel %vm285, %v273, 0
    %v305 = vsel %vm285, %v274, 0
    %v308 = vsel %vm285, %v275, 0
    %310 = vmatprep.subr.mxu0 0.0
    %v311 = vand.u32 %v277, 4294901760
    %312 = vmatpush1.msra.mxu0 %v311
    %313 = vmatprep.subr.mxu0 0.0
    %v314 = vand.u32 %v278, 4294901760
    %315 = vmatpush1.msra.mxu0 %v314
    %316 = vmatprep.subr.mxu0 0.0
    %v317 = vand.u32 %v279, 4294901760
    %318 = vmatpush1.msra.mxu0 %v317
    %319 = vmatprep.subr.mxu0 0.0
    %v320 = vand.u32 %v280, 4294901760
    %321 = vmatpush1.msra.mxu0 %v320
    %322 = vmatprep.subr.mxu0 0.0
    %v323 = vand.u32 %v281, 4294901760
    %324 = vmatpush1.msra.mxu0 %v323
    %325 = vmatprep.subr.mxu0 0.0
    %v326 = vand.u32 %v282, 4294901760
    %327 = vmatpush1.msra.mxu0 %v326
    %328 = vmatprep.subr.mxu0 0.0
    %v329 = vand.u32 %v283, 4294901760
    %330 = vmatpush1.msra.mxu0 %v329
    %331 = vmatprep.subr.mxu0 0.0
    %v332 = vand.u32 %v284, 4294901760
    %333 = vmatpush1.msra.mxu0 %v332
    %334 = vmatprep.subr.mxu0 0.0
    %335 = vmatpush1.msra.mxu0 0.0
    %336 = vmatprep.subr.mxu0 0.0
    %337 = vmatpush1.msra.mxu0 0.0
    %338 = vmatprep.subr.mxu0 0.0
    %339 = vmatpush1.msra.mxu0 0.0
    %340 = vmatprep.subr.mxu0 0.0
    %341 = vmatpush1.msra.mxu0 0.0
    %342 = vmatprep.subr.mxu0 0.0
    %343 = vmatpush1.msra.mxu0 0.0
    %344 = vmatprep.subr.mxu0 0.0
    %345 = vmatpush1.msra.mxu0 0.0
    %346 = vmatprep.subr.mxu0 0.0
    %347 = vmatpush1.msra.mxu0 0.0
    %348 = vmatprep.subr.mxu0 0.0
    %349 = vmatpush1.msra.mxu0 0.0
    %350 = vmatprep.subr.mxu0 0.0
    %351 = vmatpush1.msra.mxu0 0.0
    %352 = vmatprep.subr.mxu0 0.0
    %353 = vmatpush1.msra.mxu0 0.0
    %354 = vmatprep.subr.mxu0 0.0
    %355 = vmatpush1.msra.mxu0 0.0
    %356 = vmatprep.subr.mxu0 0.0
    %357 = vmatpush1.msra.mxu0 0.0
    %358 = vmatprep.subr.mxu0 0.0
    %359 = vmatpush1.msra.mxu0 0.0
    %360 = vmatprep.subr.mxu0 0.0
    %361 = vmatpush1.msra.mxu0 0.0
    %362 = vmatprep.subr.mxu0 0.0
    %363 = vmatpush1.msra.mxu0 0.0
    %364 = vmatprep.subr.mxu0 0.0
    %365 = vmatpush1.msra.mxu0 0.0
    %366 = vmatprep.subr.mxu0 0.0
    %367 = vmatpush1.msra.mxu0 0.0
    %368 = vmatprep.subr.mxu0 0.0
    %369 = vmatpush1.msra.mxu0 0.0
    %370 = vmatprep.subr.mxu0 0.0
    %371 = vmatpush1.msra.mxu0 0.0
    %372 = vmatprep.subr.mxu0 0.0
    %373 = vmatpush1.msra.mxu0 0.0
    %374 = vmatprep.subr.mxu0 0.0
    %375 = vmatpush1.msra.mxu0 0.0
    %376 = vmatprep.subr.mxu0 0.0
    %377 = vmatpush1.msra.mxu0 0.0
    %378 = vmatprep.subr.mxu0 0.0
    %379 = vmatpush1.msra.mxu0 0.0
    %380 = vmatprep.subr.mxu0 0.0
    %381 = vmatpush1.msra.mxu0 0.0
    %382 = vmatprep.mubr.f32.mxu0 0.0
    %v383 = vand.u32 %v287, 4294901760
    %v384 = vsub.f32 %v287, %v383
    %v385 = vand.u32 %v384, 4294901760
    %v386 = vsub.f32 %v384, %v385
    %v387 = vand.u32 %v386, 4294901760
    %388 = vmatmul.mubr.f32.gmra.mrb[0].mxu0 %v387
    %v389 = vpop.f32.mrb[0].mxu0
    %v390 = vadd.f32 0.0, %v389
    %v391 = vpop.f32.mrb[0].mxu0
    %392 = vmatprep.mubr.f32.mxu0 0.0
    %v393 = vand.u32 %v290, 4294901760
    %v394 = vsub.f32 %v290, %v393
    %v395 = vand.u32 %v394, 4294901760
    %v396 = vsub.f32 %v394, %v395
    %v397 = vand.u32 %v396, 4294901760
    %398 = vmatmul.mubr.f32.gmra.mrb[0].mxu0 %v397
    %v399 = vpop.f32.mrb[0].mxu0
    %v400 = vadd.f32 0.0, %v399
    %v401 = vpop.f32.mrb[0].mxu0
    %402 = vmatprep.mubr.f32.mxu0 0.0
    %v403 = vand.u32 %v293, 4294901760
    %v404 = vsub.f32 %v293, %v403
    %v405 = vand.u32 %v404, 4294901760
    %v406 = vsub.f32 %v404, %v405
    %v407 = vand.u32 %v406, 4294901760
    %408 = vmatmul.mubr.f32.gmra.mrb[0].mxu0 %v407
    %v409 = vpop.f32.mrb[0].mxu0
    %v410 = vadd.f32 0.0, %v409
    %v411 = vpop.f32.mrb[0].mxu0
    %412 = vmatprep.mubr.f32.mxu0 0.0
    %v413 = vand.u32 %v296, 4294901760
    %v414 = vsub.f32 %v296, %v413
    %v415 = vand.u32 %v414, 4294901760
    %v416 = vsub.f32 %v414, %v415
    %v417 = vand.u32 %v416, 4294901760
    %418 = vmatmul.mubr.f32.gmra.mrb[0].mxu0 %v417
    %v419 = vpop.f32.mrb[0].mxu0
    %v420 = vadd.f32 0.0, %v419
    %v421 = vpop.f32.mrb[0].mxu0
    %422 = vmatprep.mubr.f32.mxu0 0.0
    %v423 = vand.u32 %v299, 4294901760
    %v424 = vsub.f32 %v299, %v423
    %v425 = vand.u32 %v424, 4294901760
    %v426 = vsub.f32 %v424, %v425
    %v427 = vand.u32 %v426, 4294901760
    %428 = vmatmul.mubr.f32.gmra.mrb[0].mxu0 %v427
    %v429 = vpop.f32.mrb[0].mxu0
    %v430 = vadd.f32 0.0, %v429
    %v431 = vpop.f32.mrb[0].mxu0
    %432 = vmatprep.mubr.f32.mxu0 0.0
    %v433 = vand.u32 %v302, 4294901760
    %v434 = vsub.f32 %v302, %v433
    %v435 = vand.u32 %v434, 4294901760
    %v436 = vsub.f32 %v434, %v435
    %v437 = vand.u32 %v436, 4294901760
    %438 = vmatmul.mubr.f32.gmra.mrb[0].mxu0 %v437
    %v439 = vpop.f32.mrb[0].mxu0
    %v440 = vadd.f32 0.0, %v439
    %v441 = vpop.f32.mrb[0].mxu0
    %442 = vmatprep.mubr.f32.mxu0 0.0
    %v443 = vand.u32 %v305, 4294901760
    %v444 = vsub.f32 %v305, %v443
    %v445 = vand.u32 %v444, 4294901760
    %v446 = vsub.f32 %v444, %v445
    %v447 = vand.u32 %v446, 4294901760
    %448 = vmatmul.mubr.f32.gmra.mrb[0].mxu0 %v447
    %v449 = vpop.f32.mrb[0].mxu0
    %v450 = vadd.f32 0.0, %v449
    %v451 = vpop.f32.mrb[0].mxu0
    %452 = vmatprep.mubr.f32.mxu0 0.0
    %v453 = vand.u32 %v308, 4294901760
    %v454 = vsub.f32 %v308, %v453
    %v455 = vand.u32 %v454, 4294901760
    %v456 = vsub.f32 %v454, %v455
    %v457 = vand.u32 %v456, 4294901760
    %458 = vmatmul.mubr.f32.gmra.mrb[0].mxu0 %v457
    %v459 = vpop.f32.mrb[0].mxu0
    %v460 = vadd.f32 0.0, %v459
    %v461 = vpop.f32.mrb[0].mxu0
    %462 = vdwg.mxu0
    %463 = vmatprep.subr.mxu0 0.0
    %v464 = vand.u32 %v277, 4294901760
    %v465 = vsub.f32 %v277, %v464
    %v466 = vand.u32 %v465, 4294901760
    %v467 = vsub.f32 %v465, %v466
    %v468 = vand.u32 %v467, 4294901760
    %469 = vmatpush1.msra.mxu0 %v468
    %470 = vmatprep.subr.mxu0 0.0
    %v471 = vand.u32 %v278, 4294901760
    %v472 = vsub.f32 %v278, %v471
    %v473 = vand.u32 %v472, 4294901760
    %v474 = vsub.f32 %v472, %v473
    %v475 = vand.u32 %v474, 4294901760
    %476 = vmatpush1.msra.mxu0 %v475
    %477 = vmatprep.subr.mxu0 0.0
    %v478 = vand.u32 %v279, 4294901760
    %v479 = vsub.f32 %v279, %v478
    %v480 = vand.u32 %v479, 4294901760
    %v481 = vsub.f32 %v479, %v480
    %v482 = vand.u32 %v481, 4294901760
    %483 = vmatpush1.msra.mxu0 %v482
    %484 = vmatprep.subr.mxu0 0.0
    %v485 = vand.u32 %v280, 4294901760
    %v486 = vsub.f32 %v280, %v485
    %v487 = vand.u32 %v486, 4294901760
    %v488 = vsub.f32 %v486, %v487
    %v489 = vand.u32 %v488, 4294901760
    %490 = vmatpush1.msra.mxu0 %v489
    %491 = vmatprep.subr.mxu0 0.0
    %v492 = vand.u32 %v281, 4294901760
    %v493 = vsub.f32 %v281, %v492
    %v494 = vand.u32 %v493, 4294901760
    %v495 = vsub.f32 %v493, %v494
    %v496 = vand.u32 %v495, 4294901760
    %497 = vmatpush1.msra.mxu0 %v496
    %498 = vmatprep.subr.mxu0 0.0
    %v499 = vand.u32 %v282, 4294901760
    %v500 = vsub.f32 %v282, %v499
    %v501 = vand.u32 %v500, 4294901760
    %v502 = vsub.f32 %v500, %v501
    %v503 = vand.u32 %v502, 4294901760
    %504 = vmatpush1.msra.mxu0 %v503
    %505 = vmatprep.subr.mxu0 0.0
    %v506 = vand.u32 %v283, 4294901760
    %v507 = vsub.f32 %v283, %v506
    %v508 = vand.u32 %v507, 4294901760
    %v509 = vsub.f32 %v507, %v508
    %v510 = vand.u32 %v509, 4294901760
    %511 = vmatpush1.msra.mxu0 %v510
    %512 = vmatprep.subr.mxu0 0.0
    %v513 = vand.u32 %v284, 4294901760
    %v514 = vsub.f32 %v284, %v513
    %v515 = vand.u32 %v514, 4294901760
    %v516 = vsub.f32 %v514, %v515
    %v517 = vand.u32 %v516, 4294901760
    %518 = vmatpush1.msra.mxu0 %v517
    %519 = vmatprep.subr.mxu0 0.0
    %520 = vmatpush1.msra.mxu0 0.0
    %521 = vmatprep.subr.mxu0 0.0
    %522 = vmatpush1.msra.mxu0 0.0
    %523 = vmatprep.subr.mxu0 0.0
    %524 = vmatpush1.msra.mxu0 0.0
    %525 = vmatprep.subr.mxu0 0.0
    %526 = vmatpush1.msra.mxu0 0.0
    %527 = vmatprep.subr.mxu0 0.0
    %528 = vmatpush1.msra.mxu0 0.0
    %529 = vmatprep.subr.mxu0 0.0
    %530 = vmatpush1.msra.mxu0 0.0
    %531 = vmatprep.subr.mxu0 0.0
    %532 = vmatpush1.msra.mxu0 0.0
    %533 = vmatprep.subr.mxu0 0.0
    %534 = vmatpush1.msra.mxu0 0.0
    %535 = vmatprep.subr.mxu0 0.0
    %536 = vmatpush1.msra.mxu0 0.0
    %537 = vmatprep.subr.mxu0 0.0
    %538 = vmatpush1.msra.mxu0 0.0
    %539 = vmatprep.subr.mxu0 0.0
    %540 = vmatpush1.msra.mxu0 0.0
    %541 = vmatprep.subr.mxu0 0.0
    %542 = vmatpush1.msra.mxu0 0.0
    %543 = vmatprep.subr.mxu0 0.0
    %544 = vmatpush1.msra.mxu0 0.0
    %545 = vmatprep.subr.mxu0 0.0
    %546 = vmatpush1.msra.mxu0 0.0
    %547 = vmatprep.subr.mxu0 0.0
    %548 = vmatpush1.msra.mxu0 0.0
    %549 = vmatprep.subr.mxu0 0.0
    %550 = vmatpush1.msra.mxu0 0.0
    %551 = vmatprep.subr.mxu0 0.0
    %552 = vmatpush1.msra.mxu0 0.0
    %553 = vmatprep.subr.mxu0 0.0
    %554 = vmatpush1.msra.mxu0 0.0
    %555 = vmatprep.subr.mxu0 0.0
    %556 = vmatpush1.msra.mxu0 0.0
    %557 = vmatprep.subr.mxu0 0.0
    %558 = vmatpush1.msra.mxu0 0.0
    %559 = vmatprep.subr.mxu0 0.0
    %560 = vmatpush1.msra.mxu0 0.0
    %561 = vmatprep.subr.mxu0 0.0
    %562 = vmatpush1.msra.mxu0 0.0
    %563 = vmatprep.subr.mxu0 0.0
    %564 = vmatpush1.msra.mxu0 0.0
    %565 = vmatprep.subr.mxu0 0.0
    %566 = vmatpush1.msra.mxu0 0.0
    %567 = vmatprep.mubr.f32.mxu0 0.0
    %v568 = vand.u32 %v287, 4294901760
    %569 = vmatmul.mubr.f32.gmra.mrb[0].mxu0 %v568
    %v570 = vpop.f32.mrb[0].mxu0
    %v571 = vadd.f32 %v390, %v570
    %v572 = vpop.f32.mrb[0].mxu0
    %573 = vmatprep.mubr.f32.mxu0 0.0
    %v574 = vand.u32 %v290, 4294901760
    %575 = vmatmul.mubr.f32.gmra.mrb[0].mxu0 %v574
    %v576 = vpop.f32.mrb[0].mxu0
    %v577 = vadd.f32 %v400, %v576
    %v578 = vpop.f32.mrb[0].mxu0
    %579 = vmatprep.mubr.f32.mxu0 0.0
    %v580 = vand.u32 %v293, 4294901760
    %581 = vmatmul.mubr.f32.gmra.mrb[0].mxu0 %v580
    %v582 = vpop.f32.mrb[0].mxu0
    %v583 = vadd.f32 %v410, %v582
    %v584 = vpop.f32.mrb[0].mxu0
    %585 = vmatprep.mubr.f32.mxu0 0.0
    %v586 = vand.u32 %v296, 4294901760
    %587 = vmatmul.mubr.f32.gmra.mrb[0].mxu0 %v586
    %v588 = vpop.f32.mrb[0].mxu0
    %v589 = vadd.f32 %v420, %v588
    %v590 = vpop.f32.mrb[0].mxu0
    %591 = vmatprep.mubr.f32.mxu0 0.0
    %v592 = vand.u32 %v299, 4294901760
    %593 = vmatmul.mubr.f32.gmra.mrb[0].mxu0 %v592
    %v594 = vpop.f32.mrb[0].mxu0
    %v595 = vadd.f32 %v430, %v594
    %v596 = vpop.f32.mrb[0].mxu0
    %597 = vmatprep.mubr.f32.mxu0 0.0
    %v598 = vand.u32 %v302, 4294901760
    %599 = vmatmul.mubr.f32.gmra.mrb[0].mxu0 %v598
    %v600 = vpop.f32.mrb[0].mxu0
    %v601 = vadd.f32 %v440, %v600
    %v602 = vpop.f32.mrb[0].mxu0
    %603 = vmatprep.mubr.f32.mxu0 0.0
    %v604 = vand.u32 %v305, 4294901760
    %605 = vmatmul.mubr.f32.gmra.mrb[0].mxu0 %v604
    %v606 = vpop.f32.mrb[0].mxu0
    %v607 = vadd.f32 %v450, %v606
    %v608 = vpop.f32.mrb[0].mxu0
    %609 = vmatprep.mubr.f32.mxu0 0.0
    %v610 = vand.u32 %v308, 4294901760
    %611 = vmatmul.mubr.f32.gmra.mrb[0].mxu0 %v610
    %v612 = vpop.f32.mrb[0].mxu0
    %v613 = vadd.f32 %v460, %v612
    %v614 = vpop.f32.mrb[0].mxu0
    %615 = vdwg.mxu0
    %616 = vmatprep.subr.mxu0 0.0
    %v617 = vand.u32 %v277, 4294901760
    %v618 = vsub.f32 %v277, %v617
    %619 = vmatpush1.msra.mxu0 %v618
    %620 = vmatprep.subr.mxu0 0.0
    %v621 = vand.u32 %v278, 4294901760
    %v622 = vsub.f32 %v278, %v621
    %623 = vmatpush1.msra.mxu0 %v622
    %624 = vmatprep.subr.mxu0 0.0
    %v625 = vand.u32 %v279, 4294901760
    %v626 = vsub.f32 %v279, %v625
    %627 = vmatpush1.msra.mxu0 %v626
    %628 = vmatprep.subr.mxu0 0.0
    %v629 = vand.u32 %v280, 4294901760
    %v630 = vsub.f32 %v280, %v629
    %631 = vmatpush1.msra.mxu0 %v630
    %632 = vmatprep.subr.mxu0 0.0
    %v633 = vand.u32 %v281, 4294901760
    %v634 = vsub.f32 %v281, %v633
    %635 = vmatpush1.msra.mxu0 %v634
    %636 = vmatprep.subr.mxu0 0.0
    %v637 = vand.u32 %v282, 4294901760
    %v638 = vsub.f32 %v282, %v637
    %639 = vmatpush1.msra.mxu0 %v638
    %640 = vmatprep.subr.mxu0 0.0
    %v641 = vand.u32 %v283, 4294901760
    %v642 = vsub.f32 %v283, %v641
    %643 = vmatpush1.msra.mxu0 %v642
    %644 = vmatprep.subr.mxu0 0.0
    %v645 = vand.u32 %v284, 4294901760
    %v646 = vsub.f32 %v284, %v645
    %647 = vmatpush1.msra.mxu0 %v646
    %648 = vmatprep.subr.mxu0 0.0
    %649 = vmatpush1.msra.mxu0 0.0
    %650 = vmatprep.subr.mxu0 0.0
    %651 = vmatpush1.msra.mxu0 0.0
    %652 = vmatprep.subr.mxu0 0.0
    %653 = vmatpush1.msra.mxu0 0.0
    %654 = vmatprep.subr.mxu0 0.0
    %655 = vmatpush1.msra.mxu0 0.0
    %656 = vmatprep.subr.mxu0 0.0
    %657 = vmatpush1.msra.mxu0 0.0
    %658 = vmatprep.subr.mxu0 0.0
    %659 = vmatpush1.msra.mxu0 0.0
    %660 = vmatprep.subr.mxu0 0.0
    %661 = vmatpush1.msra.mxu0 0.0
    %662 = vmatprep.subr.mxu0 0.0
    %663 = vmatpush1.msra.mxu0 0.0
    %664 = vmatprep.subr.mxu0 0.0
    %665 = vmatpush1.msra.mxu0 0.0
    %666 = vmatprep.subr.mxu0 0.0
    %667 = vmatpush1.msra.mxu0 0.0
    %668 = vmatprep.subr.mxu0 0.0
    %669 = vmatpush1.msra.mxu0 0.0
    %670 = vmatprep.subr.mxu0 0.0
    %671 = vmatpush1.msra.mxu0 0.0
    %672 = vmatprep.subr.mxu0 0.0
    %673 = vmatpush1.msra.mxu0 0.0
    %674 = vmatprep.subr.mxu0 0.0
    %675 = vmatpush1.msra.mxu0 0.0
    %676 = vmatprep.subr.mxu0 0.0
    %677 = vmatpush1.msra.mxu0 0.0
    %678 = vmatprep.subr.mxu0 0.0
    %679 = vmatpush1.msra.mxu0 0.0
    %680 = vmatprep.subr.mxu0 0.0
    %681 = vmatpush1.msra.mxu0 0.0
    %682 = vmatprep.subr.mxu0 0.0
    %683 = vmatpush1.msra.mxu0 0.0
    %684 = vmatprep.subr.mxu0 0.0
    %685 = vmatpush1.msra.mxu0 0.0
    %686 = vmatprep.subr.mxu0 0.0
    %687 = vmatpush1.msra.mxu0 0.0
    %688 = vmatprep.subr.mxu0 0.0
    %689 = vmatpush1.msra.mxu0 0.0
    %690 = vmatprep.subr.mxu0 0.0
    %691 = vmatpush1.msra.mxu0 0.0
    %692 = vmatprep.subr.mxu0 0.0
    %693 = vmatpush1.msra.mxu0 0.0
    %694 = vmatprep.subr.mxu0 0.0
    %695 = vmatpush1.msra.mxu0 0.0
    %696 = vmatprep.mubr.f32.mxu0 0.0
    %v697 = vand.u32 %v287, 4294901760
    %v698 = vsub.f32 %v287, %v697
    %699 = vmatmul.mubr.f32.gmra.mrb[0].mxu0 %v698
    %v700 = vpop.f32.mrb[0].mxu0
    %v701 = vadd.f32 %v571, %v700
    %v702 = vpop.f32.mrb[0].mxu0
    %703 = vmatprep.mubr.f32.mxu0 0.0
    %v704 = vand.u32 %v290, 4294901760
    %v705 = vsub.f32 %v290, %v704
    %706 = vmatmul.mubr.f32.gmra.mrb[0].mxu0 %v705
    %v707 = vpop.f32.mrb[0].mxu0
    %v708 = vadd.f32 %v577, %v707
    %v709 = vpop.f32.mrb[0].mxu0
    %710 = vmatprep.mubr.f32.mxu0 0.0
    %v711 = vand.u32 %v293, 4294901760
    %v712 = vsub.f32 %v293, %v711
    %713 = vmatmul.mubr.f32.gmra.mrb[0].mxu0 %v712
    %v714 = vpop.f32.mrb[0].mxu0
    %v715 = vadd.f32 %v583, %v714
    %v716 = vpop.f32.mrb[0].mxu0
    %717 = vmatprep.mubr.f32.mxu0 0.0
    %v718 = vand.u32 %v296, 4294901760
    %v719 = vsub.f32 %v296, %v718
    %720 = vmatmul.mubr.f32.gmra.mrb[0].mxu0 %v719
    %v721 = vpop.f32.mrb[0].mxu0
    %v722 = vadd.f32 %v589, %v721
    %v723 = vpop.f32.mrb[0].mxu0
    %724 = vmatprep.mubr.f32.mxu0 0.0
    %v725 = vand.u32 %v299, 4294901760
    %v726 = vsub.f32 %v299, %v725
    %727 = vmatmul.mubr.f32.gmra.mrb[0].mxu0 %v726
    %v728 = vpop.f32.mrb[0].mxu0
    %v729 = vadd.f32 %v595, %v728
    %v730 = vpop.f32.mrb[0].mxu0
    %731 = vmatprep.mubr.f32.mxu0 0.0
    %v732 = vand.u32 %v302, 4294901760
    %v733 = vsub.f32 %v302, %v732
    %734 = vmatmul.mubr.f32.gmra.mrb[0].mxu0 %v733
    %v735 = vpop.f32.mrb[0].mxu0
    %v736 = vadd.f32 %v601, %v735
    %v737 = vpop.f32.mrb[0].mxu0
    %738 = vmatprep.mubr.f32.mxu0 0.0
    %v739 = vand.u32 %v305, 4294901760
    %v740 = vsub.f32 %v305, %v739
    %741 = vmatmul.mubr.f32.gmra.mrb[0].mxu0 %v740
    %v742 = vpop.f32.mrb[0].mxu0
    %v743 = vadd.f32 %v607, %v742
    %v744 = vpop.f32.mrb[0].mxu0
    %745 = vmatprep.mubr.f32.mxu0 0.0
    %v746 = vand.u32 %v308, 4294901760
    %v747 = vsub.f32 %v308, %v746
    %748 = vmatmul.mubr.f32.gmra.mrb[0].mxu0 %v747
    %v749 = vpop.f32.mrb[0].mxu0
    %v750 = vadd.f32 %v613, %v749
    %v751 = vpop.f32.mrb[0].mxu0
    %752 = vdwg.mxu0
    %753 = vmatprep.subr.mxu0 0.0
    %v754 = vand.u32 %v277, 4294901760
    %755 = vmatpush1.msra.mxu0 %v754
    %756 = vmatprep.subr.mxu0 0.0
    %v757 = vand.u32 %v278, 4294901760
    %758 = vmatpush1.msra.mxu0 %v757
    %759 = vmatprep.subr.mxu0 0.0
    %v760 = vand.u32 %v279, 4294901760
    %761 = vmatpush1.msra.mxu0 %v760
    %762 = vmatprep.subr.mxu0 0.0
    %v763 = vand.u32 %v280, 4294901760
    %764 = vmatpush1.msra.mxu0 %v763
    %765 = vmatprep.subr.mxu0 0.0
    %v766 = vand.u32 %v281, 4294901760
    %767 = vmatpush1.msra.mxu0 %v766
    %768 = vmatprep.subr.mxu0 0.0
    %v769 = vand.u32 %v282, 4294901760
    %770 = vmatpush1.msra.mxu0 %v769
    %771 = vmatprep.subr.mxu0 0.0
    %v772 = vand.u32 %v283, 4294901760
    %773 = vmatpush1.msra.mxu0 %v772
    %774 = vmatprep.subr.mxu0 0.0
    %v775 = vand.u32 %v284, 4294901760
    %776 = vmatpush1.msra.mxu0 %v775
    %777 = vmatprep.subr.mxu0 0.0
    %778 = vmatpush1.msra.mxu0 0.0
    %779 = vmatprep.subr.mxu0 0.0
    %780 = vmatpush1.msra.mxu0 0.0
    %781 = vmatprep.subr.mxu0 0.0
    %782 = vmatpush1.msra.mxu0 0.0
    %783 = vmatprep.subr.mxu0 0.0
    %784 = vmatpush1.msra.mxu0 0.0
    %785 = vmatprep.subr.mxu0 0.0
    %786 = vmatpush1.msra.mxu0 0.0
    %787 = vmatprep.subr.mxu0 0.0
    %788 = vmatpush1.msra.mxu0 0.0
    %789 = vmatprep.subr.mxu0 0.0
    %790 = vmatpush1.msra.mxu0 0.0
    %791 = vmatprep.subr.mxu0 0.0
    %792 = vmatpush1.msra.mxu0 0.0
    %793 = vmatprep.subr.mxu0 0.0
    %794 = vmatpush1.msra.mxu0 0.0
    %795 = vmatprep.subr.mxu0 0.0
    %796 = vmatpush1.msra.mxu0 0.0
    %797 = vmatprep.subr.mxu0 0.0
    %798 = vmatpush1.msra.mxu0 0.0
    %799 = vmatprep.subr.mxu0 0.0
    %800 = vmatpush1.msra.mxu0 0.0
    %801 = vmatprep.subr.mxu0 0.0
    %802 = vmatpush1.msra.mxu0 0.0
    %803 = vmatprep.subr.mxu0 0.0
    %804 = vmatpush1.msra.mxu0 0.0
    %805 = vmatprep.subr.mxu0 0.0
    %806 = vmatpush1.msra.mxu0 0.0
    %807 = vmatprep.subr.mxu0 0.0
    %808 = vmatpush1.msra.mxu0 0.0
    %809 = vmatprep.subr.mxu0 0.0
    %810 = vmatpush1.msra.mxu0 0.0
    %811 = vmatprep.subr.mxu0 0.0
    %812 = vmatpush1.msra.mxu0 0.0
    %813 = vmatprep.subr.mxu0 0.0
    %814 = vmatpush1.msra.mxu0 0.0
    %815 = vmatprep.subr.mxu0 0.0
    %816 = vmatpush1.msra.mxu0 0.0
    %817 = vmatprep.subr.mxu0 0.0
    %818 = vmatpush1.msra.mxu0 0.0
    %819 = vmatprep.subr.mxu0 0.0
    %820 = vmatpush1.msra.mxu0 0.0
    %821 = vmatprep.subr.mxu0 0.0
    %822 = vmatpush1.msra.mxu0 0.0
    %823 = vmatprep.subr.mxu0 0.0
    %824 = vmatpush1.msra.mxu0 0.0
    %825 = vmatprep.mubr.f32.mxu0 0.0
    %v826 = vand.u32 %v287, 4294901760
    %v827 = vsub.f32 %v287, %v826
    %v828 = vand.u32 %v827, 4294901760
    %829 = vmatmul.mubr.f32.gmra.mrb[0].mxu0 %v828
    %v830 = vpop.f32.mrb[0].mxu0
    %v831 = vadd.f32 %v701, %v830
    %v832 = vpop.f32.mrb[0].mxu0
    %833 = vmatprep.mubr.f32.mxu0 0.0
    %v834 = vand.u32 %v290, 4294901760
    %v835 = vsub.f32 %v290, %v834
    %v836 = vand.u32 %v835, 4294901760
    %837 = vmatmul.mubr.f32.gmra.mrb[0].mxu0 %v836
    %v838 = vpop.f32.mrb[0].mxu0
    %v839 = vadd.f32 %v708, %v838
    %v840 = vpop.f32.mrb[0].mxu0
    %841 = vmatprep.mubr.f32.mxu0 0.0
    %v842 = vand.u32 %v293, 4294901760
    %v843 = vsub.f32 %v293, %v842
    %v844 = vand.u32 %v843, 4294901760
    %845 = vmatmul.mubr.f32.gmra.mrb[0].mxu0 %v844
    %v846 = vpop.f32.mrb[0].mxu0
    %v847 = vadd.f32 %v715, %v846
    %v848 = vpop.f32.mrb[0].mxu0
    %849 = vmatprep.mubr.f32.mxu0 0.0
    %v850 = vand.u32 %v296, 4294901760
    %v851 = vsub.f32 %v296, %v850
    %v852 = vand.u32 %v851, 4294901760
    %853 = vmatmul.mubr.f32.gmra.mrb[0].mxu0 %v852
    %v854 = vpop.f32.mrb[0].mxu0
    %v855 = vadd.f32 %v722, %v854
    %v856 = vpop.f32.mrb[0].mxu0
    %857 = vmatprep.mubr.f32.mxu0 0.0
    %v858 = vand.u32 %v299, 4294901760
    %v859 = vsub.f32 %v299, %v858
    %v860 = vand.u32 %v859, 4294901760
    %861 = vmatmul.mubr.f32.gmra.mrb[0].mxu0 %v860
    %v862 = vpop.f32.mrb[0].mxu0
    %v863 = vadd.f32 %v729, %v862
    %v864 = vpop.f32.mrb[0].mxu0
    %865 = vmatprep.mubr.f32.mxu0 0.0
    %v866 = vand.u32 %v302, 4294901760
    %v867 = vsub.f32 %v302, %v866
    %v868 = vand.u32 %v867, 4294901760
    %869 = vmatmul.mubr.f32.gmra.mrb[0].mxu0 %v868
    %v870 = vpop.f32.mrb[0].mxu0
    %v871 = vadd.f32 %v736, %v870
    %v872 = vpop.f32.mrb[0].mxu0
    %873 = vmatprep.mubr.f32.mxu0 0.0
    %v874 = vand.u32 %v305, 4294901760
    %v875 = vsub.f32 %v305, %v874
    %v876 = vand.u32 %v875, 4294901760
    %877 = vmatmul.mubr.f32.gmra.mrb[0].mxu0 %v876
    %v878 = vpop.f32.mrb[0].mxu0
    %v879 = vadd.f32 %v743, %v878
    %v880 = vpop.f32.mrb[0].mxu0
    %881 = vmatprep.mubr.f32.mxu0 0.0
    %v882 = vand.u32 %v308, 4294901760
    %v883 = vsub.f32 %v308, %v882
    %v884 = vand.u32 %v883, 4294901760
    %885 = vmatmul.mubr.f32.gmra.mrb[0].mxu0 %v884
    %v886 = vpop.f32.mrb[0].mxu0
    %v887 = vadd.f32 %v750, %v886
    %v888 = vpop.f32.mrb[0].mxu0
    %889 = vdwg.mxu0
    %890 = vmatprep.subr.mxu0 0.0
    %v891 = vand.u32 %v277, 4294901760
    %v892 = vsub.f32 %v277, %v891
    %v893 = vand.u32 %v892, 4294901760
    %894 = vmatpush1.msra.mxu0 %v893
    %895 = vmatprep.subr.mxu0 0.0
    %v896 = vand.u32 %v278, 4294901760
    %v897 = vsub.f32 %v278, %v896
    %v898 = vand.u32 %v897, 4294901760
    %899 = vmatpush1.msra.mxu0 %v898
    %900 = vmatprep.subr.mxu0 0.0
    %v901 = vand.u32 %v279, 4294901760
    %v902 = vsub.f32 %v279, %v901
    %v903 = vand.u32 %v902, 4294901760
    %904 = vmatpush1.msra.mxu0 %v903
    %905 = vmatprep.subr.mxu0 0.0
    %v906 = vand.u32 %v280, 4294901760
    %v907 = vsub.f32 %v280, %v906
    %v908 = vand.u32 %v907, 4294901760
    %909 = vmatpush1.msra.mxu0 %v908
    %910 = vmatprep.subr.mxu0 0.0
    %v911 = vand.u32 %v281, 4294901760
    %v912 = vsub.f32 %v281, %v911
    %v913 = vand.u32 %v912, 4294901760
    %914 = vmatpush1.msra.mxu0 %v913
    %915 = vmatprep.subr.mxu0 0.0
    %v916 = vand.u32 %v282, 4294901760
    %v917 = vsub.f32 %v282, %v916
    %v918 = vand.u32 %v917, 4294901760
    %919 = vmatpush1.msra.mxu0 %v918
    %920 = vmatprep.subr.mxu0 0.0
    %v921 = vand.u32 %v283, 4294901760
    %v922 = vsub.f32 %v283, %v921
    %v923 = vand.u32 %v922, 4294901760
    %924 = vmatpush1.msra.mxu0 %v923
    %925 = vmatprep.subr.mxu0 0.0
    %v926 = vand.u32 %v284, 4294901760
    %v927 = vsub.f32 %v284, %v926
    %v928 = vand.u32 %v927, 4294901760
    %929 = vmatpush1.msra.mxu0 %v928
    %930 = vmatprep.subr.mxu0 0.0
    %931 = vmatpush1.msra.mxu0 0.0
    %932 = vmatprep.subr.mxu0 0.0
    %933 = vmatpush1.msra.mxu0 0.0
    %934 = vmatprep.subr.mxu0 0.0
    %935 = vmatpush1.msra.mxu0 0.0
    %936 = vmatprep.subr.mxu0 0.0
    %937 = vmatpush1.msra.mxu0 0.0
    %938 = vmatprep.subr.mxu0 0.0
    %939 = vmatpush1.msra.mxu0 0.0
    %940 = vmatprep.subr.mxu0 0.0
    %941 = vmatpush1.msra.mxu0 0.0
    %942 = vmatprep.subr.mxu0 0.0
    %943 = vmatpush1.msra.mxu0 0.0
    %944 = vmatprep.subr.mxu0 0.0
    %945 = vmatpush1.msra.mxu0 0.0
    %946 = vmatprep.subr.mxu0 0.0
    %947 = vmatpush1.msra.mxu0 0.0
    %948 = vmatprep.subr.mxu0 0.0
    %949 = vmatpush1.msra.mxu0 0.0
    %950 = vmatprep.subr.mxu0 0.0
    %951 = vmatpush1.msra.mxu0 0.0
    %952 = vmatprep.subr.mxu0 0.0
    %953 = vmatpush1.msra.mxu0 0.0
    %954 = vmatprep.subr.mxu0 0.0
    %955 = vmatpush1.msra.mxu0 0.0
    %956 = vmatprep.subr.mxu0 0.0
    %957 = vmatpush1.msra.mxu0 0.0
    %958 = vmatprep.subr.mxu0 0.0
    %959 = vmatpush1.msra.mxu0 0.0
    %960 = vmatprep.subr.mxu0 0.0
    %961 = vmatpush1.msra.mxu0 0.0
    %962 = vmatprep.subr.mxu0 0.0
    %963 = vmatpush1.msra.mxu0 0.0
    %964 = vmatprep.subr.mxu0 0.0
    %965 = vmatpush1.msra.mxu0 0.0
    %966 = vmatprep.subr.mxu0 0.0
    %967 = vmatpush1.msra.mxu0 0.0
    %968 = vmatprep.subr.mxu0 0.0
    %969 = vmatpush1.msra.mxu0 0.0
    %970 = vmatprep.subr.mxu0 0.0
    %971 = vmatpush1.msra.mxu0 0.0
    %972 = vmatprep.subr.mxu0 0.0
    %973 = vmatpush1.msra.mxu0 0.0
    %974 = vmatprep.subr.mxu0 0.0
    %975 = vmatpush1.msra.mxu0 0.0
    %976 = vmatprep.subr.mxu0 0.0
    %977 = vmatpush1.msra.mxu0 0.0
    %978 = vmatprep.mubr.f32.mxu0 0.0
    %v979 = vand.u32 %v287, 4294901760
    %980 = vmatmul.mubr.f32.gmra.mrb[0].mxu0 %v979
    %v981 = vpop.f32.mrb[0].mxu0
    %v982 = vadd.f32 %v831, %v981
    %v983 = vpop.f32.mrb[0].mxu0
    %984 = vmatprep.mubr.f32.mxu0 0.0
    %v985 = vand.u32 %v290, 4294901760
    %986 = vmatmul.mubr.f32.gmra.mrb[0].mxu0 %v985
    %v987 = vpop.f32.mrb[0].mxu0
    %v988 = vadd.f32 %v839, %v987
    %v989 = vpop.f32.mrb[0].mxu0
    %990 = vmatprep.mubr.f32.mxu0 0.0
    %v991 = vand.u32 %v293, 4294901760
    %992 = vmatmul.mubr.f32.gmra.mrb[0].mxu0 %v991
    %v993 = vpop.f32.mrb[0].mxu0
    %v994 = vadd.f32 %v847, %v993
    %v995 = vpop.f32.mrb[0].mxu0
    %996 = vmatprep.mubr.f32.mxu0 0.0
    %v997 = vand.u32 %v296, 4294901760
    %998 = vmatmul.mubr.f32.gmra.mrb[0].mxu0 %v997
    %v999 = vpop.f32.mrb[0].mxu0
    %v1000 = vadd.f32 %v855, %v999
    %v1001 = vpop.f32.mrb[0].mxu0
    %1002 = vmatprep.mubr.f32.mxu0 0.0
    %v1003 = vand.u32 %v299, 4294901760
    %1004 = vmatmul.mubr.f32.gmra.mrb[0].mxu0 %v1003
    %v1005 = vpop.f32.mrb[0].mxu0
    %v1006 = vadd.f32 %v863, %v1005
    %v1007 = vpop.f32.mrb[0].mxu0
    %1008 = vmatprep.mubr.f32.mxu0 0.0
    %v1009 = vand.u32 %v302, 4294901760
    %1010 = vmatmul.mubr.f32.gmra.mrb[0].mxu0 %v1009
    %v1011 = vpop.f32.mrb[0].mxu0
    %v1012 = vadd.f32 %v871, %v1011
    %v1013 = vpop.f32.mrb[0].mxu0
    %1014 = vmatprep.mubr.f32.mxu0 0.0
    %v1015 = vand.u32 %v305, 4294901760
    %1016 = vmatmul.mubr.f32.gmra.mrb[0].mxu0 %v1015
    %v1017 = vpop.f32.mrb[0].mxu0
    %v1018 = vadd.f32 %v879, %v1017
    %v1019 = vpop.f32.mrb[0].mxu0
    %1020 = vmatprep.mubr.f32.mxu0 0.0
    %v1021 = vand.u32 %v308, 4294901760
    %1022 = vmatmul.mubr.f32.gmra.mrb[0].mxu0 %v1021
    %v1023 = vpop.f32.mrb[0].mxu0
    %v1024 = vadd.f32 %v887, %v1023
    %v1025 = vpop.f32.mrb[0].mxu0
    %1026 = vdwg.mxu0
    %1027 = vmatprep.subr.mxu0 0.0
    %v1028 = vand.u32 %v277, 4294901760
    %1029 = vmatpush1.msra.mxu0 %v1028
    %1030 = vmatprep.subr.mxu0 0.0
    %v1031 = vand.u32 %v278, 4294901760
    %1032 = vmatpush1.msra.mxu0 %v1031
    %1033 = vmatprep.subr.mxu0 0.0
    %v1034 = vand.u32 %v279, 4294901760
    %1035 = vmatpush1.msra.mxu0 %v1034
    %1036 = vmatprep.subr.mxu0 0.0
    %v1037 = vand.u32 %v280, 4294901760
    %1038 = vmatpush1.msra.mxu0 %v1037
    %1039 = vmatprep.subr.mxu0 0.0
    %v1040 = vand.u32 %v281, 4294901760
    %1041 = vmatpush1.msra.mxu0 %v1040
    %1042 = vmatprep.subr.mxu0 0.0
    %v1043 = vand.u32 %v282, 4294901760
    %1044 = vmatpush1.msra.mxu0 %v1043
    %1045 = vmatprep.subr.mxu0 0.0
    %v1046 = vand.u32 %v283, 4294901760
    %1047 = vmatpush1.msra.mxu0 %v1046
    %1048 = vmatprep.subr.mxu0 0.0
    %v1049 = vand.u32 %v284, 4294901760
    %1050 = vmatpush1.msra.mxu0 %v1049
    %1051 = vmatprep.subr.mxu0 0.0
    %1052 = vmatpush1.msra.mxu0 0.0
    %1053 = vmatprep.subr.mxu0 0.0
    %1054 = vmatpush1.msra.mxu0 0.0
    %1055 = vmatprep.subr.mxu0 0.0
    %1056 = vmatpush1.msra.mxu0 0.0
    %1057 = vmatprep.subr.mxu0 0.0
    %1058 = vmatpush1.msra.mxu0 0.0
    %1059 = vmatprep.subr.mxu0 0.0
    %1060 = vmatpush1.msra.mxu0 0.0
    %1061 = vmatprep.subr.mxu0 0.0
    %1062 = vmatpush1.msra.mxu0 0.0
    %1063 = vmatprep.subr.mxu0 0.0
    %1064 = vmatpush1.msra.mxu0 0.0
    %1065 = vmatprep.subr.mxu0 0.0
    %1066 = vmatpush1.msra.mxu0 0.0
    %1067 = vmatprep.subr.mxu0 0.0
    %1068 = vmatpush1.msra.mxu0 0.0
    %1069 = vmatprep.subr.mxu0 0.0
    %1070 = vmatpush1.msra.mxu0 0.0
    %1071 = vmatprep.subr.mxu0 0.0
    %1072 = vmatpush1.msra.mxu0 0.0
    %1073 = vmatprep.subr.mxu0 0.0
    %1074 = vmatpush1.msra.mxu0 0.0
    %1075 = vmatprep.subr.mxu0 0.0
    %1076 = vmatpush1.msra.mxu0 0.0
    %1077 = vmatprep.subr.mxu0 0.0
    %1078 = vmatpush1.msra.mxu0 0.0
    %1079 = vmatprep.subr.mxu0 0.0
    %1080 = vmatpush1.msra.mxu0 0.0
    %1081 = vmatprep.subr.mxu0 0.0
    %1082 = vmatpush1.msra.mxu0 0.0
    %1083 = vmatprep.subr.mxu0 0.0
    %1084 = vmatpush1.msra.mxu0 0.0
    %1085 = vmatprep.subr.mxu0 0.0
    %1086 = vmatpush1.msra.mxu0 0.0
    %1087 = vmatprep.subr.mxu0 0.0
    %1088 = vmatpush1.msra.mxu0 0.0
    %1089 = vmatprep.subr.mxu0 0.0
    %1090 = vmatpush1.msra.mxu0 0.0
    %1091 = vmatprep.subr.mxu0 0.0
    %1092 = vmatpush1.msra.mxu0 0.0
    %1093 = vmatprep.subr.mxu0 0.0
    %1094 = vmatpush1.msra.mxu0 0.0
    %1095 = vmatprep.subr.mxu0 0.0
    %1096 = vmatpush1.msra.mxu0 0.0
    %1097 = vmatprep.subr.mxu0 0.0
    %1098 = vmatpush1.msra.mxu0 0.0
    %1099 = vmatprep.mubr.f32.mxu0 0.0
    %v1100 = vand.u32 %v287, 4294901760
    %1101 = vmatmul.mubr.f32.gmra.mrb[0].mxu0 %v1100
    %v1102 = vpop.f32.mrb[0].mxu0
    %v1103 = vadd.f32 %v982, %v1102
    %v1104 = vpop.f32.mrb[0].mxu0
    %1105 = vmatprep.mubr.f32.mxu0 0.0
    %v1106 = vand.u32 %v290, 4294901760
    %1107 = vmatmul.mubr.f32.gmra.mrb[0].mxu0 %v1106
    %v1108 = vpop.f32.mrb[0].mxu0
    %v1109 = vadd.f32 %v988, %v1108
    %v1110 = vpop.f32.mrb[0].mxu0
    %1111 = vmatprep.mubr.f32.mxu0 0.0
    %v1112 = vand.u32 %v293, 4294901760
    %1113 = vmatmul.mubr.f32.gmra.mrb[0].mxu0 %v1112
    %v1114 = vpop.f32.mrb[0].mxu0
    %v1115 = vadd.f32 %v994, %v1114
    %v1116 = vpop.f32.mrb[0].mxu0
    %1117 = vmatprep.mubr.f32.mxu0 0.0
    %v1118 = vand.u32 %v296, 4294901760
    %1119 = vmatmul.mubr.f32.gmra.mrb[0].mxu0 %v1118
    %v1120 = vpop.f32.mrb[0].mxu0
    %v1121 = vadd.f32 %v1000, %v1120
    %v1122 = vpop.f32.mrb[0].mxu0
    %1123 = vmatprep.mubr.f32.mxu0 0.0
    %v1124 = vand.u32 %v299, 4294901760
    %1125 = vmatmul.mubr.f32.gmra.mrb[0].mxu0 %v1124
    %v1126 = vpop.f32.mrb[0].mxu0
    %v1127 = vadd.f32 %v1006, %v1126
    %v1128 = vpop.f32.mrb[0].mxu0
    %1129 = vmatprep.mubr.f32.mxu0 0.0
    %v1130 = vand.u32 %v302, 4294901760
    %1131 = vmatmul.mubr.f32.gmra.mrb[0].mxu0 %v1130
    %v1132 = vpop.f32.mrb[0].mxu0
    %v1133 = vadd.f32 %v1012, %v1132
    %v1134 = vpop.f32.mrb[0].mxu0
    %1135 = vmatprep.mubr.f32.mxu0 0.0
    %v1136 = vand.u32 %v305, 4294901760
    %1137 = vmatmul.mubr.f32.gmra.mrb[0].mxu0 %v1136
    %v1138 = vpop.f32.mrb[0].mxu0
    %v1139 = vadd.f32 %v1018, %v1138
    %v1140 = vpop.f32.mrb[0].mxu0
    %1141 = vmatprep.mubr.f32.mxu0 0.0
    %v1142 = vand.u32 %v308, 4294901760
    %1143 = vmatmul.mubr.f32.gmra.mrb[0].mxu0 %v1142
    %v1144 = vpop.f32.mrb[0].mxu0
    %v1145 = vadd.f32 %v1024, %v1144
    %v1146 = vpop.f32.mrb[0].mxu0
    %1147 = vdwg.mxu0
    %v1149 = vsel %vm285, %v178, 0
    %v1152 = vsel %vm285, %v179, 0
    %v1155 = vsel %vm285, %v180, 0
    %v1158 = vsel %vm285, %v181, 0
    %v1161 = vsel %vm285, %v182, 0
    %v1164 = vsel %vm285, %v183, 0
    %v1167 = vsel %vm285, %v184, 0
    %v1170 = vsel %vm285, %v185, 0
    %1172 = vmatprep.subr.mxu0 0.0
    %v1173 = vand.u32 %v186, 4294901760
    %1174 = vmatpush1.msra.mxu0 %v1173
    %1175 = vmatprep.subr.mxu0 0.0
    %v1176 = vand.u32 %v187, 4294901760
    %1177 = vmatpush1.msra.mxu0 %v1176
    %1178 = vmatprep.subr.mxu0 0.0
    %v1179 = vand.u32 %v188, 4294901760
    %1180 = vmatpush1.msra.mxu0 %v1179
    %1181 = vmatprep.subr.mxu0 0.0
    %v1182 = vand.u32 %v189, 4294901760
    %1183 = vmatpush1.msra.mxu0 %v1182
    %1184 = vmatprep.subr.mxu0 0.0
    %v1185 = vand.u32 %v190, 4294901760
    %1186 = vmatpush1.msra.mxu0 %v1185
    %1187 = vmatprep.subr.mxu0 0.0
    %v1188 = vand.u32 %v191, 4294901760
    %1189 = vmatpush1.msra.mxu0 %v1188
    %1190 = vmatprep.subr.mxu0 0.0
    %v1191 = vand.u32 %v192, 4294901760
    %1192 = vmatpush1.msra.mxu0 %v1191
    %1193 = vmatprep.subr.mxu0 0.0
    %v1194 = vand.u32 %v193, 4294901760
    %1195 = vmatpush1.msra.mxu0 %v1194
    %1196 = vmatprep.subr.mxu0 0.0
    %1197 = vmatpush1.msra.mxu0 0.0
    %1198 = vmatprep.subr.mxu0 0.0
    %1199 = vmatpush1.msra.mxu0 0.0
    %1200 = vmatprep.subr.mxu0 0.0
    %1201 = vmatpush1.msra.mxu0 0.0
    %1202 = vmatprep.subr.mxu0 0.0
    %1203 = vmatpush1.msra.mxu0 0.0
    %1204 = vmatprep.subr.mxu0 0.0
    %1205 = vmatpush1.msra.mxu0 0.0
    %1206 = vmatprep.subr.mxu0 0.0
    %1207 = vmatpush1.msra.mxu0 0.0
    %1208 = vmatprep.subr.mxu0 0.0
    %1209 = vmatpush1.msra.mxu0 0.0
    %1210 = vmatprep.subr.mxu0 0.0
    %1211 = vmatpush1.msra.mxu0 0.0
    %1212 = vmatprep.subr.mxu0 0.0
    %1213 = vmatpush1.msra.mxu0 0.0
    %1214 = vmatprep.subr.mxu0 0.0
    %1215 = vmatpush1.msra.mxu0 0.0
    %1216 = vmatprep.subr.mxu0 0.0
    %1217 = vmatpush1.msra.mxu0 0.0
    %1218 = vmatprep.subr.mxu0 0.0
    %1219 = vmatpush1.msra.mxu0 0.0
    %1220 = vmatprep.subr.mxu0 0.0
    %1221 = vmatpush1.msra.mxu0 0.0
    %1222 = vmatprep.subr.mxu0 0.0
    %1223 = vmatpush1.msra.mxu0 0.0
    %1224 = vmatprep.subr.mxu0 0.0
    %1225 = vmatpush1.msra.mxu0 0.0
    %1226 = vmatprep.subr.mxu0 0.0
    %1227 = vmatpush1.msra.mxu0 0.0
    %1228 = vmatprep.subr.mxu0 0.0
    %1229 = vmatpush1.msra.mxu0 0.0
    %1230 = vmatprep.subr.mxu0 0.0
    %1231 = vmatpush1.msra.mxu0 0.0
    %1232 = vmatprep.subr.mxu0 0.0
    %1233 = vmatpush1.msra.mxu0 0.0
    %1234 = vmatprep.subr.mxu0 0.0
    %1235 = vmatpush1.msra.mxu0 0.0
    %1236 = vmatprep.subr.mxu0 0.0
    %1237 = vmatpush1.msra.mxu0 0.0
    %1238 = vmatprep.subr.mxu0 0.0
    %1239 = vmatpush1.msra.mxu0 0.0
    %1240 = vmatprep.subr.mxu0 0.0
    %1241 = vmatpush1.msra.mxu0 0.0
    %1242 = vmatprep.subr.mxu0 0.0
    %1243 = vmatpush1.msra.mxu0 0.0
    %1244 = vmatprep.mubr.f32.mxu0 0.0
    %v1245 = vand.u32 %v1149, 4294901760
    %v1246 = vsub.f32 %v1149, %v1245
    %v1247 = vand.u32 %v1246, 4294901760
    %v1248 = vsub.f32 %v1246, %v1247
    %v1249 = vand.u32 %v1248, 4294901760
    %1250 = vmatmul.mubr.f32.gmra.mrb[0].mxu0 %v1249
    %v1251 = vpop.f32.mrb[0].mxu0
    %v1252 = vadd.f32 %v1103, %v1251
    %v1253 = vpop.f32.mrb[0].mxu0
    %1254 = vmatprep.mubr.f32.mxu0 0.0
    %v1255 = vand.u32 %v1152, 4294901760
    %v1256 = vsub.f32 %v1152, %v1255
    %v1257 = vand.u32 %v1256, 4294901760
    %v1258 = vsub.f32 %v1256, %v1257
    %v1259 = vand.u32 %v1258, 4294901760
    %1260 = vmatmul.mubr.f32.gmra.mrb[0].mxu0 %v1259
    %v1261 = vpop.f32.mrb[0].mxu0
    %v1262 = vadd.f32 %v1109, %v1261
    %v1263 = vpop.f32.mrb[0].mxu0
    %1264 = vmatprep.mubr.f32.mxu0 0.0
    %v1265 = vand.u32 %v1155, 4294901760
    %v1266 = vsub.f32 %v1155, %v1265
    %v1267 = vand.u32 %v1266, 4294901760
    %v1268 = vsub.f32 %v1266, %v1267
    %v1269 = vand.u32 %v1268, 4294901760
    %1270 = vmatmul.mubr.f32.gmra.mrb[0].mxu0 %v1269
    %v1271 = vpop.f32.mrb[0].mxu0
    %v1272 = vadd.f32 %v1115, %v1271
    %v1273 = vpop.f32.mrb[0].mxu0
    %1274 = vmatprep.mubr.f32.mxu0 0.0
    %v1275 = vand.u32 %v1158, 4294901760
    %v1276 = vsub.f32 %v1158, %v1275
    %v1277 = vand.u32 %v1276, 4294901760
    %v1278 = vsub.f32 %v1276, %v1277
    %v1279 = vand.u32 %v1278, 4294901760
    %1280 = vmatmul.mubr.f32.gmra.mrb[0].mxu0 %v1279
    %v1281 = vpop.f32.mrb[0].mxu0
    %v1282 = vadd.f32 %v1121, %v1281
    %v1283 = vpop.f32.mrb[0].mxu0
    %1284 = vmatprep.mubr.f32.mxu0 0.0
    %v1285 = vand.u32 %v1161, 4294901760
    %v1286 = vsub.f32 %v1161, %v1285
    %v1287 = vand.u32 %v1286, 4294901760
    %v1288 = vsub.f32 %v1286, %v1287
    %v1289 = vand.u32 %v1288, 4294901760
    %1290 = vmatmul.mubr.f32.gmra.mrb[0].mxu0 %v1289
    %v1291 = vpop.f32.mrb[0].mxu0
    %v1292 = vadd.f32 %v1127, %v1291
    %v1293 = vpop.f32.mrb[0].mxu0
    %1294 = vmatprep.mubr.f32.mxu0 0.0
    %v1295 = vand.u32 %v1164, 4294901760
    %v1296 = vsub.f32 %v1164, %v1295
    %v1297 = vand.u32 %v1296, 4294901760
    %v1298 = vsub.f32 %v1296, %v1297
    %v1299 = vand.u32 %v1298, 4294901760
    %1300 = vmatmul.mubr.f32.gmra.mrb[0].mxu0 %v1299
    %v1301 = vpop.f32.mrb[0].mxu0
    %v1302 = vadd.f32 %v1133, %v1301
    %v1303 = vpop.f32.mrb[0].mxu0
    %1304 = vmatprep.mubr.f32.mxu0 0.0
    %v1305 = vand.u32 %v1167, 4294901760
    %v1306 = vsub.f32 %v1167, %v1305
    %v1307 = vand.u32 %v1306, 4294901760
    %v1308 = vsub.f32 %v1306, %v1307
    %v1309 = vand.u32 %v1308, 4294901760
    %1310 = vmatmul.mubr.f32.gmra.mrb[0].mxu0 %v1309
    %v1311 = vpop.f32.mrb[0].mxu0
    %v1312 = vadd.f32 %v1139, %v1311
    %v1313 = vpop.f32.mrb[0].mxu0
    %1314 = vmatprep.mubr.f32.mxu0 0.0
    %v1315 = vand.u32 %v1170, 4294901760
    %v1316 = vsub.f32 %v1170, %v1315
    %v1317 = vand.u32 %v1316, 4294901760
    %v1318 = vsub.f32 %v1316, %v1317
    %v1319 = vand.u32 %v1318, 4294901760
    %1320 = vmatmul.mubr.f32.gmra.mrb[0].mxu0 %v1319
    %v1321 = vpop.f32.mrb[0].mxu0
    %v1322 = vadd.f32 %v1145, %v1321
    %v1323 = vpop.f32.mrb[0].mxu0
    %1324 = vdwg.mxu0
    %1325 = vmatprep.subr.mxu0 0.0
    %v1326 = vand.u32 %v186, 4294901760
    %v1327 = vsub.f32 %v186, %v1326
    %v1328 = vand.u32 %v1327, 4294901760
    %v1329 = vsub.f32 %v1327, %v1328
    %v1330 = vand.u32 %v1329, 4294901760
    %1331 = vmatpush1.msra.mxu0 %v1330
    %1332 = vmatprep.subr.mxu0 0.0
    %v1333 = vand.u32 %v187, 4294901760
    %v1334 = vsub.f32 %v187, %v1333
    %v1335 = vand.u32 %v1334, 4294901760
    %v1336 = vsub.f32 %v1334, %v1335
    %v1337 = vand.u32 %v1336, 4294901760
    %1338 = vmatpush1.msra.mxu0 %v1337
    %1339 = vmatprep.subr.mxu0 0.0
    %v1340 = vand.u32 %v188, 4294901760
    %v1341 = vsub.f32 %v188, %v1340
    %v1342 = vand.u32 %v1341, 4294901760
    %v1343 = vsub.f32 %v1341, %v1342
    %v1344 = vand.u32 %v1343, 4294901760
    %1345 = vmatpush1.msra.mxu0 %v1344
    %1346 = vmatprep.subr.mxu0 0.0
    %v1347 = vand.u32 %v189, 4294901760
    %v1348 = vsub.f32 %v189, %v1347
    %v1349 = vand.u32 %v1348, 4294901760
    %v1350 = vsub.f32 %v1348, %v1349
    %v1351 = vand.u32 %v1350, 4294901760
    %1352 = vmatpush1.msra.mxu0 %v1351
    %1353 = vmatprep.subr.mxu0 0.0
    %v1354 = vand.u32 %v190, 4294901760
    %v1355 = vsub.f32 %v190, %v1354
    %v1356 = vand.u32 %v1355, 4294901760
    %v1357 = vsub.f32 %v1355, %v1356
    %v1358 = vand.u32 %v1357, 4294901760
    %1359 = vmatpush1.msra.mxu0 %v1358
    %1360 = vmatprep.subr.mxu0 0.0
    %v1361 = vand.u32 %v191, 4294901760
    %v1362 = vsub.f32 %v191, %v1361
    %v1363 = vand.u32 %v1362, 4294901760
    %v1364 = vsub.f32 %v1362, %v1363
    %v1365 = vand.u32 %v1364, 4294901760
    %1366 = vmatpush1.msra.mxu0 %v1365
    %1367 = vmatprep.subr.mxu0 0.0
    %v1368 = vand.u32 %v192, 4294901760
    %v1369 = vsub.f32 %v192, %v1368
    %v1370 = vand.u32 %v1369, 4294901760
    %v1371 = vsub.f32 %v1369, %v1370
    %v1372 = vand.u32 %v1371, 4294901760
    %1373 = vmatpush1.msra.mxu0 %v1372
    %1374 = vmatprep.subr.mxu0 0.0
    %v1375 = vand.u32 %v193, 4294901760
    %v1376 = vsub.f32 %v193, %v1375
    %v1377 = vand.u32 %v1376, 4294901760
    %v1378 = vsub.f32 %v1376, %v1377
    %v1379 = vand.u32 %v1378, 4294901760
    %1380 = vmatpush1.msra.mxu0 %v1379
    %1381 = vmatprep.subr.mxu0 0.0
    %1382 = vmatpush1.msra.mxu0 0.0
    %1383 = vmatprep.subr.mxu0 0.0
    %1384 = vmatpush1.msra.mxu0 0.0
    %1385 = vmatprep.subr.mxu0 0.0
    %1386 = vmatpush1.msra.mxu0 0.0
    %1387 = vmatprep.subr.mxu0 0.0
    %1388 = vmatpush1.msra.mxu0 0.0
    %1389 = vmatprep.subr.mxu0 0.0
    %1390 = vmatpush1.msra.mxu0 0.0
    %1391 = vmatprep.subr.mxu0 0.0
    %1392 = vmatpush1.msra.mxu0 0.0
    %1393 = vmatprep.subr.mxu0 0.0
    %1394 = vmatpush1.msra.mxu0 0.0
    %1395 = vmatprep.subr.mxu0 0.0
    %1396 = vmatpush1.msra.mxu0 0.0
    %1397 = vmatprep.subr.mxu0 0.0
    %1398 = vmatpush1.msra.mxu0 0.0
    %1399 = vmatprep.subr.mxu0 0.0
    %1400 = vmatpush1.msra.mxu0 0.0
    %1401 = vmatprep.subr.mxu0 0.0
    %1402 = vmatpush1.msra.mxu0 0.0
    %1403 = vmatprep.subr.mxu0 0.0
    %1404 = vmatpush1.msra.mxu0 0.0
    %1405 = vmatprep.subr.mxu0 0.0
    %1406 = vmatpush1.msra.mxu0 0.0
    %1407 = vmatprep.subr.mxu0 0.0
    %1408 = vmatpush1.msra.mxu0 0.0
    %1409 = vmatprep.subr.mxu0 0.0
    %1410 = vmatpush1.msra.mxu0 0.0
    %1411 = vmatprep.subr.mxu0 0.0
    %1412 = vmatpush1.msra.mxu0 0.0
    %1413 = vmatprep.subr.mxu0 0.0
    %1414 = vmatpush1.msra.mxu0 0.0
    %1415 = vmatprep.subr.mxu0 0.0
    %1416 = vmatpush1.msra.mxu0 0.0
    %1417 = vmatprep.subr.mxu0 0.0
    %1418 = vmatpush1.msra.mxu0 0.0
    %1419 = vmatprep.subr.mxu0 0.0
    %1420 = vmatpush1.msra.mxu0 0.0
    %1421 = vmatprep.subr.mxu0 0.0
    %1422 = vmatpush1.msra.mxu0 0.0
    %1423 = vmatprep.subr.mxu0 0.0
    %1424 = vmatpush1.msra.mxu0 0.0
    %1425 = vmatprep.subr.mxu0 0.0
    %1426 = vmatpush1.msra.mxu0 0.0
    %1427 = vmatprep.subr.mxu0 0.0
    %1428 = vmatpush1.msra.mxu0 0.0
    %1429 = vmatprep.mubr.f32.mxu0 0.0
    %v1430 = vand.u32 %v1149, 4294901760
    %1431 = vmatmul.mubr.f32.gmra.mrb[0].mxu0 %v1430
    %v1432 = vpop.f32.mrb[0].mxu0
    %v1433 = vadd.f32 %v1252, %v1432
    %v1434 = vpop.f32.mrb[0].mxu0
    %1435 = vmatprep.mubr.f32.mxu0 0.0
    %v1436 = vand.u32 %v1152, 4294901760
    %1437 = vmatmul.mubr.f32.gmra.mrb[0].mxu0 %v1436
    %v1438 = vpop.f32.mrb[0].mxu0
    %v1439 = vadd.f32 %v1262, %v1438
    %v1440 = vpop.f32.mrb[0].mxu0
    %1441 = vmatprep.mubr.f32.mxu0 0.0
    %v1442 = vand.u32 %v1155, 4294901760
    %1443 = vmatmul.mubr.f32.gmra.mrb[0].mxu0 %v1442
    %v1444 = vpop.f32.mrb[0].mxu0
    %v1445 = vadd.f32 %v1272, %v1444
    %v1446 = vpop.f32.mrb[0].mxu0
    %1447 = vmatprep.mubr.f32.mxu0 0.0
    %v1448 = vand.u32 %v1158, 4294901760
    %1449 = vmatmul.mubr.f32.gmra.mrb[0].mxu0 %v1448
    %v1450 = vpop.f32.mrb[0].mxu0
    %v1451 = vadd.f32 %v1282, %v1450
    %v1452 = vpop.f32.mrb[0].mxu0
    %1453 = vmatprep.mubr.f32.mxu0 0.0
    %v1454 = vand.u32 %v1161, 4294901760
    %1455 = vmatmul.mubr.f32.gmra.mrb[0].mxu0 %v1454
    %v1456 = vpop.f32.mrb[0].mxu0
    %v1457 = vadd.f32 %v1292, %v1456
    %v1458 = vpop.f32.mrb[0].mxu0
    %1459 = vmatprep.mubr.f32.mxu0 0.0
    %v1460 = vand.u32 %v1164, 4294901760
    %1461 = vmatmul.mubr.f32.gmra.mrb[0].mxu0 %v1460
    %v1462 = vpop.f32.mrb[0].mxu0
    %v1463 = vadd.f32 %v1302, %v1462
    %v1464 = vpop.f32.mrb[0].mxu0
    %1465 = vmatprep.mubr.f32.mxu0 0.0
    %v1466 = vand.u32 %v1167, 4294901760
    %1467 = vmatmul.mubr.f32.gmra.mrb[0].mxu0 %v1466
    %v1468 = vpop.f32.mrb[0].mxu0
    %v1469 = vadd.f32 %v1312, %v1468
    %v1470 = vpop.f32.mrb[0].mxu0
    %1471 = vmatprep.mubr.f32.mxu0 0.0
    %v1472 = vand.u32 %v1170, 4294901760
    %1473 = vmatmul.mubr.f32.gmra.mrb[0].mxu0 %v1472
    %v1474 = vpop.f32.mrb[0].mxu0
    %v1475 = vadd.f32 %v1322, %v1474
    %v1476 = vpop.f32.mrb[0].mxu0
    %1477 = vdwg.mxu0
    %1478 = vmatprep.subr.mxu0 0.0
    %v1479 = vand.u32 %v186, 4294901760
    %v1480 = vsub.f32 %v186, %v1479
    %1481 = vmatpush1.msra.mxu0 %v1480
    %1482 = vmatprep.subr.mxu0 0.0
    %v1483 = vand.u32 %v187, 4294901760
    %v1484 = vsub.f32 %v187, %v1483
    %1485 = vmatpush1.msra.mxu0 %v1484
    %1486 = vmatprep.subr.mxu0 0.0
    %v1487 = vand.u32 %v188, 4294901760
    %v1488 = vsub.f32 %v188, %v1487
    %1489 = vmatpush1.msra.mxu0 %v1488
    %1490 = vmatprep.subr.mxu0 0.0
    %v1491 = vand.u32 %v189, 4294901760
    %v1492 = vsub.f32 %v189, %v1491
    %1493 = vmatpush1.msra.mxu0 %v1492
    %1494 = vmatprep.subr.mxu0 0.0
    %v1495 = vand.u32 %v190, 4294901760
    %v1496 = vsub.f32 %v190, %v1495
    %1497 = vmatpush1.msra.mxu0 %v1496
    %1498 = vmatprep.subr.mxu0 0.0
    %v1499 = vand.u32 %v191, 4294901760
    %v1500 = vsub.f32 %v191, %v1499
    %1501 = vmatpush1.msra.mxu0 %v1500
    %1502 = vmatprep.subr.mxu0 0.0
    %v1503 = vand.u32 %v192, 4294901760
    %v1504 = vsub.f32 %v192, %v1503
    %1505 = vmatpush1.msra.mxu0 %v1504
    %1506 = vmatprep.subr.mxu0 0.0
    %v1507 = vand.u32 %v193, 4294901760
    %v1508 = vsub.f32 %v193, %v1507
    %1509 = vmatpush1.msra.mxu0 %v1508
    %1510 = vmatprep.subr.mxu0 0.0
    %1511 = vmatpush1.msra.mxu0 0.0
    %1512 = vmatprep.subr.mxu0 0.0
    %1513 = vmatpush1.msra.mxu0 0.0
    %1514 = vmatprep.subr.mxu0 0.0
    %1515 = vmatpush1.msra.mxu0 0.0
    %1516 = vmatprep.subr.mxu0 0.0
    %1517 = vmatpush1.msra.mxu0 0.0
    %1518 = vmatprep.subr.mxu0 0.0
    %1519 = vmatpush1.msra.mxu0 0.0
    %1520 = vmatprep.subr.mxu0 0.0
    %1521 = vmatpush1.msra.mxu0 0.0
    %1522 = vmatprep.subr.mxu0 0.0
    %1523 = vmatpush1.msra.mxu0 0.0
    %1524 = vmatprep.subr.mxu0 0.0
    %1525 = vmatpush1.msra.mxu0 0.0
    %1526 = vmatprep.subr.mxu0 0.0
    %1527 = vmatpush1.msra.mxu0 0.0
    %1528 = vmatprep.subr.mxu0 0.0
    %1529 = vmatpush1.msra.mxu0 0.0
    %1530 = vmatprep.subr.mxu0 0.0
    %1531 = vmatpush1.msra.mxu0 0.0
    %1532 = vmatprep.subr.mxu0 0.0
    %1533 = vmatpush1.msra.mxu0 0.0
    %1534 = vmatprep.subr.mxu0 0.0
    %1535 = vmatpush1.msra.mxu0 0.0
    %1536 = vmatprep.subr.mxu0 0.0
    %1537 = vmatpush1.msra.mxu0 0.0
    %1538 = vmatprep.subr.mxu0 0.0
    %1539 = vmatpush1.msra.mxu0 0.0
    %1540 = vmatprep.subr.mxu0 0.0
    %1541 = vmatpush1.msra.mxu0 0.0
    %1542 = vmatprep.subr.mxu0 0.0
    %1543 = vmatpush1.msra.mxu0 0.0
    %1544 = vmatprep.subr.mxu0 0.0
    %1545 = vmatpush1.msra.mxu0 0.0
    %1546 = vmatprep.subr.mxu0 0.0
    %1547 = vmatpush1.msra.mxu0 0.0
    %1548 = vmatprep.subr.mxu0 0.0
    %1549 = vmatpush1.msra.mxu0 0.0
    %1550 = vmatprep.subr.mxu0 0.0
    %1551 = vmatpush1.msra.mxu0 0.0
    %1552 = vmatprep.subr.mxu0 0.0
    %1553 = vmatpush1.msra.mxu0 0.0
    %1554 = vmatprep.subr.mxu0 0.0
    %1555 = vmatpush1.msra.mxu0 0.0
    %1556 = vmatprep.subr.mxu0 0.0
    %1557 = vmatpush1.msra.mxu0 0.0
    %1558 = vmatprep.mubr.f32.mxu0 0.0
    %v1559 = vand.u32 %v1149, 4294901760
    %v1560 = vsub.f32 %v1149, %v1559
    %1561 = vmatmul.mubr.f32.gmra.mrb[0].mxu0 %v1560
    %v1562 = vpop.f32.mrb[0].mxu0
    %v1563 = vadd.f32 %v1433, %v1562
    %v1564 = vpop.f32.mrb[0].mxu0
    %1565 = vmatprep.mubr.f32.mxu0 0.0
    %v1566 = vand.u32 %v1152, 4294901760
    %v1567 = vsub.f32 %v1152, %v1566
    %1568 = vmatmul.mubr.f32.gmra.mrb[0].mxu0 %v1567
    %v1569 = vpop.f32.mrb[0].mxu0
    %v1570 = vadd.f32 %v1439, %v1569
    %v1571 = vpop.f32.mrb[0].mxu0
    %1572 = vmatprep.mubr.f32.mxu0 0.0
    %v1573 = vand.u32 %v1155, 4294901760
    %v1574 = vsub.f32 %v1155, %v1573
    %1575 = vmatmul.mubr.f32.gmra.mrb[0].mxu0 %v1574
    %v1576 = vpop.f32.mrb[0].mxu0
    %v1577 = vadd.f32 %v1445, %v1576
    %v1578 = vpop.f32.mrb[0].mxu0
    %1579 = vmatprep.mubr.f32.mxu0 0.0
    %v1580 = vand.u32 %v1158, 4294901760
    %v1581 = vsub.f32 %v1158, %v1580
    %1582 = vmatmul.mubr.f32.gmra.mrb[0].mxu0 %v1581
    %v1583 = vpop.f32.mrb[0].mxu0
    %v1584 = vadd.f32 %v1451, %v1583
    %v1585 = vpop.f32.mrb[0].mxu0
    %1586 = vmatprep.mubr.f32.mxu0 0.0
    %v1587 = vand.u32 %v1161, 4294901760
    %v1588 = vsub.f32 %v1161, %v1587
    %1589 = vmatmul.mubr.f32.gmra.mrb[0].mxu0 %v1588
    %v1590 = vpop.f32.mrb[0].mxu0
    %v1591 = vadd.f32 %v1457, %v1590
    %v1592 = vpop.f32.mrb[0].mxu0
    %1593 = vmatprep.mubr.f32.mxu0 0.0
    %v1594 = vand.u32 %v1164, 4294901760
    %v1595 = vsub.f32 %v1164, %v1594
    %1596 = vmatmul.mubr.f32.gmra.mrb[0].mxu0 %v1595
    %v1597 = vpop.f32.mrb[0].mxu0
    %v1598 = vadd.f32 %v1463, %v1597
    %v1599 = vpop.f32.mrb[0].mxu0
    %1600 = vmatprep.mubr.f32.mxu0 0.0
    %v1601 = vand.u32 %v1167, 4294901760
    %v1602 = vsub.f32 %v1167, %v1601
    %1603 = vmatmul.mubr.f32.gmra.mrb[0].mxu0 %v1602
    %v1604 = vpop.f32.mrb[0].mxu0
    %v1605 = vadd.f32 %v1469, %v1604
    %v1606 = vpop.f32.mrb[0].mxu0
    %1607 = vmatprep.mubr.f32.mxu0 0.0
    %v1608 = vand.u32 %v1170, 4294901760
    %v1609 = vsub.f32 %v1170, %v1608
    %1610 = vmatmul.mubr.f32.gmra.mrb[0].mxu0 %v1609
    %v1611 = vpop.f32.mrb[0].mxu0
    %v1612 = vadd.f32 %v1475, %v1611
    %v1613 = vpop.f32.mrb[0].mxu0
    %1614 = vdwg.mxu0
    %1615 = vmatprep.subr.mxu0 0.0
    %v1616 = vand.u32 %v186, 4294901760
    %1617 = vmatpush1.msra.mxu0 %v1616
    %1618 = vmatprep.subr.mxu0 0.0
    %v1619 = vand.u32 %v187, 4294901760
    %1620 = vmatpush1.msra.mxu0 %v1619
    %1621 = vmatprep.subr.mxu0 0.0
    %v1622 = vand.u32 %v188, 4294901760
    %1623 = vmatpush1.msra.mxu0 %v1622
    %1624 = vmatprep.subr.mxu0 0.0
    %v1625 = vand.u32 %v189, 4294901760
    %1626 = vmatpush1.msra.mxu0 %v1625
    %1627 = vmatprep.subr.mxu0 0.0
    %v1628 = vand.u32 %v190, 4294901760
    %1629 = vmatpush1.msra.mxu0 %v1628
    %1630 = vmatprep.subr.mxu0 0.0
    %v1631 = vand.u32 %v191, 4294901760
    %1632 = vmatpush1.msra.mxu0 %v1631
    %1633 = vmatprep.subr.mxu0 0.0
    %v1634 = vand.u32 %v192, 4294901760
    %1635 = vmatpush1.msra.mxu0 %v1634
    %1636 = vmatprep.subr.mxu0 0.0
    %v1637 = vand.u32 %v193, 4294901760
    %1638 = vmatpush1.msra.mxu0 %v1637
    %1639 = vmatprep.subr.mxu0 0.0
    %1640 = vmatpush1.msra.mxu0 0.0
    %1641 = vmatprep.subr.mxu0 0.0
    %1642 = vmatpush1.msra.mxu0 0.0
    %1643 = vmatprep.subr.mxu0 0.0
    %1644 = vmatpush1.msra.mxu0 0.0
    %1645 = vmatprep.subr.mxu0 0.0
    %1646 = vmatpush1.msra.mxu0 0.0
    %1647 = vmatprep.subr.mxu0 0.0
    %1648 = vmatpush1.msra.mxu0 0.0
    %1649 = vmatprep.subr.mxu0 0.0
    %1650 = vmatpush1.msra.mxu0 0.0
    %1651 = vmatprep.subr.mxu0 0.0
    %1652 = vmatpush1.msra.mxu0 0.0
    %1653 = vmatprep.subr.mxu0 0.0
    %1654 = vmatpush1.msra.mxu0 0.0
    %1655 = vmatprep.subr.mxu0 0.0
    %1656 = vmatpush1.msra.mxu0 0.0
    %1657 = vmatprep.subr.mxu0 0.0
    %1658 = vmatpush1.msra.mxu0 0.0
    %1659 = vmatprep.subr.mxu0 0.0
    %1660 = vmatpush1.msra.mxu0 0.0
    %1661 = vmatprep.subr.mxu0 0.0
    %1662 = vmatpush1.msra.mxu0 0.0
    %1663 = vmatprep.subr.mxu0 0.0
    %1664 = vmatpush1.msra.mxu0 0.0
    %1665 = vmatprep.subr.mxu0 0.0
    %1666 = vmatpush1.msra.mxu0 0.0
    %1667 = vmatprep.subr.mxu0 0.0
    %1668 = vmatpush1.msra.mxu0 0.0
    %1669 = vmatprep.subr.mxu0 0.0
    %1670 = vmatpush1.msra.mxu0 0.0
    %1671 = vmatprep.subr.mxu0 0.0
    %1672 = vmatpush1.msra.mxu0 0.0
    %1673 = vmatprep.subr.mxu0 0.0
    %1674 = vmatpush1.msra.mxu0 0.0
    %1675 = vmatprep.subr.mxu0 0.0
    %1676 = vmatpush1.msra.mxu0 0.0
    %1677 = vmatprep.subr.mxu0 0.0
    %1678 = vmatpush1.msra.mxu0 0.0
    %1679 = vmatprep.subr.mxu0 0.0
    %1680 = vmatpush1.msra.mxu0 0.0
    %1681 = vmatprep.subr.mxu0 0.0
    %1682 = vmatpush1.msra.mxu0 0.0
    %1683 = vmatprep.subr.mxu0 0.0
    %1684 = vmatpush1.msra.mxu0 0.0
    %1685 = vmatprep.subr.mxu0 0.0
    %1686 = vmatpush1.msra.mxu0 0.0
    %1687 = vmatprep.mubr.f32.mxu0 0.0
    %v1688 = vand.u32 %v1149, 4294901760
    %v1689 = vsub.f32 %v1149, %v1688
    %v1690 = vand.u32 %v1689, 4294901760
    %1691 = vmatmul.mubr.f32.gmra.mrb[0].mxu0 %v1690
    %v1692 = vpop.f32.mrb[0].mxu0
    %v1693 = vadd.f32 %v1563, %v1692
    %v1694 = vpop.f32.mrb[0].mxu0
    %1695 = vmatprep.mubr.f32.mxu0 0.0
    %v1696 = vand.u32 %v1152, 4294901760
    %v1697 = vsub.f32 %v1152, %v1696
    %v1698 = vand.u32 %v1697, 4294901760
    %1699 = vmatmul.mubr.f32.gmra.mrb[0].mxu0 %v1698
    %v1700 = vpop.f32.mrb[0].mxu0
    %v1701 = vadd.f32 %v1570, %v1700
    %v1702 = vpop.f32.mrb[0].mxu0
    %1703 = vmatprep.mubr.f32.mxu0 0.0
    %v1704 = vand.u32 %v1155, 4294901760
    %v1705 = vsub.f32 %v1155, %v1704
    %v1706 = vand.u32 %v1705, 4294901760
    %1707 = vmatmul.mubr.f32.gmra.mrb[0].mxu0 %v1706
    %v1708 = vpop.f32.mrb[0].mxu0
    %v1709 = vadd.f32 %v1577, %v1708
    %v1710 = vpop.f32.mrb[0].mxu0
    %1711 = vmatprep.mubr.f32.mxu0 0.0
    %v1712 = vand.u32 %v1158, 4294901760
    %v1713 = vsub.f32 %v1158, %v1712
    %v1714 = vand.u32 %v1713, 4294901760
    %1715 = vmatmul.mubr.f32.gmra.mrb[0].mxu0 %v1714
    %v1716 = vpop.f32.mrb[0].mxu0
    %v1717 = vadd.f32 %v1584, %v1716
    %v1718 = vpop.f32.mrb[0].mxu0
    %1719 = vmatprep.mubr.f32.mxu0 0.0
    %v1720 = vand.u32 %v1161, 4294901760
    %v1721 = vsub.f32 %v1161, %v1720
    %v1722 = vand.u32 %v1721, 4294901760
    %1723 = vmatmul.mubr.f32.gmra.mrb[0].mxu0 %v1722
    %v1724 = vpop.f32.mrb[0].mxu0
    %v1725 = vadd.f32 %v1591, %v1724
    %v1726 = vpop.f32.mrb[0].mxu0
    %1727 = vmatprep.mubr.f32.mxu0 0.0
    %v1728 = vand.u32 %v1164, 4294901760
    %v1729 = vsub.f32 %v1164, %v1728
    %v1730 = vand.u32 %v1729, 4294901760
    %1731 = vmatmul.mubr.f32.gmra.mrb[0].mxu0 %v1730
    %v1732 = vpop.f32.mrb[0].mxu0
    %v1733 = vadd.f32 %v1598, %v1732
    %v1734 = vpop.f32.mrb[0].mxu0
    %1735 = vmatprep.mubr.f32.mxu0 0.0
    %v1736 = vand.u32 %v1167, 4294901760
    %v1737 = vsub.f32 %v1167, %v1736
    %v1738 = vand.u32 %v1737, 4294901760
    %1739 = vmatmul.mubr.f32.gmra.mrb[0].mxu0 %v1738
    %v1740 = vpop.f32.mrb[0].mxu0
    %v1741 = vadd.f32 %v1605, %v1740
    %v1742 = vpop.f32.mrb[0].mxu0
    %1743 = vmatprep.mubr.f32.mxu0 0.0
    %v1744 = vand.u32 %v1170, 4294901760
    %v1745 = vsub.f32 %v1170, %v1744
    %v1746 = vand.u32 %v1745, 4294901760
    %1747 = vmatmul.mubr.f32.gmra.mrb[0].mxu0 %v1746
    %v1748 = vpop.f32.mrb[0].mxu0
    %v1749 = vadd.f32 %v1612, %v1748
    %v1750 = vpop.f32.mrb[0].mxu0
    %1751 = vdwg.mxu0
    %1752 = vmatprep.subr.mxu0 0.0
    %v1753 = vand.u32 %v186, 4294901760
    %v1754 = vsub.f32 %v186, %v1753
    %v1755 = vand.u32 %v1754, 4294901760
    %1756 = vmatpush1.msra.mxu0 %v1755
    %1757 = vmatprep.subr.mxu0 0.0
    %v1758 = vand.u32 %v187, 4294901760
    %v1759 = vsub.f32 %v187, %v1758
    %v1760 = vand.u32 %v1759, 4294901760
    %1761 = vmatpush1.msra.mxu0 %v1760
    %1762 = vmatprep.subr.mxu0 0.0
    %v1763 = vand.u32 %v188, 4294901760
    %v1764 = vsub.f32 %v188, %v1763
    %v1765 = vand.u32 %v1764, 4294901760
    %1766 = vmatpush1.msra.mxu0 %v1765
    %1767 = vmatprep.subr.mxu0 0.0
    %v1768 = vand.u32 %v189, 4294901760
    %v1769 = vsub.f32 %v189, %v1768
    %v1770 = vand.u32 %v1769, 4294901760
    %1771 = vmatpush1.msra.mxu0 %v1770
    %1772 = vmatprep.subr.mxu0 0.0
    %v1773 = vand.u32 %v190, 4294901760
    %v1774 = vsub.f32 %v190, %v1773
    %v1775 = vand.u32 %v1774, 4294901760
    %1776 = vmatpush1.msra.mxu0 %v1775
    %1777 = vmatprep.subr.mxu0 0.0
    %v1778 = vand.u32 %v191, 4294901760
    %v1779 = vsub.f32 %v191, %v1778
    %v1780 = vand.u32 %v1779, 4294901760
    %1781 = vmatpush1.msra.mxu0 %v1780
    %1782 = vmatprep.subr.mxu0 0.0
    %v1783 = vand.u32 %v192, 4294901760
    %v1784 = vsub.f32 %v192, %v1783
    %v1785 = vand.u32 %v1784, 4294901760
    %1786 = vmatpush1.msra.mxu0 %v1785
    %1787 = vmatprep.subr.mxu0 0.0
    %v1788 = vand.u32 %v193, 4294901760
    %v1789 = vsub.f32 %v193, %v1788
    %v1790 = vand.u32 %v1789, 4294901760
    %1791 = vmatpush1.msra.mxu0 %v1790
    %1792 = vmatprep.subr.mxu0 0.0
    %1793 = vmatpush1.msra.mxu0 0.0
    %1794 = vmatprep.subr.mxu0 0.0
    %1795 = vmatpush1.msra.mxu0 0.0
    %1796 = vmatprep.subr.mxu0 0.0
    %1797 = vmatpush1.msra.mxu0 0.0
    %1798 = vmatprep.subr.mxu0 0.0
    %1799 = vmatpush1.msra.mxu0 0.0
    %1800 = vmatprep.subr.mxu0 0.0
    %1801 = vmatpush1.msra.mxu0 0.0
    %1802 = vmatprep.subr.mxu0 0.0
    %1803 = vmatpush1.msra.mxu0 0.0
    %1804 = vmatprep.subr.mxu0 0.0
    %1805 = vmatpush1.msra.mxu0 0.0
    %1806 = vmatprep.subr.mxu0 0.0
    %1807 = vmatpush1.msra.mxu0 0.0
    %1808 = vmatprep.subr.mxu0 0.0
    %1809 = vmatpush1.msra.mxu0 0.0
    %1810 = vmatprep.subr.mxu0 0.0
    %1811 = vmatpush1.msra.mxu0 0.0
    %1812 = vmatprep.subr.mxu0 0.0
    %1813 = vmatpush1.msra.mxu0 0.0
    %1814 = vmatprep.subr.mxu0 0.0
    %1815 = vmatpush1.msra.mxu0 0.0
    %1816 = vmatprep.subr.mxu0 0.0
    %1817 = vmatpush1.msra.mxu0 0.0
    %1818 = vmatprep.subr.mxu0 0.0
    %1819 = vmatpush1.msra.mxu0 0.0
    %1820 = vmatprep.subr.mxu0 0.0
    %1821 = vmatpush1.msra.mxu0 0.0
    %1822 = vmatprep.subr.mxu0 0.0
    %1823 = vmatpush1.msra.mxu0 0.0
    %1824 = vmatprep.subr.mxu0 0.0
    %1825 = vmatpush1.msra.mxu0 0.0
    %1826 = vmatprep.subr.mxu0 0.0
    %1827 = vmatpush1.msra.mxu0 0.0
    %1828 = vmatprep.subr.mxu0 0.0
    %1829 = vmatpush1.msra.mxu0 0.0
    %1830 = vmatprep.subr.mxu0 0.0
    %1831 = vmatpush1.msra.mxu0 0.0
    %1832 = vmatprep.subr.mxu0 0.0
    %1833 = vmatpush1.msra.mxu0 0.0
    %1834 = vmatprep.subr.mxu0 0.0
    %1835 = vmatpush1.msra.mxu0 0.0
    %1836 = vmatprep.subr.mxu0 0.0
    %1837 = vmatpush1.msra.mxu0 0.0
    %1838 = vmatprep.subr.mxu0 0.0
    %1839 = vmatpush1.msra.mxu0 0.0
    %1840 = vmatprep.mubr.f32.mxu0 0.0
    %v1841 = vand.u32 %v1149, 4294901760
    %1842 = vmatmul.mubr.f32.gmra.mrb[0].mxu0 %v1841
    %v1843 = vpop.f32.mrb[0].mxu0
    %v1844 = vadd.f32 %v1693, %v1843
    %v1845 = vpop.f32.mrb[0].mxu0
    %1846 = vmatprep.mubr.f32.mxu0 0.0
    %v1847 = vand.u32 %v1152, 4294901760
    %1848 = vmatmul.mubr.f32.gmra.mrb[0].mxu0 %v1847
    %v1849 = vpop.f32.mrb[0].mxu0
    %v1850 = vadd.f32 %v1701, %v1849
    %v1851 = vpop.f32.mrb[0].mxu0
    %1852 = vmatprep.mubr.f32.mxu0 0.0
    %v1853 = vand.u32 %v1155, 4294901760
    %1854 = vmatmul.mubr.f32.gmra.mrb[0].mxu0 %v1853
    %v1855 = vpop.f32.mrb[0].mxu0
    %v1856 = vadd.f32 %v1709, %v1855
    %v1857 = vpop.f32.mrb[0].mxu0
    %1858 = vmatprep.mubr.f32.mxu0 0.0
    %v1859 = vand.u32 %v1158, 4294901760
    %1860 = vmatmul.mubr.f32.gmra.mrb[0].mxu0 %v1859
    %v1861 = vpop.f32.mrb[0].mxu0
    %v1862 = vadd.f32 %v1717, %v1861
    %v1863 = vpop.f32.mrb[0].mxu0
    %1864 = vmatprep.mubr.f32.mxu0 0.0
    %v1865 = vand.u32 %v1161, 4294901760
    %1866 = vmatmul.mubr.f32.gmra.mrb[0].mxu0 %v1865
    %v1867 = vpop.f32.mrb[0].mxu0
    %v1868 = vadd.f32 %v1725, %v1867
    %v1869 = vpop.f32.mrb[0].mxu0
    %1870 = vmatprep.mubr.f32.mxu0 0.0
    %v1871 = vand.u32 %v1164, 4294901760
    %1872 = vmatmul.mubr.f32.gmra.mrb[0].mxu0 %v1871
    %v1873 = vpop.f32.mrb[0].mxu0
    %v1874 = vadd.f32 %v1733, %v1873
    %v1875 = vpop.f32.mrb[0].mxu0
    %1876 = vmatprep.mubr.f32.mxu0 0.0
    %v1877 = vand.u32 %v1167, 4294901760
    %1878 = vmatmul.mubr.f32.gmra.mrb[0].mxu0 %v1877
    %v1879 = vpop.f32.mrb[0].mxu0
    %v1880 = vadd.f32 %v1741, %v1879
    %v1881 = vpop.f32.mrb[0].mxu0
    %1882 = vmatprep.mubr.f32.mxu0 0.0
    %v1883 = vand.u32 %v1170, 4294901760
    %1884 = vmatmul.mubr.f32.gmra.mrb[0].mxu0 %v1883
    %v1885 = vpop.f32.mrb[0].mxu0
    %v1886 = vadd.f32 %v1749, %v1885
    %v1887 = vpop.f32.mrb[0].mxu0
    %1888 = vdwg.mxu0
    %1889 = vmatprep.subr.mxu0 0.0
    %v1890 = vand.u32 %v186, 4294901760
    %1891 = vmatpush1.msra.mxu0 %v1890
    %1892 = vmatprep.subr.mxu0 0.0
    %v1893 = vand.u32 %v187, 4294901760
    %1894 = vmatpush1.msra.mxu0 %v1893
    %1895 = vmatprep.subr.mxu0 0.0
    %v1896 = vand.u32 %v188, 4294901760
    %1897 = vmatpush1.msra.mxu0 %v1896
    %1898 = vmatprep.subr.mxu0 0.0
    %v1899 = vand.u32 %v189, 4294901760
    %1900 = vmatpush1.msra.mxu0 %v1899
    %1901 = vmatprep.subr.mxu0 0.0
    %v1902 = vand.u32 %v190, 4294901760
    %1903 = vmatpush1.msra.mxu0 %v1902
    %1904 = vmatprep.subr.mxu0 0.0
    %v1905 = vand.u32 %v191, 4294901760
    %1906 = vmatpush1.msra.mxu0 %v1905
    %1907 = vmatprep.subr.mxu0 0.0
    %v1908 = vand.u32 %v192, 4294901760
    %1909 = vmatpush1.msra.mxu0 %v1908
    %1910 = vmatprep.subr.mxu0 0.0
    %v1911 = vand.u32 %v193, 4294901760
    %1912 = vmatpush1.msra.mxu0 %v1911
    %1913 = vmatprep.subr.mxu0 0.0
    %1914 = vmatpush1.msra.mxu0 0.0
    %1915 = vmatprep.subr.mxu0 0.0
    %1916 = vmatpush1.msra.mxu0 0.0
    %1917 = vmatprep.subr.mxu0 0.0
    %1918 = vmatpush1.msra.mxu0 0.0
    %1919 = vmatprep.subr.mxu0 0.0
    %1920 = vmatpush1.msra.mxu0 0.0
    %1921 = vmatprep.subr.mxu0 0.0
    %1922 = vmatpush1.msra.mxu0 0.0
    %1923 = vmatprep.subr.mxu0 0.0
    %1924 = vmatpush1.msra.mxu0 0.0
    %1925 = vmatprep.subr.mxu0 0.0
    %1926 = vmatpush1.msra.mxu0 0.0
    %1927 = vmatprep.subr.mxu0 0.0
    %1928 = vmatpush1.msra.mxu0 0.0
    %1929 = vmatprep.subr.mxu0 0.0
    %1930 = vmatpush1.msra.mxu0 0.0
    %1931 = vmatprep.subr.mxu0 0.0
    %1932 = vmatpush1.msra.mxu0 0.0
    %1933 = vmatprep.subr.mxu0 0.0
    %1934 = vmatpush1.msra.mxu0 0.0
    %1935 = vmatprep.subr.mxu0 0.0
    %1936 = vmatpush1.msra.mxu0 0.0
    %1937 = vmatprep.subr.mxu0 0.0
    %1938 = vmatpush1.msra.mxu0 0.0
    %1939 = vmatprep.subr.mxu0 0.0
    %1940 = vmatpush1.msra.mxu0 0.0
    %1941 = vmatprep.subr.mxu0 0.0
    %1942 = vmatpush1.msra.mxu0 0.0
    %1943 = vmatprep.subr.mxu0 0.0
    %1944 = vmatpush1.msra.mxu0 0.0
    %1945 = vmatprep.subr.mxu0 0.0
    %1946 = vmatpush1.msra.mxu0 0.0
    %1947 = vmatprep.subr.mxu0 0.0
    %1948 = vmatpush1.msra.mxu0 0.0
    %1949 = vmatprep.subr.mxu0 0.0
    %1950 = vmatpush1.msra.mxu0 0.0
    %1951 = vmatprep.subr.mxu0 0.0
    %1952 = vmatpush1.msra.mxu0 0.0
    %1953 = vmatprep.subr.mxu0 0.0
    %1954 = vmatpush1.msra.mxu0 0.0
    %1955 = vmatprep.subr.mxu0 0.0
    %1956 = vmatpush1.msra.mxu0 0.0
    %1957 = vmatprep.subr.mxu0 0.0
    %1958 = vmatpush1.msra.mxu0 0.0
    %1959 = vmatprep.subr.mxu0 0.0
    %1960 = vmatpush1.msra.mxu0 0.0
    %1961 = vmatprep.mubr.f32.mxu0 0.0
    %v1962 = vand.u32 %v1149, 4294901760
    %1963 = vmatmul.mubr.f32.gmra.mrb[0].mxu0 %v1962
    %v1964 = vpop.f32.mrb[0].mxu0
    %v1965 = vadd.f32 %v1844, %v1964
    %v1966 = vpop.f32.mrb[0].mxu0
    %1967 = vmatprep.mubr.f32.mxu0 0.0
    %v1968 = vand.u32 %v1152, 4294901760
    %1969 = vmatmul.mubr.f32.gmra.mrb[0].mxu0 %v1968
    %v1970 = vpop.f32.mrb[0].mxu0
    %v1971 = vadd.f32 %v1850, %v1970
    %v1972 = vpop.f32.mrb[0].mxu0
    %1973 = vmatprep.mubr.f32.mxu0 0.0
    %v1974 = vand.u32 %v1155, 4294901760
    %1975 = vmatmul.mubr.f32.gmra.mrb[0].mxu0 %v1974
    %v1976 = vpop.f32.mrb[0].mxu0
    %v1977 = vadd.f32 %v1856, %v1976
    %v1978 = vpop.f32.mrb[0].mxu0
    %1979 = vmatprep.mubr.f32.mxu0 0.0
    %v1980 = vand.u32 %v1158, 4294901760
    %1981 = vmatmul.mubr.f32.gmra.mrb[0].mxu0 %v1980
    %v1982 = vpop.f32.mrb[0].mxu0
    %v1983 = vadd.f32 %v1862, %v1982
    %v1984 = vpop.f32.mrb[0].mxu0
    %1985 = vmatprep.mubr.f32.mxu0 0.0
    %v1986 = vand.u32 %v1161, 4294901760
    %1987 = vmatmul.mubr.f32.gmra.mrb[0].mxu0 %v1986
    %v1988 = vpop.f32.mrb[0].mxu0
    %v1989 = vadd.f32 %v1868, %v1988
    %v1990 = vpop.f32.mrb[0].mxu0
    %1991 = vmatprep.mubr.f32.mxu0 0.0
    %v1992 = vand.u32 %v1164, 4294901760
    %1993 = vmatmul.mubr.f32.gmra.mrb[0].mxu0 %v1992
    %v1994 = vpop.f32.mrb[0].mxu0
    %v1995 = vadd.f32 %v1874, %v1994
    %v1996 = vpop.f32.mrb[0].mxu0
    %1997 = vmatprep.mubr.f32.mxu0 0.0
    %v1998 = vand.u32 %v1167, 4294901760
    %1999 = vmatmul.mubr.f32.gmra.mrb[0].mxu0 %v1998
    %v2000 = vpop.f32.mrb[0].mxu0
    %v2001 = vadd.f32 %v1880, %v2000
    %v2002 = vpop.f32.mrb[0].mxu0
    %2003 = vmatprep.mubr.f32.mxu0 0.0
    %v2004 = vand.u32 %v1170, 4294901760
    %2005 = vmatmul.mubr.f32.gmra.mrb[0].mxu0 %v2004
    %v2006 = vpop.f32.mrb[0].mxu0
    %v2007 = vadd.f32 %v1886, %v2006
    %v2008 = vpop.f32.mrb[0].mxu0
    %2009 = vdwg.mxu0
    %v2010 = vstv %s59
    %v2011 = vadd.f32 %v1965, %v2010
    %v2012 = vadd.f32 %v1971, %v2010
    %v2013 = vadd.f32 %v1977, %v2010
    %v2014 = vadd.f32 %v1983, %v2010
    %v2015 = vadd.f32 %v1989, %v2010
    %v2016 = vadd.f32 %v1995, %v2010
    %v2017 = vadd.f32 %v2001, %v2010
    %v2018 = vadd.f32 %v2007, %v2010
    %s2019 = sld [smem:[#allocation3 + $0x100]]
    %v2020 = vstv %s2019
    %v2021 = vmul.f32 %v2020, %v61
    %v2022 = vmul.f32 %v2020, %v62
    %v2023 = vmul.f32 %v2020, %v63
    %v2024 = vmul.f32 %v2020, %v64
    %v2025 = vmul.f32 %v2020, %v65
    %v2026 = vmul.f32 %v2020, %v66
    %v2027 = vmul.f32 %v2020, %v67
    %v2028 = vmul.f32 %v2020, %v68
    %s2029 = sld [smem:[#allocation3 + $0x101]]
    %v2030 = vstv %s2029
    %v2031 = vmul.f32 %v2030, %v80
    %v2032 = vmul.f32 %v2030, %v81
    %v2033 = vmul.f32 %v2030, %v82
    %v2034 = vmul.f32 %v2030, %v83
    %v2035 = vmul.f32 %v2030, %v84
    %v2036 = vmul.f32 %v2030, %v85
    %v2037 = vmul.f32 %v2030, %v86
    %v2038 = vmul.f32 %v2030, %v87
    %v2039 = vadd.f32 %v2021, %v2031
    %v2040 = vadd.f32 %v2022, %v2032
    %v2041 = vadd.f32 %v2023, %v2033
    %v2042 = vadd.f32 %v2024, %v2034
    %v2043 = vadd.f32 %v2025, %v2035
    %v2044 = vadd.f32 %v2026, %v2036
    %v2045 = vadd.f32 %v2027, %v2037
    %v2046 = vadd.f32 %v2028, %v2038
    %s2047 = sld [smem:[#allocation3 + $0x102]]
    %v2048 = vstv %s2047
    %v2049 = vmul.f32 %v2048, %v107
    %v2050 = vmul.f32 %v2048, %v108
    %v2051 = vmul.f32 %v2048, %v109
    %v2052 = vmul.f32 %v2048, %v110
    %v2053 = vmul.f32 %v2048, %v111
    %v2054 = vmul.f32 %v2048, %v112
    %v2055 = vmul.f32 %v2048, %v113
    %v2056 = vmul.f32 %v2048, %v114
    %v2057 = vadd.f32 %v2039, %v2049
    %v2058 = vadd.f32 %v2040, %v2050
    %v2059 = vadd.f32 %v2041, %v2051
    %v2060 = vadd.f32 %v2042, %v2052
    %v2061 = vadd.f32 %v2043, %v2053
    %v2062 = vadd.f32 %v2044, %v2054
    %v2063 = vadd.f32 %v2045, %v2055
    %v2064 = vadd.f32 %v2046, %v2056
    %s2065 = sld [smem:[#allocation3 + $0x103]]
    %v2066 = vstv %s2065
    %v2067 = vmul.f32 %v2066, %v134
    %v2068 = vmul.f32 %v2066, %v135
    %v2069 = vmul.f32 %v2066, %v136
    %v2070 = vmul.f32 %v2066, %v137
    %v2071 = vmul.f32 %v2066, %v138
    %v2072 = vmul.f32 %v2066, %v139
    %v2073 = vmul.f32 %v2066, %v140
    %v2074 = vmul.f32 %v2066, %v141
    %v2075 = vadd.f32 %v2057, %v2067
    %v2076 = vadd.f32 %v2058, %v2068
    %v2077 = vadd.f32 %v2059, %v2069
    %v2078 = vadd.f32 %v2060, %v2070
    %v2079 = vadd.f32 %v2061, %v2071
    %v2080 = vadd.f32 %v2062, %v2072
    %v2081 = vadd.f32 %v2063, %v2073
    %v2082 = vadd.f32 %v2064, %v2074
    %s2083 = sld [smem:[#allocation3 + $0x104]]
    %v2084 = vstv %s2083
    %v2085 = vmul.f32 %v2084, %v161
    %v2086 = vmul.f32 %v2084, %v162
    %v2087 = vmul.f32 %v2084, %v163
    %v2088 = vmul.f32 %v2084, %v164
    %v2089 = vmul.f32 %v2084, %v165
    %v2090 = vmul.f32 %v2084, %v166
    %v2091 = vmul.f32 %v2084, %v167
    %v2092 = vmul.f32 %v2084, %v168
    %v2093 = vadd.f32 %v2075, %v2085
    %v2094 = vadd.f32 %v2076, %v2086
    %v2095 = vadd.f32 %v2077, %v2087
    %v2096 = vadd.f32 %v2078, %v2088
    %v2097 = vadd.f32 %v2079, %v2089
    %v2098 = vadd.f32 %v2080, %v2090
    %v2099 = vadd.f32 %v2081, %v2091
    %v2100 = vadd.f32 %v2082, %v2092
    %s2101 = sld [smem:[#allocation3 + $0x180]]
    %v2102 = vstv %s2101
    %v2103 = vmul.f32 %v2102, %v61
    %v2104 = vmul.f32 %v2102, %v62
    %v2105 = vmul.f32 %v2102, %v63
    %v2106 = vmul.f32 %v2102, %v64
    %v2107 = vmul.f32 %v2102, %v65
    %v2108 = vmul.f32 %v2102, %v66
    %v2109 = vmul.f32 %v2102, %v67
    %v2110 = vmul.f32 %v2102, %v68
    %s2111 = sld [smem:[#allocation3 + $0x181]]
    %v2112 = vstv %s2111
    %v2113 = vmul.f32 %v2112, %v80
    %v2114 = vmul.f32 %v2112, %v81
    %v2115 = vmul.f32 %v2112, %v82
    %v2116 = vmul.f32 %v2112, %v83
    %v2117 = vmul.f32 %v2112, %v84
    %v2118 = vmul.f32 %v2112, %v85
    %v2119 = vmul.f32 %v2112, %v86
    %v2120 = vmul.f32 %v2112, %v87
    %v2121 = vadd.f32 %v2103, %v2113
    %v2122 = vadd.f32 %v2104, %v2114
    %v2123 = vadd.f32 %v2105, %v2115
    %v2124 = vadd.f32 %v2106, %v2116
    %v2125 = vadd.f32 %v2107, %v2117
    %v2126 = vadd.f32 %v2108, %v2118
    %v2127 = vadd.f32 %v2109, %v2119
    %v2128 = vadd.f32 %v2110, %v2120
    %s2129 = sld [smem:[#allocation3 + $0x182]]
    %v2130 = vstv %s2129
    %v2131 = vmul.f32 %v2130, %v107
    %v2132 = vmul.f32 %v2130, %v108
    %v2133 = vmul.f32 %v2130, %v109
    %v2134 = vmul.f32 %v2130, %v110
    %v2135 = vmul.f32 %v2130, %v111
    %v2136 = vmul.f32 %v2130, %v112
    %v2137 = vmul.f32 %v2130, %v113
    %v2138 = vmul.f32 %v2130, %v114
    %v2139 = vadd.f32 %v2121, %v2131
    %v2140 = vadd.f32 %v2122, %v2132
    %v2141 = vadd.f32 %v2123, %v2133
    %v2142 = vadd.f32 %v2124, %v2134
    %v2143 = vadd.f32 %v2125, %v2135
    %v2144 = vadd.f32 %v2126, %v2136
    %v2145 = vadd.f32 %v2127, %v2137
    %v2146 = vadd.f32 %v2128, %v2138
    %s2147 = sld [smem:[#allocation3 + $0x183]]
    %v2148 = vstv %s2147
    %v2149 = vmul.f32 %v2148, %v134
    %v2150 = vmul.f32 %v2148, %v135
    %v2151 = vmul.f32 %v2148, %v136
    %v2152 = vmul.f32 %v2148, %v137
    %v2153 = vmul.f32 %v2148, %v138
    %v2154 = vmul.f32 %v2148, %v139
    %v2155 = vmul.f32 %v2148, %v140
    %v2156 = vmul.f32 %v2148, %v141
    %v2157 = vadd.f32 %v2139, %v2149
    %v2158 = vadd.f32 %v2140, %v2150
    %v2159 = vadd.f32 %v2141, %v2151
    %v2160 = vadd.f32 %v2142, %v2152
    %v2161 = vadd.f32 %v2143, %v2153
    %v2162 = vadd.f32 %v2144, %v2154
    %v2163 = vadd.f32 %v2145, %v2155
    %v2164 = vadd.f32 %v2146, %v2156
    %s2165 = sld [smem:[#allocation3 + $0x184]]
    %v2166 = vstv %s2165
    %v2167 = vmul.f32 %v2166, %v161
    %v2168 = vmul.f32 %v2166, %v162
    %v2169 = vmul.f32 %v2166, %v163
    %v2170 = vmul.f32 %v2166, %v164
    %v2171 = vmul.f32 %v2166, %v165
    %v2172 = vmul.f32 %v2166, %v166
    %v2173 = vmul.f32 %v2166, %v167
    %v2174 = vmul.f32 %v2166, %v168
    %v2175 = vadd.f32 %v2157, %v2167
    %v2176 = vadd.f32 %v2158, %v2168
    %v2177 = vadd.f32 %v2159, %v2169
    %v2178 = vadd.f32 %v2160, %v2170
    %v2179 = vadd.f32 %v2161, %v2171
    %v2180 = vadd.f32 %v2162, %v2172
    %v2181 = vadd.f32 %v2163, %v2173
    %v2182 = vadd.f32 %v2164, %v2174
    %v2184 = vsel %vm285, %v2175, 0
    %v2187 = vsel %vm285, %v2176, 0
    %v2190 = vsel %vm285, %v2177, 0
    %v2193 = vsel %vm285, %v2178, 0
    %v2196 = vsel %vm285, %v2179, 0
    %v2199 = vsel %vm285, %v2180, 0
    %v2202 = vsel %vm285, %v2181, 0
    %v2205 = vsel %vm285, %v2182, 0
    %2207 = vmatprep.subr.mxu0 0.0
    %v2208 = vand.u32 %v277, 4294901760
    %2209 = vmatpush1.msra.mxu0 %v2208
    %2210 = vmatprep.subr.mxu0 0.0
    %v2211 = vand.u32 %v278, 4294901760
    %2212 = vmatpush1.msra.mxu0 %v2211
    %2213 = vmatprep.subr.mxu0 0.0
    %v2214 = vand.u32 %v279, 4294901760
    %2215 = vmatpush1.msra.mxu0 %v2214
    %2216 = vmatprep.subr.mxu0 0.0
    %v2217 = vand.u32 %v280, 4294901760
    %2218 = vmatpush1.msra.mxu0 %v2217
    %2219 = vmatprep.subr.mxu0 0.0
    %v2220 = vand.u32 %v281, 4294901760
    %2221 = vmatpush1.msra.mxu0 %v2220
    %2222 = vmatprep.subr.mxu0 0.0
    %v2223 = vand.u32 %v282, 4294901760
    %2224 = vmatpush1.msra.mxu0 %v2223
    %2225 = vmatprep.subr.mxu0 0.0
    %v2226 = vand.u32 %v283, 4294901760
    %2227 = vmatpush1.msra.mxu0 %v2226
    %2228 = vmatprep.subr.mxu0 0.0
    %v2229 = vand.u32 %v284, 4294901760
    %2230 = vmatpush1.msra.mxu0 %v2229
    %2231 = vmatprep.subr.mxu0 0.0
    %2232 = vmatpush1.msra.mxu0 0.0
    %2233 = vmatprep.subr.mxu0 0.0
    %2234 = vmatpush1.msra.mxu0 0.0
    %2235 = vmatprep.subr.mxu0 0.0
    %2236 = vmatpush1.msra.mxu0 0.0
    %2237 = vmatprep.subr.mxu0 0.0
    %2238 = vmatpush1.msra.mxu0 0.0
    %2239 = vmatprep.subr.mxu0 0.0
    %2240 = vmatpush1.msra.mxu0 0.0
    %2241 = vmatprep.subr.mxu0 0.0
    %2242 = vmatpush1.msra.mxu0 0.0
    %2243 = vmatprep.subr.mxu0 0.0
    %2244 = vmatpush1.msra.mxu0 0.0
    %2245 = vmatprep.subr.mxu0 0.0
    %2246 = vmatpush1.msra.mxu0 0.0
    %2247 = vmatprep.subr.mxu0 0.0
    %2248 = vmatpush1.msra.mxu0 0.0
    %2249 = vmatprep.subr.mxu0 0.0
    %2250 = vmatpush1.msra.mxu0 0.0
    %2251 = vmatprep.subr.mxu0 0.0
    %2252 = vmatpush1.msra.mxu0 0.0
    %2253 = vmatprep.subr.mxu0 0.0
    %2254 = vmatpush1.msra.mxu0 0.0
    %2255 = vmatprep.subr.mxu0 0.0
    %2256 = vmatpush1.msra.mxu0 0.0
    %2257 = vmatprep.subr.mxu0 0.0
    %2258 = vmatpush1.msra.mxu0 0.0
    %2259 = vmatprep.subr.mxu0 0.0
    %2260 = vmatpush1.msra.mxu0 0.0
    %2261 = vmatprep.subr.mxu0 0.0
    %2262 = vmatpush1.msra.mxu0 0.0
    %2263 = vmatprep.subr.mxu0 0.0
    %2264 = vmatpush1.msra.mxu0 0.0
    %2265 = vmatprep.subr.mxu0 0.0
    %2266 = vmatpush1.msra.mxu0 0.0
    %2267 = vmatprep.subr.mxu0 0.0
    %2268 = vmatpush1.msra.mxu0 0.0
    %2269 = vmatprep.subr.mxu0 0.0
    %2270 = vmatpush1.msra.mxu0 0.0
    %2271 = vmatprep.subr.mxu0 0.0
    %2272 = vmatpush1.msra.mxu0 0.0
    %2273 = vmatprep.subr.mxu0 0.0
    %2274 = vmatpush1.msra.mxu0 0.0
    %2275 = vmatprep.subr.mxu0 0.0
    %2276 = vmatpush1.msra.mxu0 0.0
    %2277 = vmatprep.subr.mxu0 0.0
    %2278 = vmatpush1.msra.mxu0 0.0
    %2279 = vmatprep.mubr.f32.mxu0 0.0
    %v2280 = vand.u32 %v2184, 4294901760
    %v2281 = vsub.f32 %v2184, %v2280
    %v2282 = vand.u32 %v2281, 4294901760
    %v2283 = vsub.f32 %v2281, %v2282
    %v2284 = vand.u32 %v2283, 4294901760
    %2285 = vmatmul.mubr.f32.gmra.mrb[0].mxu0 %v2284
    %v2286 = vpop.f32.mrb[0].mxu0
    %v2287 = vadd.f32 0.0, %v2286
    %v2288 = vpop.f32.mrb[0].mxu0
    %2289 = vmatprep.mubr.f32.mxu0 0.0
    %v2290 = vand.u32 %v2187, 4294901760
    %v2291 = vsub.f32 %v2187, %v2290
    %v2292 = vand.u32 %v2291, 4294901760
    %v2293 = vsub.f32 %v2291, %v2292
    %v2294 = vand.u32 %v2293, 4294901760
    %2295 = vmatmul.mubr.f32.gmra.mrb[0].mxu0 %v2294
    %v2296 = vpop.f32.mrb[0].mxu0
    %v2297 = vadd.f32 0.0, %v2296
    %v2298 = vpop.f32.mrb[0].mxu0
    %2299 = vmatprep.mubr.f32.mxu0 0.0
    %v2300 = vand.u32 %v2190, 4294901760
    %v2301 = vsub.f32 %v2190, %v2300
    %v2302 = vand.u32 %v2301, 4294901760
    %v2303 = vsub.f32 %v2301, %v2302
    %v2304 = vand.u32 %v2303, 4294901760
    %2305 = vmatmul.mubr.f32.gmra.mrb[0].mxu0 %v2304
    %v2306 = vpop.f32.mrb[0].mxu0
    %v2307 = vadd.f32 0.0, %v2306
    %v2308 = vpop.f32.mrb[0].mxu0
    %2309 = vmatprep.mubr.f32.mxu0 0.0
    %v2310 = vand.u32 %v2193, 4294901760
    %v2311 = vsub.f32 %v2193, %v2310
    %v2312 = vand.u32 %v2311, 4294901760
    %v2313 = vsub.f32 %v2311, %v2312
    %v2314 = vand.u32 %v2313, 4294901760
    %2315 = vmatmul.mubr.f32.gmra.mrb[0].mxu0 %v2314
    %v2316 = vpop.f32.mrb[0].mxu0
    %v2317 = vadd.f32 0.0, %v2316
    %v2318 = vpop.f32.mrb[0].mxu0
    %2319 = vmatprep.mubr.f32.mxu0 0.0
    %v2320 = vand.u32 %v2196, 4294901760
    %v2321 = vsub.f32 %v2196, %v2320
    %v2322 = vand.u32 %v2321, 4294901760
    %v2323 = vsub.f32 %v2321, %v2322
    %v2324 = vand.u32 %v2323, 4294901760
    %2325 = vmatmul.mubr.f32.gmra.mrb[0].mxu0 %v2324
    %v2326 = vpop.f32.mrb[0].mxu0
    %v2327 = vadd.f32 0.0, %v2326
    %v2328 = vpop.f32.mrb[0].mxu0
    %2329 = vmatprep.mubr.f32.mxu0 0.0
    %v2330 = vand.u32 %v2199, 4294901760
    %v2331 = vsub.f32 %v2199, %v2330
    %v2332 = vand.u32 %v2331, 4294901760
    %v2333 = vsub.f32 %v2331, %v2332
    %v2334 = vand.u32 %v2333, 4294901760
    %2335 = vmatmul.mubr.f32.gmra.mrb[0].mxu0 %v2334
    %v2336 = vpop.f32.mrb[0].mxu0
    %v2337 = vadd.f32 0.0, %v2336
    %v2338 = vpop.f32.mrb[0].mxu0
    %2339 = vmatprep.mubr.f32.mxu0 0.0
    %v2340 = vand.u32 %v2202, 4294901760
    %v2341 = vsub.f32 %v2202, %v2340
    %v2342 = vand.u32 %v2341, 4294901760
    %v2343 = vsub.f32 %v2341, %v2342
    %v2344 = vand.u32 %v2343, 4294901760
    %2345 = vmatmul.mubr.f32.gmra.mrb[0].mxu0 %v2344
    %v2346 = vpop.f32.mrb[0].mxu0
    %v2347 = vadd.f32 0.0, %v2346
    %v2348 = vpop.f32.mrb[0].mxu0
    %2349 = vmatprep.mubr.f32.mxu0 0.0
    %v2350 = vand.u32 %v2205, 4294901760
    %v2351 = vsub.f32 %v2205, %v2350
    %v2352 = vand.u32 %v2351, 4294901760
    %v2353 = vsub.f32 %v2351, %v2352
    %v2354 = vand.u32 %v2353, 4294901760
    %2355 = vmatmul.mubr.f32.gmra.mrb[0].mxu0 %v2354
    %v2356 = vpop.f32.mrb[0].mxu0
    %v2357 = vadd.f32 0.0, %v2356
    %v2358 = vpop.f32.mrb[0].mxu0
    %2359 = vdwg.mxu0
    %2360 = vmatprep.subr.mxu0 0.0
    %v2361 = vand.u32 %v277, 4294901760
    %v2362 = vsub.f32 %v277, %v2361
    %v2363 = vand.u32 %v2362, 4294901760
    %v2364 = vsub.f32 %v2362, %v2363
    %v2365 = vand.u32 %v2364, 4294901760
    %2366 = vmatpush1.msra.mxu0 %v2365
    %2367 = vmatprep.subr.mxu0 0.0
    %v2368 = vand.u32 %v278, 4294901760
    %v2369 = vsub.f32 %v278, %v2368
    %v2370 = vand.u32 %v2369, 4294901760
    %v2371 = vsub.f32 %v2369, %v2370
    %v2372 = vand.u32 %v2371, 4294901760
    %2373 = vmatpush1.msra.mxu0 %v2372
    %2374 = vmatprep.subr.mxu0 0.0
    %v2375 = vand.u32 %v279, 4294901760
    %v2376 = vsub.f32 %v279, %v2375
    %v2377 = vand.u32 %v2376, 4294901760
    %v2378 = vsub.f32 %v2376, %v2377
    %v2379 = vand.u32 %v2378, 4294901760
    %2380 = vmatpush1.msra.mxu0 %v2379
    %2381 = vmatprep.subr.mxu0 0.0
    %v2382 = vand.u32 %v280, 4294901760
    %v2383 = vsub.f32 %v280, %v2382
    %v2384 = vand.u32 %v2383, 4294901760
    %v2385 = vsub.f32 %v2383, %v2384
    %v2386 = vand.u32 %v2385, 4294901760
    %2387 = vmatpush1.msra.mxu0 %v2386
    %2388 = vmatprep.subr.mxu0 0.0
    %v2389 = vand.u32 %v281, 4294901760
    %v2390 = vsub.f32 %v281, %v2389
    %v2391 = vand.u32 %v2390, 4294901760
    %v2392 = vsub.f32 %v2390, %v2391
    %v2393 = vand.u32 %v2392, 4294901760
    %2394 = vmatpush1.msra.mxu0 %v2393
    %2395 = vmatprep.subr.mxu0 0.0
    %v2396 = vand.u32 %v282, 4294901760
    %v2397 = vsub.f32 %v282, %v2396
    %v2398 = vand.u32 %v2397, 4294901760
    %v2399 = vsub.f32 %v2397, %v2398
    %v2400 = vand.u32 %v2399, 4294901760
    %2401 = vmatpush1.msra.mxu0 %v2400
    %2402 = vmatprep.subr.mxu0 0.0
    %v2403 = vand.u32 %v283, 4294901760
    %v2404 = vsub.f32 %v283, %v2403
    %v2405 = vand.u32 %v2404, 4294901760
    %v2406 = vsub.f32 %v2404, %v2405
    %v2407 = vand.u32 %v2406, 4294901760
    %2408 = vmatpush1.msra.mxu0 %v2407
    %2409 = vmatprep.subr.mxu0 0.0
    %v2410 = vand.u32 %v284, 4294901760
    %v2411 = vsub.f32 %v284, %v2410
    %v2412 = vand.u32 %v2411, 4294901760
    %v2413 = vsub.f32 %v2411, %v2412
    %v2414 = vand.u32 %v2413, 4294901760
    %2415 = vmatpush1.msra.mxu0 %v2414
    %2416 = vmatprep.subr.mxu0 0.0
    %2417 = vmatpush1.msra.mxu0 0.0
    %2418 = vmatprep.subr.mxu0 0.0
    %2419 = vmatpush1.msra.mxu0 0.0
    %2420 = vmatprep.subr.mxu0 0.0
    %2421 = vmatpush1.msra.mxu0 0.0
    %2422 = vmatprep.subr.mxu0 0.0
    %2423 = vmatpush1.msra.mxu0 0.0
    %2424 = vmatprep.subr.mxu0 0.0
    %2425 = vmatpush1.msra.mxu0 0.0
    %2426 = vmatprep.subr.mxu0 0.0
    %2427 = vmatpush1.msra.mxu0 0.0
    %2428 = vmatprep.subr.mxu0 0.0
    %2429 = vmatpush1.msra.mxu0 0.0
    %2430 = vmatprep.subr.mxu0 0.0
    %2431 = vmatpush1.msra.mxu0 0.0
    %2432 = vmatprep.subr.mxu0 0.0
    %2433 = vmatpush1.msra.mxu0 0.0
    %2434 = vmatprep.subr.mxu0 0.0
    %2435 = vmatpush1.msra.mxu0 0.0
    %2436 = vmatprep.subr.mxu0 0.0
    %2437 = vmatpush1.msra.mxu0 0.0
    %2438 = vmatprep.subr.mxu0 0.0
    %2439 = vmatpush1.msra.mxu0 0.0
    %2440 = vmatprep.subr.mxu0 0.0
    %2441 = vmatpush1.msra.mxu0 0.0
    %2442 = vmatprep.subr.mxu0 0.0
    %2443 = vmatpush1.msra.mxu0 0.0
    %2444 = vmatprep.subr.mxu0 0.0
    %2445 = vmatpush1.msra.mxu0 0.0
    %2446 = vmatprep.subr.mxu0 0.0
    %2447 = vmatpush1.msra.mxu0 0.0
    %2448 = vmatprep.subr.mxu0 0.0
    %2449 = vmatpush1.msra.mxu0 0.0
    %2450 = vmatprep.subr.mxu0 0.0
    %2451 = vmatpush1.msra.mxu0 0.0
    %2452 = vmatprep.subr.mxu0 0.0
    %2453 = vmatpush1.msra.mxu0 0.0
    %2454 = vmatprep.subr.mxu0 0.0
    %2455 = vmatpush1.msra.mxu0 0.0
    %2456 = vmatprep.subr.mxu0 0.0
    %2457 = vmatpush1.msra.mxu0 0.0
    %2458 = vmatprep.subr.mxu0 0.0
    %2459 = vmatpush1.msra.mxu0 0.0
    %2460 = vmatprep.subr.mxu0 0.0
    %2461 = vmatpush1.msra.mxu0 0.0
    %2462 = vmatprep.subr.mxu0 0.0
    %2463 = vmatpush1.msra.mxu0 0.0
    %2464 = vmatprep.mubr.f32.mxu0 0.0
    %v2465 = vand.u32 %v2184, 4294901760
    %2466 = vmatmul.mubr.f32.gmra.mrb[0].mxu0 %v2465
    %v2467 = vpop.f32.mrb[0].mxu0
    %v2468 = vadd.f32 %v2287, %v2467
    %v2469 = vpop.f32.mrb[0].mxu0
    %2470 = vmatprep.mubr.f32.mxu0 0.0
    %v2471 = vand.u32 %v2187, 4294901760
    %2472 = vmatmul.mubr.f32.gmra.mrb[0].mxu0 %v2471
    %v2473 = vpop.f32.mrb[0].mxu0
    %v2474 = vadd.f32 %v2297, %v2473
    %v2475 = vpop.f32.mrb[0].mxu0
    %2476 = vmatprep.mubr.f32.mxu0 0.0
    %v2477 = vand.u32 %v2190, 4294901760
    %2478 = vmatmul.mubr.f32.gmra.mrb[0].mxu0 %v2477
    %v2479 = vpop.f32.mrb[0].mxu0
    %v2480 = vadd.f32 %v2307, %v2479
    %v2481 = vpop.f32.mrb[0].mxu0
    %2482 = vmatprep.mubr.f32.mxu0 0.0
    %v2483 = vand.u32 %v2193, 4294901760
    %2484 = vmatmul.mubr.f32.gmra.mrb[0].mxu0 %v2483
    %v2485 = vpop.f32.mrb[0].mxu0
    %v2486 = vadd.f32 %v2317, %v2485
    %v2487 = vpop.f32.mrb[0].mxu0
    %2488 = vmatprep.mubr.f32.mxu0 0.0
    %v2489 = vand.u32 %v2196, 4294901760
    %2490 = vmatmul.mubr.f32.gmra.mrb[0].mxu0 %v2489
    %v2491 = vpop.f32.mrb[0].mxu0
    %v2492 = vadd.f32 %v2327, %v2491
    %v2493 = vpop.f32.mrb[0].mxu0
    %2494 = vmatprep.mubr.f32.mxu0 0.0
    %v2495 = vand.u32 %v2199, 4294901760
    %2496 = vmatmul.mubr.f32.gmra.mrb[0].mxu0 %v2495
    %v2497 = vpop.f32.mrb[0].mxu0
    %v2498 = vadd.f32 %v2337, %v2497
    %v2499 = vpop.f32.mrb[0].mxu0
    %2500 = vmatprep.mubr.f32.mxu0 0.0
    %v2501 = vand.u32 %v2202, 4294901760
    %2502 = vmatmul.mubr.f32.gmra.mrb[0].mxu0 %v2501
    %v2503 = vpop.f32.mrb[0].mxu0
    %v2504 = vadd.f32 %v2347, %v2503
    %v2505 = vpop.f32.mrb[0].mxu0
    %2506 = vmatprep.mubr.f32.mxu0 0.0
    %v2507 = vand.u32 %v2205, 4294901760
    %2508 = vmatmul.mubr.f32.gmra.mrb[0].mxu0 %v2507
    %v2509 = vpop.f32.mrb[0].mxu0
    %v2510 = vadd.f32 %v2357, %v2509
    %v2511 = vpop.f32.mrb[0].mxu0
    %2512 = vdwg.mxu0
    %2513 = vmatprep.subr.mxu0 0.0
    %v2514 = vand.u32 %v277, 4294901760
    %v2515 = vsub.f32 %v277, %v2514
    %2516 = vmatpush1.msra.mxu0 %v2515
    %2517 = vmatprep.subr.mxu0 0.0
    %v2518 = vand.u32 %v278, 4294901760
    %v2519 = vsub.f32 %v278, %v2518
    %2520 = vmatpush1.msra.mxu0 %v2519
    %2521 = vmatprep.subr.mxu0 0.0
    %v2522 = vand.u32 %v279, 4294901760
    %v2523 = vsub.f32 %v279, %v2522
    %2524 = vmatpush1.msra.mxu0 %v2523
    %2525 = vmatprep.subr.mxu0 0.0
    %v2526 = vand.u32 %v280, 4294901760
    %v2527 = vsub.f32 %v280, %v2526
    %2528 = vmatpush1.msra.mxu0 %v2527
    %2529 = vmatprep.subr.mxu0 0.0
    %v2530 = vand.u32 %v281, 4294901760
    %v2531 = vsub.f32 %v281, %v2530
    %2532 = vmatpush1.msra.mxu0 %v2531
    %2533 = vmatprep.subr.mxu0 0.0
    %v2534 = vand.u32 %v282, 4294901760
    %v2535 = vsub.f32 %v282, %v2534
    %2536 = vmatpush1.msra.mxu0 %v2535
    %2537 = vmatprep.subr.mxu0 0.0
    %v2538 = vand.u32 %v283, 4294901760
    %v2539 = vsub.f32 %v283, %v2538
    %2540 = vmatpush1.msra.mxu0 %v2539
    %2541 = vmatprep.subr.mxu0 0.0
    %v2542 = vand.u32 %v284, 4294901760
    %v2543 = vsub.f32 %v284, %v2542
    %2544 = vmatpush1.msra.mxu0 %v2543
    %2545 = vmatprep.subr.mxu0 0.0
    %2546 = vmatpush1.msra.mxu0 0.0
    %2547 = vmatprep.subr.mxu0 0.0
    %2548 = vmatpush1.msra.mxu0 0.0
    %2549 = vmatprep.subr.mxu0 0.0
    %2550 = vmatpush1.msra.mxu0 0.0
    %2551 = vmatprep.subr.mxu0 0.0
    %2552 = vmatpush1.msra.mxu0 0.0
    %2553 = vmatprep.subr.mxu0 0.0
    %2554 = vmatpush1.msra.mxu0 0.0
    %2555 = vmatprep.subr.mxu0 0.0
    %2556 = vmatpush1.msra.mxu0 0.0
    %2557 = vmatprep.subr.mxu0 0.0
    %2558 = vmatpush1.msra.mxu0 0.0
    %2559 = vmatprep.subr.mxu0 0.0
    %2560 = vmatpush1.msra.mxu0 0.0
    %2561 = vmatprep.subr.mxu0 0.0
    %2562 = vmatpush1.msra.mxu0 0.0
    %2563 = vmatprep.subr.mxu0 0.0
    %2564 = vmatpush1.msra.mxu0 0.0
    %2565 = vmatprep.subr.mxu0 0.0
    %2566 = vmatpush1.msra.mxu0 0.0
    %2567 = vmatprep.subr.mxu0 0.0
    %2568 = vmatpush1.msra.mxu0 0.0
    %2569 = vmatprep.subr.mxu0 0.0
    %2570 = vmatpush1.msra.mxu0 0.0
    %2571 = vmatprep.subr.mxu0 0.0
    %2572 = vmatpush1.msra.mxu0 0.0
    %2573 = vmatprep.subr.mxu0 0.0
    %2574 = vmatpush1.msra.mxu0 0.0
    %2575 = vmatprep.subr.mxu0 0.0
    %2576 = vmatpush1.msra.mxu0 0.0
    %2577 = vmatprep.subr.mxu0 0.0
    %2578 = vmatpush1.msra.mxu0 0.0
    %2579 = vmatprep.subr.mxu0 0.0
    %2580 = vmatpush1.msra.mxu0 0.0
    %2581 = vmatprep.subr.mxu0 0.0
    %2582 = vmatpush1.msra.mxu0 0.0
    %2583 = vmatprep.subr.mxu0 0.0
    %2584 = vmatpush1.msra.mxu0 0.0
    %2585 = vmatprep.subr.mxu0 0.0
    %2586 = vmatpush1.msra.mxu0 0.0
    %2587 = vmatprep.subr.mxu0 0.0
    %2588 = vmatpush1.msra.mxu0 0.0
    %2589 = vmatprep.subr.mxu0 0.0
    %2590 = vmatpush1.msra.mxu0 0.0
    %2591 = vmatprep.subr.mxu0 0.0
    %2592 = vmatpush1.msra.mxu0 0.0
    %2593 = vmatprep.mubr.f32.mxu0 0.0
    %v2594 = vand.u32 %v2184, 4294901760
    %v2595 = vsub.f32 %v2184, %v2594
    %2596 = vmatmul.mubr.f32.gmra.mrb[0].mxu0 %v2595
    %v2597 = vpop.f32.mrb[0].mxu0
    %v2598 = vadd.f32 %v2468, %v2597
    %v2599 = vpop.f32.mrb[0].mxu0
    %2600 = vmatprep.mubr.f32.mxu0 0.0
    %v2601 = vand.u32 %v2187, 4294901760
    %v2602 = vsub.f32 %v2187, %v2601
    %2603 = vmatmul.mubr.f32.gmra.mrb[0].mxu0 %v2602
    %v2604 = vpop.f32.mrb[0].mxu0
    %v2605 = vadd.f32 %v2474, %v2604
    %v2606 = vpop.f32.mrb[0].mxu0
    %2607 = vmatprep.mubr.f32.mxu0 0.0
    %v2608 = vand.u32 %v2190, 4294901760
    %v2609 = vsub.f32 %v2190, %v2608
    %2610 = vmatmul.mubr.f32.gmra.mrb[0].mxu0 %v2609
    %v2611 = vpop.f32.mrb[0].mxu0
    %v2612 = vadd.f32 %v2480, %v2611
    %v2613 = vpop.f32.mrb[0].mxu0
    %2614 = vmatprep.mubr.f32.mxu0 0.0
    %v2615 = vand.u32 %v2193, 4294901760
    %v2616 = vsub.f32 %v2193, %v2615
    %2617 = vmatmul.mubr.f32.gmra.mrb[0].mxu0 %v2616
    %v2618 = vpop.f32.mrb[0].mxu0
    %v2619 = vadd.f32 %v2486, %v2618
    %v2620 = vpop.f32.mrb[0].mxu0
    %2621 = vmatprep.mubr.f32.mxu0 0.0
    %v2622 = vand.u32 %v2196, 4294901760
    %v2623 = vsub.f32 %v2196, %v2622
    %2624 = vmatmul.mubr.f32.gmra.mrb[0].mxu0 %v2623
    %v2625 = vpop.f32.mrb[0].mxu0
    %v2626 = vadd.f32 %v2492, %v2625
    %v2627 = vpop.f32.mrb[0].mxu0
    %2628 = vmatprep.mubr.f32.mxu0 0.0
    %v2629 = vand.u32 %v2199, 4294901760
    %v2630 = vsub.f32 %v2199, %v2629
    %2631 = vmatmul.mubr.f32.gmra.mrb[0].mxu0 %v2630
    %v2632 = vpop.f32.mrb[0].mxu0
    %v2633 = vadd.f32 %v2498, %v2632
    %v2634 = vpop.f32.mrb[0].mxu0
    %2635 = vmatprep.mubr.f32.mxu0 0.0
    %v2636 = vand.u32 %v2202, 4294901760
    %v2637 = vsub.f32 %v2202, %v2636
    %2638 = vmatmul.mubr.f32.gmra.mrb[0].mxu0 %v2637
    %v2639 = vpop.f32.mrb[0].mxu0
    %v2640 = vadd.f32 %v2504, %v2639
    %v2641 = vpop.f32.mrb[0].mxu0
    %2642 = vmatprep.mubr.f32.mxu0 0.0
    %v2643 = vand.u32 %v2205, 4294901760
    %v2644 = vsub.f32 %v2205, %v2643
    %2645 = vmatmul.mubr.f32.gmra.mrb[0].mxu0 %v2644
    %v2646 = vpop.f32.mrb[0].mxu0
    %v2647 = vadd.f32 %v2510, %v2646
    %v2648 = vpop.f32.mrb[0].mxu0
    %2649 = vdwg.mxu0
    %2650 = vmatprep.subr.mxu0 0.0
    %v2651 = vand.u32 %v277, 4294901760
    %2652 = vmatpush1.msra.mxu0 %v2651
    %2653 = vmatprep.subr.mxu0 0.0
    %v2654 = vand.u32 %v278, 4294901760
    %2655 = vmatpush1.msra.mxu0 %v2654
    %2656 = vmatprep.subr.mxu0 0.0
    %v2657 = vand.u32 %v279, 4294901760
    %2658 = vmatpush1.msra.mxu0 %v2657
    %2659 = vmatprep.subr.mxu0 0.0
    %v2660 = vand.u32 %v280, 4294901760
    %2661 = vmatpush1.msra.mxu0 %v2660
    %2662 = vmatprep.subr.mxu0 0.0
    %v2663 = vand.u32 %v281, 4294901760
    %2664 = vmatpush1.msra.mxu0 %v2663
    %2665 = vmatprep.subr.mxu0 0.0
    %v2666 = vand.u32 %v282, 4294901760
    %2667 = vmatpush1.msra.mxu0 %v2666
    %2668 = vmatprep.subr.mxu0 0.0
    %v2669 = vand.u32 %v283, 4294901760
    %2670 = vmatpush1.msra.mxu0 %v2669
    %2671 = vmatprep.subr.mxu0 0.0
    %v2672 = vand.u32 %v284, 4294901760
    %2673 = vmatpush1.msra.mxu0 %v2672
    %2674 = vmatprep.subr.mxu0 0.0
    %2675 = vmatpush1.msra.mxu0 0.0
    %2676 = vmatprep.subr.mxu0 0.0
    %2677 = vmatpush1.msra.mxu0 0.0
    %2678 = vmatprep.subr.mxu0 0.0
    %2679 = vmatpush1.msra.mxu0 0.0
    %2680 = vmatprep.subr.mxu0 0.0
    %2681 = vmatpush1.msra.mxu0 0.0
    %2682 = vmatprep.subr.mxu0 0.0
    %2683 = vmatpush1.msra.mxu0 0.0
    %2684 = vmatprep.subr.mxu0 0.0
    %2685 = vmatpush1.msra.mxu0 0.0
    %2686 = vmatprep.subr.mxu0 0.0
    %2687 = vmatpush1.msra.mxu0 0.0
    %2688 = vmatprep.subr.mxu0 0.0
    %2689 = vmatpush1.msra.mxu0 0.0
    %2690 = vmatprep.subr.mxu0 0.0
    %2691 = vmatpush1.msra.mxu0 0.0
    %2692 = vmatprep.subr.mxu0 0.0
    %2693 = vmatpush1.msra.mxu0 0.0
    %2694 = vmatprep.subr.mxu0 0.0
    %2695 = vmatpush1.msra.mxu0 0.0
    %2696 = vmatprep.subr.mxu0 0.0
    %2697 = vmatpush1.msra.mxu0 0.0
    %2698 = vmatprep.subr.mxu0 0.0
    %2699 = vmatpush1.msra.mxu0 0.0
    %2700 = vmatprep.subr.mxu0 0.0
    %2701 = vmatpush1.msra.mxu0 0.0
    %2702 = vmatprep.subr.mxu0 0.0
    %2703 = vmatpush1.msra.mxu0 0.0
    %2704 = vmatprep.subr.mxu0 0.0
    %2705 = vmatpush1.msra.mxu0 0.0
    %2706 = vmatprep.subr.mxu0 0.0
    %2707 = vmatpush1.msra.mxu0 0.0
    %2708 = vmatprep.subr.mxu0 0.0
    %2709 = vmatpush1.msra.mxu0 0.0
    %2710 = vmatprep.subr.mxu0 0.0
    %2711 = vmatpush1.msra.mxu0 0.0
    %2712 = vmatprep.subr.mxu0 0.0
    %2713 = vmatpush1.msra.mxu0 0.0
    %2714 = vmatprep.subr.mxu0 0.0
    %2715 = vmatpush1.msra.mxu0 0.0
    %2716 = vmatprep.subr.mxu0 0.0
    %2717 = vmatpush1.msra.mxu0 0.0
    %2718 = vmatprep.subr.mxu0 0.0
    %2719 = vmatpush1.msra.mxu0 0.0
    %2720 = vmatprep.subr.mxu0 0.0
    %2721 = vmatpush1.msra.mxu0 0.0
    %2722 = vmatprep.mubr.f32.mxu0 0.0
    %v2723 = vand.u32 %v2184, 4294901760
    %v2724 = vsub.f32 %v2184, %v2723
    %v2725 = vand.u32 %v2724, 4294901760
    %2726 = vmatmul.mubr.f32.gmra.mrb[0].mxu0 %v2725
    %v2727 = vpop.f32.mrb[0].mxu0
    %v2728 = vadd.f32 %v2598, %v2727
    %v2729 = vpop.f32.mrb[0].mxu0
    %2730 = vmatprep.mubr.f32.mxu0 0.0
    %v2731 = vand.u32 %v2187, 4294901760
    %v2732 = vsub.f32 %v2187, %v2731
    %v2733 = vand.u32 %v2732, 4294901760
    %2734 = vmatmul.mubr.f32.gmra.mrb[0].mxu0 %v2733
    %v2735 = vpop.f32.mrb[0].mxu0
    %v2736 = vadd.f32 %v2605, %v2735
    %v2737 = vpop.f32.mrb[0].mxu0
    %2738 = vmatprep.mubr.f32.mxu0 0.0
    %v2739 = vand.u32 %v2190, 4294901760
    %v2740 = vsub.f32 %v2190, %v2739
    %v2741 = vand.u32 %v2740, 4294901760
    %2742 = vmatmul.mubr.f32.gmra.mrb[0].mxu0 %v2741
    %v2743 = vpop.f32.mrb[0].mxu0
    %v2744 = vadd.f32 %v2612, %v2743
    %v2745 = vpop.f32.mrb[0].mxu0
    %2746 = vmatprep.mubr.f32.mxu0 0.0
    %v2747 = vand.u32 %v2193, 4294901760
    %v2748 = vsub.f32 %v2193, %v2747
    %v2749 = vand.u32 %v2748, 4294901760
    %2750 = vmatmul.mubr.f32.gmra.mrb[0].mxu0 %v2749
    %v2751 = vpop.f32.mrb[0].mxu0
    %v2752 = vadd.f32 %v2619, %v2751
    %v2753 = vpop.f32.mrb[0].mxu0
    %2754 = vmatprep.mubr.f32.mxu0 0.0
    %v2755 = vand.u32 %v2196, 4294901760
    %v2756 = vsub.f32 %v2196, %v2755
    %v2757 = vand.u32 %v2756, 4294901760
    %2758 = vmatmul.mubr.f32.gmra.mrb[0].mxu0 %v2757
    %v2759 = vpop.f32.mrb[0].mxu0
    %v2760 = vadd.f32 %v2626, %v2759
    %v2761 = vpop.f32.mrb[0].mxu0
    %2762 = vmatprep.mubr.f32.mxu0 0.0
    %v2763 = vand.u32 %v2199, 4294901760
    %v2764 = vsub.f32 %v2199, %v2763
    %v2765 = vand.u32 %v2764, 4294901760
    %2766 = vmatmul.mubr.f32.gmra.mrb[0].mxu0 %v2765
    %v2767 = vpop.f32.mrb[0].mxu0
    %v2768 = vadd.f32 %v2633, %v2767
    %v2769 = vpop.f32.mrb[0].mxu0
    %2770 = vmatprep.mubr.f32.mxu0 0.0
    %v2771 = vand.u32 %v2202, 4294901760
    %v2772 = vsub.f32 %v2202, %v2771
    %v2773 = vand.u32 %v2772, 4294901760
    %2774 = vmatmul.mubr.f32.gmra.mrb[0].mxu0 %v2773
    %v2775 = vpop.f32.mrb[0].mxu0
    %v2776 = vadd.f32 %v2640, %v2775
    %v2777 = vpop.f32.mrb[0].mxu0
    %2778 = vmatprep.mubr.f32.mxu0 0.0
    %v2779 = vand.u32 %v2205, 4294901760
    %v2780 = vsub.f32 %v2205, %v2779
    %v2781 = vand.u32 %v2780, 4294901760
    %2782 = vmatmul.mubr.f32.gmra.mrb[0].mxu0 %v2781
    %v2783 = vpop.f32.mrb[0].mxu0
    %v2784 = vadd.f32 %v2647, %v2783
    %v2785 = vpop.f32.mrb[0].mxu0
    %2786 = vdwg.mxu0
    %2787 = vmatprep.subr.mxu0 0.0
    %v2788 = vand.u32 %v277, 4294901760
    %v2789 = vsub.f32 %v277, %v2788
    %v2790 = vand.u32 %v2789, 4294901760
    %2791 = vmatpush1.msra.mxu0 %v2790
    %2792 = vmatprep.subr.mxu0 0.0
    %v2793 = vand.u32 %v278, 4294901760
    %v2794 = vsub.f32 %v278, %v2793
    %v2795 = vand.u32 %v2794, 4294901760
    %2796 = vmatpush1.msra.mxu0 %v2795
    %2797 = vmatprep.subr.mxu0 0.0
    %v2798 = vand.u32 %v279, 4294901760
    %v2799 = vsub.f32 %v279, %v2798
    %v2800 = vand.u32 %v2799, 4294901760
    %2801 = vmatpush1.msra.mxu0 %v2800
    %2802 = vmatprep.subr.mxu0 0.0
    %v2803 = vand.u32 %v280, 4294901760
    %v2804 = vsub.f32 %v280, %v2803
    %v2805 = vand.u32 %v2804, 4294901760
    %2806 = vmatpush1.msra.mxu0 %v2805
    %2807 = vmatprep.subr.mxu0 0.0
    %v2808 = vand.u32 %v281, 4294901760
    %v2809 = vsub.f32 %v281, %v2808
    %v2810 = vand.u32 %v2809, 4294901760
    %2811 = vmatpush1.msra.mxu0 %v2810
    %2812 = vmatprep.subr.mxu0 0.0
    %v2813 = vand.u32 %v282, 4294901760
    %v2814 = vsub.f32 %v282, %v2813
    %v2815 = vand.u32 %v2814, 4294901760
    %2816 = vmatpush1.msra.mxu0 %v2815
    %2817 = vmatprep.subr.mxu0 0.0
    %v2818 = vand.u32 %v283, 4294901760
    %v2819 = vsub.f32 %v283, %v2818
    %v2820 = vand.u32 %v2819, 4294901760
    %2821 = vmatpush1.msra.mxu0 %v2820
    %2822 = vmatprep.subr.mxu0 0.0
    %v2823 = vand.u32 %v284, 4294901760
    %v2824 = vsub.f32 %v284, %v2823
    %v2825 = vand.u32 %v2824, 4294901760
    %2826 = vmatpush1.msra.mxu0 %v2825
    %2827 = vmatprep.subr.mxu0 0.0
    %2828 = vmatpush1.msra.mxu0 0.0
    %2829 = vmatprep.subr.mxu0 0.0
    %2830 = vmatpush1.msra.mxu0 0.0
    %2831 = vmatprep.subr.mxu0 0.0
    %2832 = vmatpush1.msra.mxu0 0.0
    %2833 = vmatprep.subr.mxu0 0.0
    %2834 = vmatpush1.msra.mxu0 0.0
    %2835 = vmatprep.subr.mxu0 0.0
    %2836 = vmatpush1.msra.mxu0 0.0
    %2837 = vmatprep.subr.mxu0 0.0
    %2838 = vmatpush1.msra.mxu0 0.0
    %2839 = vmatprep.subr.mxu0 0.0
    %2840 = vmatpush1.msra.mxu0 0.0
    %2841 = vmatprep.subr.mxu0 0.0
    %2842 = vmatpush1.msra.mxu0 0.0
    %2843 = vmatprep.subr.mxu0 0.0
    %2844 = vmatpush1.msra.mxu0 0.0
    %2845 = vmatprep.subr.mxu0 0.0
    %2846 = vmatpush1.msra.mxu0 0.0
    %2847 = vmatprep.subr.mxu0 0.0
    %2848 = vmatpush1.msra.mxu0 0.0
    %2849 = vmatprep.subr.mxu0 0.0
    %2850 = vmatpush1.msra.mxu0 0.0
    %2851 = vmatprep.subr.mxu0 0.0
    %2852 = vmatpush1.msra.mxu0 0.0
    %2853 = vmatprep.subr.mxu0 0.0
    %2854 = vmatpush1.msra.mxu0 0.0
    %2855 = vmatprep.subr.mxu0 0.0
    %2856 = vmatpush1.msra.mxu0 0.0
    %2857 = vmatprep.subr.mxu0 0.0
    %2858 = vmatpush1.msra.mxu0 0.0
    %2859 = vmatprep.subr.mxu0 0.0
    %2860 = vmatpush1.msra.mxu0 0.0
    %2861 = vmatprep.subr.mxu0 0.0
    %2862 = vmatpush1.msra.mxu0 0.0
    %2863 = vmatprep.subr.mxu0 0.0
    %2864 = vmatpush1.msra.mxu0 0.0
    %2865 = vmatprep.subr.mxu0 0.0
    %2866 = vmatpush1.msra.mxu0 0.0
    %2867 = vmatprep.subr.mxu0 0.0
    %2868 = vmatpush1.msra.mxu0 0.0
    %2869 = vmatprep.subr.mxu0 0.0
    %2870 = vmatpush1.msra.mxu0 0.0
    %2871 = vmatprep.subr.mxu0 0.0
    %2872 = vmatpush1.msra.mxu0 0.0
    %2873 = vmatprep.subr.mxu0 0.0
    %2874 = vmatpush1.msra.mxu0 0.0
    %2875 = vmatprep.mubr.f32.mxu0 0.0
    %v2876 = vand.u32 %v2184, 4294901760
    %2877 = vmatmul.mubr.f32.gmra.mrb[0].mxu0 %v2876
    %v2878 = vpop.f32.mrb[0].mxu0
    %v2879 = vadd.f32 %v2728, %v2878
    %v2880 = vpop.f32.mrb[0].mxu0
    %2881 = vmatprep.mubr.f32.mxu0 0.0
    %v2882 = vand.u32 %v2187, 4294901760
    %2883 = vmatmul.mubr.f32.gmra.mrb[0].mxu0 %v2882
    %v2884 = vpop.f32.mrb[0].mxu0
    %v2885 = vadd.f32 %v2736, %v2884
    %v2886 = vpop.f32.mrb[0].mxu0
    %2887 = vmatprep.mubr.f32.mxu0 0.0
    %v2888 = vand.u32 %v2190, 4294901760
    %2889 = vmatmul.mubr.f32.gmra.mrb[0].mxu0 %v2888
    %v2890 = vpop.f32.mrb[0].mxu0
    %v2891 = vadd.f32 %v2744, %v2890
    %v2892 = vpop.f32.mrb[0].mxu0
    %2893 = vmatprep.mubr.f32.mxu0 0.0
    %v2894 = vand.u32 %v2193, 4294901760
    %2895 = vmatmul.mubr.f32.gmra.mrb[0].mxu0 %v2894
    %v2896 = vpop.f32.mrb[0].mxu0
    %v2897 = vadd.f32 %v2752, %v2896
    %v2898 = vpop.f32.mrb[0].mxu0
    %2899 = vmatprep.mubr.f32.mxu0 0.0
    %v2900 = vand.u32 %v2196, 4294901760
    %2901 = vmatmul.mubr.f32.gmra.mrb[0].mxu0 %v2900
    %v2902 = vpop.f32.mrb[0].mxu0
    %v2903 = vadd.f32 %v2760, %v2902
    %v2904 = vpop.f32.mrb[0].mxu0
    %2905 = vmatprep.mubr.f32.mxu0 0.0
    %v2906 = vand.u32 %v2199, 4294901760
    %2907 = vmatmul.mubr.f32.gmra.mrb[0].mxu0 %v2906
    %v2908 = vpop.f32.mrb[0].mxu0
    %v2909 = vadd.f32 %v2768, %v2908
    %v2910 = vpop.f32.mrb[0].mxu0
    %2911 = vmatprep.mubr.f32.mxu0 0.0
    %v2912 = vand.u32 %v2202, 4294901760
    %2913 = vmatmul.mubr.f32.gmra.mrb[0].mxu0 %v2912
    %v2914 = vpop.f32.mrb[0].mxu0
    %v2915 = vadd.f32 %v2776, %v2914
    %v2916 = vpop.f32.mrb[0].mxu0
    %2917 = vmatprep.mubr.f32.mxu0 0.0
    %v2918 = vand.u32 %v2205, 4294901760
    %2919 = vmatmul.mubr.f32.gmra.mrb[0].mxu0 %v2918
    %v2920 = vpop.f32.mrb[0].mxu0
    %v2921 = vadd.f32 %v2784, %v2920
    %v2922 = vpop.f32.mrb[0].mxu0
    %2923 = vdwg.mxu0
    %2924 = vmatprep.subr.mxu0 0.0
    %v2925 = vand.u32 %v277, 4294901760
    %2926 = vmatpush1.msra.mxu0 %v2925
    %2927 = vmatprep.subr.mxu0 0.0
    %v2928 = vand.u32 %v278, 4294901760
    %2929 = vmatpush1.msra.mxu0 %v2928
    %2930 = vmatprep.subr.mxu0 0.0
    %v2931 = vand.u32 %v279, 4294901760
    %2932 = vmatpush1.msra.mxu0 %v2931
    %2933 = vmatprep.subr.mxu0 0.0
    %v2934 = vand.u32 %v280, 4294901760
    %2935 = vmatpush1.msra.mxu0 %v2934
    %2936 = vmatprep.subr.mxu0 0.0
    %v2937 = vand.u32 %v281, 4294901760
    %2938 = vmatpush1.msra.mxu0 %v2937
    %2939 = vmatprep.subr.mxu0 0.0
    %v2940 = vand.u32 %v282, 4294901760
    %2941 = vmatpush1.msra.mxu0 %v2940
    %2942 = vmatprep.subr.mxu0 0.0
    %v2943 = vand.u32 %v283, 4294901760
    %2944 = vmatpush1.msra.mxu0 %v2943
    %2945 = vmatprep.subr.mxu0 0.0
    %v2946 = vand.u32 %v284, 4294901760
    %2947 = vmatpush1.msra.mxu0 %v2946
    %2948 = vmatprep.subr.mxu0 0.0
    %2949 = vmatpush1.msra.mxu0 0.0
    %2950 = vmatprep.subr.mxu0 0.0
    %2951 = vmatpush1.msra.mxu0 0.0
    %2952 = vmatprep.subr.mxu0 0.0
    %2953 = vmatpush1.msra.mxu0 0.0
    %2954 = vmatprep.subr.mxu0 0.0
    %2955 = vmatpush1.msra.mxu0 0.0
    %2956 = vmatprep.subr.mxu0 0.0
    %2957 = vmatpush1.msra.mxu0 0.0
    %2958 = vmatprep.subr.mxu0 0.0
    %2959 = vmatpush1.msra.mxu0 0.0
    %2960 = vmatprep.subr.mxu0 0.0
    %2961 = vmatpush1.msra.mxu0 0.0
    %2962 = vmatprep.subr.mxu0 0.0
    %2963 = vmatpush1.msra.mxu0 0.0
    %2964 = vmatprep.subr.mxu0 0.0
    %2965 = vmatpush1.msra.mxu0 0.0
    %2966 = vmatprep.subr.mxu0 0.0
    %2967 = vmatpush1.msra.mxu0 0.0
    %2968 = vmatprep.subr.mxu0 0.0
    %2969 = vmatpush1.msra.mxu0 0.0
    %2970 = vmatprep.subr.mxu0 0.0
    %2971 = vmatpush1.msra.mxu0 0.0
    %2972 = vmatprep.subr.mxu0 0.0
    %2973 = vmatpush1.msra.mxu0 0.0
    %2974 = vmatprep.subr.mxu0 0.0
    %2975 = vmatpush1.msra.mxu0 0.0
    %2976 = vmatprep.subr.mxu0 0.0
    %2977 = vmatpush1.msra.mxu0 0.0
    %2978 = vmatprep.subr.mxu0 0.0
    %2979 = vmatpush1.msra.mxu0 0.0
    %2980 = vmatprep.subr.mxu0 0.0
    %2981 = vmatpush1.msra.mxu0 0.0
    %2982 = vmatprep.subr.mxu0 0.0
    %2983 = vmatpush1.msra.mxu0 0.0
    %2984 = vmatprep.subr.mxu0 0.0
    %2985 = vmatpush1.msra.mxu0 0.0
    %2986 = vmatprep.subr.mxu0 0.0
    %2987 = vmatpush1.msra.mxu0 0.0
    %2988 = vmatprep.subr.mxu0 0.0
    %2989 = vmatpush1.msra.mxu0 0.0
    %2990 = vmatprep.subr.mxu0 0.0
    %2991 = vmatpush1.msra.mxu0 0.0
    %2992 = vmatprep.subr.mxu0 0.0
    %2993 = vmatpush1.msra.mxu0 0.0
    %2994 = vmatprep.subr.mxu0 0.0
    %2995 = vmatpush1.msra.mxu0 0.0
    %2996 = vmatprep.mubr.f32.mxu0 0.0
    %v2997 = vand.u32 %v2184, 4294901760
    %2998 = vmatmul.mubr.f32.gmra.mrb[0].mxu0 %v2997
    %v2999 = vpop.f32.mrb[0].mxu0
    %v3000 = vadd.f32 %v2879, %v2999
    %v3001 = vpop.f32.mrb[0].mxu0
    %3002 = vmatprep.mubr.f32.mxu0 0.0
    %v3003 = vand.u32 %v2187, 4294901760
    %3004 = vmatmul.mubr.f32.gmra.mrb[0].mxu0 %v3003
    %v3005 = vpop.f32.mrb[0].mxu0
    %v3006 = vadd.f32 %v2885, %v3005
    %v3007 = vpop.f32.mrb[0].mxu0
    %3008 = vmatprep.mubr.f32.mxu0 0.0
    %v3009 = vand.u32 %v2190, 4294901760
    %3010 = vmatmul.mubr.f32.gmra.mrb[0].mxu0 %v3009
    %v3011 = vpop.f32.mrb[0].mxu0
    %v3012 = vadd.f32 %v2891, %v3011
    %v3013 = vpop.f32.mrb[0].mxu0
    %3014 = vmatprep.mubr.f32.mxu0 0.0
    %v3015 = vand.u32 %v2193, 4294901760
    %3016 = vmatmul.mubr.f32.gmra.mrb[0].mxu0 %v3015
    %v3017 = vpop.f32.mrb[0].mxu0
    %v3018 = vadd.f32 %v2897, %v3017
    %v3019 = vpop.f32.mrb[0].mxu0
    %3020 = vmatprep.mubr.f32.mxu0 0.0
    %v3021 = vand.u32 %v2196, 4294901760
    %3022 = vmatmul.mubr.f32.gmra.mrb[0].mxu0 %v3021
    %v3023 = vpop.f32.mrb[0].mxu0
    %v3024 = vadd.f32 %v2903, %v3023
    %v3025 = vpop.f32.mrb[0].mxu0
    %3026 = vmatprep.mubr.f32.mxu0 0.0
    %v3027 = vand.u32 %v2199, 4294901760
    %3028 = vmatmul.mubr.f32.gmra.mrb[0].mxu0 %v3027
    %v3029 = vpop.f32.mrb[0].mxu0
    %v3030 = vadd.f32 %v2909, %v3029
    %v3031 = vpop.f32.mrb[0].mxu0
    %3032 = vmatprep.mubr.f32.mxu0 0.0
    %v3033 = vand.u32 %v2202, 4294901760
    %3034 = vmatmul.mubr.f32.gmra.mrb[0].mxu0 %v3033
    %v3035 = vpop.f32.mrb[0].mxu0
    %v3036 = vadd.f32 %v2915, %v3035
    %v3037 = vpop.f32.mrb[0].mxu0
    %3038 = vmatprep.mubr.f32.mxu0 0.0
    %v3039 = vand.u32 %v2205, 4294901760
    %3040 = vmatmul.mubr.f32.gmra.mrb[0].mxu0 %v3039
    %v3041 = vpop.f32.mrb[0].mxu0
    %v3042 = vadd.f32 %v2921, %v3041
    %v3043 = vpop.f32.mrb[0].mxu0
    %3044 = vdwg.mxu0
    %v3046 = vsel %vm285, %v2093, 0
    %v3049 = vsel %vm285, %v2094, 0
    %v3052 = vsel %vm285, %v2095, 0
    %v3055 = vsel %vm285, %v2096, 0
    %v3058 = vsel %vm285, %v2097, 0
    %v3061 = vsel %vm285, %v2098, 0
    %v3064 = vsel %vm285, %v2099, 0
    %v3067 = vsel %vm285, %v2100, 0
    %3069 = vmatprep.subr.mxu0 0.0
    %v3070 = vand.u32 %v186, 4294901760
    %3071 = vmatpush1.msra.mxu0 %v3070
    %3072 = vmatprep.subr.mxu0 0.0
    %v3073 = vand.u32 %v187, 4294901760
    %3074 = vmatpush1.msra.mxu0 %v3073
    %3075 = vmatprep.subr.mxu0 0.0
    %v3076 = vand.u32 %v188, 4294901760
    %3077 = vmatpush1.msra.mxu0 %v3076
    %3078 = vmatprep.subr.mxu0 0.0
    %v3079 = vand.u32 %v189, 4294901760
    %3080 = vmatpush1.msra.mxu0 %v3079
    %3081 = vmatprep.subr.mxu0 0.0
    %v3082 = vand.u32 %v190, 4294901760
    %3083 = vmatpush1.msra.mxu0 %v3082
    %3084 = vmatprep.subr.mxu0 0.0
    %v3085 = vand.u32 %v191, 4294901760
    %3086 = vmatpush1.msra.mxu0 %v3085
    %3087 = vmatprep.subr.mxu0 0.0
    %v3088 = vand.u32 %v192, 4294901760
    %3089 = vmatpush1.msra.mxu0 %v3088
    %3090 = vmatprep.subr.mxu0 0.0
    %v3091 = vand.u32 %v193, 4294901760
    %3092 = vmatpush1.msra.mxu0 %v3091
    %3093 = vmatprep.subr.mxu0 0.0
    %3094 = vmatpush1.msra.mxu0 0.0
    %3095 = vmatprep.subr.mxu0 0.0
    %3096 = vmatpush1.msra.mxu0 0.0
    %3097 = vmatprep.subr.mxu0 0.0
    %3098 = vmatpush1.msra.mxu0 0.0
    %3099 = vmatprep.subr.mxu0 0.0
    %3100 = vmatpush1.msra.mxu0 0.0
    %3101 = vmatprep.subr.mxu0 0.0
    %3102 = vmatpush1.msra.mxu0 0.0
    %3103 = vmatprep.subr.mxu0 0.0
    %3104 = vmatpush1.msra.mxu0 0.0
    %3105 = vmatprep.subr.mxu0 0.0
    %3106 = vmatpush1.msra.mxu0 0.0
    %3107 = vmatprep.subr.mxu0 0.0
    %3108 = vmatpush1.msra.mxu0 0.0
    %3109 = vmatprep.subr.mxu0 0.0
    %3110 = vmatpush1.msra.mxu0 0.0
    %3111 = vmatprep.subr.mxu0 0.0
    %3112 = vmatpush1.msra.mxu0 0.0
    %3113 = vmatprep.subr.mxu0 0.0
    %3114 = vmatpush1.msra.mxu0 0.0
    %3115 = vmatprep.subr.mxu0 0.0
    %3116 = vmatpush1.msra.mxu0 0.0
    %3117 = vmatprep.subr.mxu0 0.0
    %3118 = vmatpush1.msra.mxu0 0.0
    %3119 = vmatprep.subr.mxu0 0.0
    %3120 = vmatpush1.msra.mxu0 0.0
    %3121 = vmatprep.subr.mxu0 0.0
    %3122 = vmatpush1.msra.mxu0 0.0
    %3123 = vmatprep.subr.mxu0 0.0
    %3124 = vmatpush1.msra.mxu0 0.0
    %3125 = vmatprep.subr.mxu0 0.0
    %3126 = vmatpush1.msra.mxu0 0.0
    %3127 = vmatprep.subr.mxu0 0.0
    %3128 = vmatpush1.msra.mxu0 0.0
    %3129 = vmatprep.subr.mxu0 0.0
    %3130 = vmatpush1.msra.mxu0 0.0
    %3131 = vmatprep.subr.mxu0 0.0
    %3132 = vmatpush1.msra.mxu0 0.0
    %3133 = vmatprep.subr.mxu0 0.0
    %3134 = vmatpush1.msra.mxu0 0.0
    %3135 = vmatprep.subr.mxu0 0.0
    %3136 = vmatpush1.msra.mxu0 0.0
    %3137 = vmatprep.subr.mxu0 0.0
    %3138 = vmatpush1.msra.mxu0 0.0
    %3139 = vmatprep.subr.mxu0 0.0
    %3140 = vmatpush1.msra.mxu0 0.0
    %3141 = vmatprep.mubr.f32.mxu0 0.0
    %v3142 = vand.u32 %v3046, 4294901760
    %v3143 = vsub.f32 %v3046, %v3142
    %v3144 = vand.u32 %v3143, 4294901760
    %v3145 = vsub.f32 %v3143, %v3144
    %v3146 = vand.u32 %v3145, 4294901760
    %3147 = vmatmul.mubr.f32.gmra.mrb[0].mxu0 %v3146
    %v3148 = vpop.f32.mrb[0].mxu0
    %v3149 = vadd.f32 %v3000, %v3148
    %v3150 = vpop.f32.mrb[0].mxu0
    %3151 = vmatprep.mubr.f32.mxu0 0.0
    %v3152 = vand.u32 %v3049, 4294901760
    %v3153 = vsub.f32 %v3049, %v3152
    %v3154 = vand.u32 %v3153, 4294901760
    %v3155 = vsub.f32 %v3153, %v3154
    %v3156 = vand.u32 %v3155, 4294901760
    %3157 = vmatmul.mubr.f32.gmra.mrb[0].mxu0 %v3156
    %v3158 = vpop.f32.mrb[0].mxu0
    %v3159 = vadd.f32 %v3006, %v3158
    %v3160 = vpop.f32.mrb[0].mxu0
    %3161 = vmatprep.mubr.f32.mxu0 0.0
    %v3162 = vand.u32 %v3052, 4294901760
    %v3163 = vsub.f32 %v3052, %v3162
    %v3164 = vand.u32 %v3163, 4294901760
    %v3165 = vsub.f32 %v3163, %v3164
    %v3166 = vand.u32 %v3165, 4294901760
    %3167 = vmatmul.mubr.f32.gmra.mrb[0].mxu0 %v3166
    %v3168 = vpop.f32.mrb[0].mxu0
    %v3169 = vadd.f32 %v3012, %v3168
    %v3170 = vpop.f32.mrb[0].mxu0
    %3171 = vmatprep.mubr.f32.mxu0 0.0
    %v3172 = vand.u32 %v3055, 4294901760
    %v3173 = vsub.f32 %v3055, %v3172
    %v3174 = vand.u32 %v3173, 4294901760
    %v3175 = vsub.f32 %v3173, %v3174
    %v3176 = vand.u32 %v3175, 4294901760
    %3177 = vmatmul.mubr.f32.gmra.mrb[0].mxu0 %v3176
    %v3178 = vpop.f32.mrb[0].mxu0
    %v3179 = vadd.f32 %v3018, %v3178
    %v3180 = vpop.f32.mrb[0].mxu0
    %3181 = vmatprep.mubr.f32.mxu0 0.0
    %v3182 = vand.u32 %v3058, 4294901760
    %v3183 = vsub.f32 %v3058, %v3182
    %v3184 = vand.u32 %v3183, 4294901760
    %v3185 = vsub.f32 %v3183, %v3184
    %v3186 = vand.u32 %v3185, 4294901760
    %3187 = vmatmul.mubr.f32.gmra.mrb[0].mxu0 %v3186
    %v3188 = vpop.f32.mrb[0].mxu0
    %v3189 = vadd.f32 %v3024, %v3188
    %v3190 = vpop.f32.mrb[0].mxu0
    %3191 = vmatprep.mubr.f32.mxu0 0.0
    %v3192 = vand.u32 %v3061, 4294901760
    %v3193 = vsub.f32 %v3061, %v3192
    %v3194 = vand.u32 %v3193, 4294901760
    %v3195 = vsub.f32 %v3193, %v3194
    %v3196 = vand.u32 %v3195, 4294901760
    %3197 = vmatmul.mubr.f32.gmra.mrb[0].mxu0 %v3196
    %v3198 = vpop.f32.mrb[0].mxu0
    %v3199 = vadd.f32 %v3030, %v3198
    %v3200 = vpop.f32.mrb[0].mxu0
    %3201 = vmatprep.mubr.f32.mxu0 0.0
    %v3202 = vand.u32 %v3064, 4294901760
    %v3203 = vsub.f32 %v3064, %v3202
    %v3204 = vand.u32 %v3203, 4294901760
    %v3205 = vsub.f32 %v3203, %v3204
    %v3206 = vand.u32 %v3205, 4294901760
    %3207 = vmatmul.mubr.f32.gmra.mrb[0].mxu0 %v3206
    %v3208 = vpop.f32.mrb[0].mxu0
    %v3209 = vadd.f32 %v3036, %v3208
    %v3210 = vpop.f32.mrb[0].mxu0
    %3211 = vmatprep.mubr.f32.mxu0 0.0
    %v3212 = vand.u32 %v3067, 4294901760
    %v3213 = vsub.f32 %v3067, %v3212
    %v3214 = vand.u32 %v3213, 4294901760
    %v3215 = vsub.f32 %v3213, %v3214
    %v3216 = vand.u32 %v3215, 4294901760
    %3217 = vmatmul.mubr.f32.gmra.mrb[0].mxu0 %v3216
    %v3218 = vpop.f32.mrb[0].mxu0
    %v3219 = vadd.f32 %v3042, %v3218
    %v3220 = vpop.f32.mrb[0].mxu0
    %3221 = vdwg.mxu0
    %3222 = vmatprep.subr.mxu0 0.0
    %v3223 = vand.u32 %v186, 4294901760
    %v3224 = vsub.f32 %v186, %v3223
    %v3225 = vand.u32 %v3224, 4294901760
    %v3226 = vsub.f32 %v3224, %v3225
    %v3227 = vand.u32 %v3226, 4294901760
    %3228 = vmatpush1.msra.mxu0 %v3227
    %3229 = vmatprep.subr.mxu0 0.0
    %v3230 = vand.u32 %v187, 4294901760
    %v3231 = vsub.f32 %v187, %v3230
    %v3232 = vand.u32 %v3231, 4294901760
    %v3233 = vsub.f32 %v3231, %v3232
    %v3234 = vand.u32 %v3233, 4294901760
    %3235 = vmatpush1.msra.mxu0 %v3234
    %3236 = vmatprep.subr.mxu0 0.0
    %v3237 = vand.u32 %v188, 4294901760
    %v3238 = vsub.f32 %v188, %v3237
    %v3239 = vand.u32 %v3238, 4294901760
    %v3240 = vsub.f32 %v3238, %v3239
    %v3241 = vand.u32 %v3240, 4294901760
    %3242 = vmatpush1.msra.mxu0 %v3241
    %3243 = vmatprep.subr.mxu0 0.0
    %v3244 = vand.u32 %v189, 4294901760
    %v3245 = vsub.f32 %v189, %v3244
    %v3246 = vand.u32 %v3245, 4294901760
    %v3247 = vsub.f32 %v3245, %v3246
    %v3248 = vand.u32 %v3247, 4294901760
    %3249 = vmatpush1.msra.mxu0 %v3248
    %3250 = vmatprep.subr.mxu0 0.0
    %v3251 = vand.u32 %v190, 4294901760
    %v3252 = vsub.f32 %v190, %v3251
    %v3253 = vand.u32 %v3252, 4294901760
    %v3254 = vsub.f32 %v3252, %v3253
    %v3255 = vand.u32 %v3254, 4294901760
    %3256 = vmatpush1.msra.mxu0 %v3255
    %3257 = vmatprep.subr.mxu0 0.0
    %v3258 = vand.u32 %v191, 4294901760
    %v3259 = vsub.f32 %v191, %v3258
    %v3260 = vand.u32 %v3259, 4294901760
    %v3261 = vsub.f32 %v3259, %v3260
    %v3262 = vand.u32 %v3261, 4294901760
    %3263 = vmatpush1.msra.mxu0 %v3262
    %3264 = vmatprep.subr.mxu0 0.0
    %v3265 = vand.u32 %v192, 4294901760
    %v3266 = vsub.f32 %v192, %v3265
    %v3267 = vand.u32 %v3266, 4294901760
    %v3268 = vsub.f32 %v3266, %v3267
    %v3269 = vand.u32 %v3268, 4294901760
    %3270 = vmatpush1.msra.mxu0 %v3269
    %3271 = vmatprep.subr.mxu0 0.0
    %v3272 = vand.u32 %v193, 4294901760
    %v3273 = vsub.f32 %v193, %v3272
    %v3274 = vand.u32 %v3273, 4294901760
    %v3275 = vsub.f32 %v3273, %v3274
    %v3276 = vand.u32 %v3275, 4294901760
    %3277 = vmatpush1.msra.mxu0 %v3276
    %3278 = vmatprep.subr.mxu0 0.0
    %3279 = vmatpush1.msra.mxu0 0.0
    %3280 = vmatprep.subr.mxu0 0.0
    %3281 = vmatpush1.msra.mxu0 0.0
    %3282 = vmatprep.subr.mxu0 0.0
    %3283 = vmatpush1.msra.mxu0 0.0
    %3284 = vmatprep.subr.mxu0 0.0
    %3285 = vmatpush1.msra.mxu0 0.0
    %3286 = vmatprep.subr.mxu0 0.0
    %3287 = vmatpush1.msra.mxu0 0.0
    %3288 = vmatprep.subr.mxu0 0.0
    %3289 = vmatpush1.msra.mxu0 0.0
    %3290 = vmatprep.subr.mxu0 0.0
    %3291 = vmatpush1.msra.mxu0 0.0
    %3292 = vmatprep.subr.mxu0 0.0
    %3293 = vmatpush1.msra.mxu0 0.0
    %3294 = vmatprep.subr.mxu0 0.0
    %3295 = vmatpush1.msra.mxu0 0.0
    %3296 = vmatprep.subr.mxu0 0.0
    %3297 = vmatpush1.msra.mxu0 0.0
    %3298 = vmatprep.subr.mxu0 0.0
    %3299 = vmatpush1.msra.mxu0 0.0
    %3300 = vmatprep.subr.mxu0 0.0
    %3301 = vmatpush1.msra.mxu0 0.0
    %3302 = vmatprep.subr.mxu0 0.0
    %3303 = vmatpush1.msra.mxu0 0.0
    %3304 = vmatprep.subr.mxu0 0.0
    %3305 = vmatpush1.msra.mxu0 0.0
    %3306 = vmatprep.subr.mxu0 0.0
    %3307 = vmatpush1.msra.mxu0 0.0
    %3308 = vmatprep.subr.mxu0 0.0
    %3309 = vmatpush1.msra.mxu0 0.0
    %3310 = vmatprep.subr.mxu0 0.0
    %3311 = vmatpush1.msra.mxu0 0.0
    %3312 = vmatprep.subr.mxu0 0.0
    %3313 = vmatpush1.msra.mxu0 0.0
    %3314 = vmatprep.subr.mxu0 0.0
    %3315 = vmatpush1.msra.mxu0 0.0
    %3316 = vmatprep.subr.mxu0 0.0
    %3317 = vmatpush1.msra.mxu0 0.0
    %3318 = vmatprep.subr.mxu0 0.0
    %3319 = vmatpush1.msra.mxu0 0.0
    %3320 = vmatprep.subr.mxu0 0.0
    %3321 = vmatpush1.msra.mxu0 0.0
    %3322 = vmatprep.subr.mxu0 0.0
    %3323 = vmatpush1.msra.mxu0 0.0
    %3324 = vmatprep.subr.mxu0 0.0
    %3325 = vmatpush1.msra.mxu0 0.0
    %3326 = vmatprep.mubr.f32.mxu0 0.0
    %v3327 = vand.u32 %v3046, 4294901760
    %3328 = vmatmul.mubr.f32.gmra.mrb[0].mxu0 %v3327
    %v3329 = vpop.f32.mrb[0].mxu0
    %v3330 = vadd.f32 %v3149, %v3329
    %v3331 = vpop.f32.mrb[0].mxu0
    %3332 = vmatprep.mubr.f32.mxu0 0.0
    %v3333 = vand.u32 %v3049, 4294901760
    %3334 = vmatmul.mubr.f32.gmra.mrb[0].mxu0 %v3333
    %v3335 = vpop.f32.mrb[0].mxu0
    %v3336 = vadd.f32 %v3159, %v3335
    %v3337 = vpop.f32.mrb[0].mxu0
    %3338 = vmatprep.mubr.f32.mxu0 0.0
    %v3339 = vand.u32 %v3052, 4294901760
    %3340 = vmatmul.mubr.f32.gmra.mrb[0].mxu0 %v3339
    %v3341 = vpop.f32.mrb[0].mxu0
    %v3342 = vadd.f32 %v3169, %v3341
    %v3343 = vpop.f32.mrb[0].mxu0
    %3344 = vmatprep.mubr.f32.mxu0 0.0
    %v3345 = vand.u32 %v3055, 4294901760
    %3346 = vmatmul.mubr.f32.gmra.mrb[0].mxu0 %v3345
    %v3347 = vpop.f32.mrb[0].mxu0
    %v3348 = vadd.f32 %v3179, %v3347
    %v3349 = vpop.f32.mrb[0].mxu0
    %3350 = vmatprep.mubr.f32.mxu0 0.0
    %v3351 = vand.u32 %v3058, 4294901760
    %3352 = vmatmul.mubr.f32.gmra.mrb[0].mxu0 %v3351
    %v3353 = vpop.f32.mrb[0].mxu0
    %v3354 = vadd.f32 %v3189, %v3353
    %v3355 = vpop.f32.mrb[0].mxu0
    %3356 = vmatprep.mubr.f32.mxu0 0.0
    %v3357 = vand.u32 %v3061, 4294901760
    %3358 = vmatmul.mubr.f32.gmra.mrb[0].mxu0 %v3357
    %v3359 = vpop.f32.mrb[0].mxu0
    %v3360 = vadd.f32 %v3199, %v3359
    %v3361 = vpop.f32.mrb[0].mxu0
    %3362 = vmatprep.mubr.f32.mxu0 0.0
    %v3363 = vand.u32 %v3064, 4294901760
    %3364 = vmatmul.mubr.f32.gmra.mrb[0].mxu0 %v3363
    %v3365 = vpop.f32.mrb[0].mxu0
    %v3366 = vadd.f32 %v3209, %v3365
    %v3367 = vpop.f32.mrb[0].mxu0
    %3368 = vmatprep.mubr.f32.mxu0 0.0
    %v3369 = vand.u32 %v3067, 4294901760
    %3370 = vmatmul.mubr.f32.gmra.mrb[0].mxu0 %v3369
    %v3371 = vpop.f32.mrb[0].mxu0
    %v3372 = vadd.f32 %v3219, %v3371
    %v3373 = vpop.f32.mrb[0].mxu0
    %3374 = vdwg.mxu0
    %3375 = vmatprep.subr.mxu0 0.0
    %v3376 = vand.u32 %v186, 4294901760
    %v3377 = vsub.f32 %v186, %v3376
    %3378 = vmatpush1.msra.mxu0 %v3377
    %3379 = vmatprep.subr.mxu0 0.0
    %v3380 = vand.u32 %v187, 4294901760
    %v3381 = vsub.f32 %v187, %v3380
    %3382 = vmatpush1.msra.mxu0 %v3381
    %3383 = vmatprep.subr.mxu0 0.0
    %v3384 = vand.u32 %v188, 4294901760
    %v3385 = vsub.f32 %v188, %v3384
    %3386 = vmatpush1.msra.mxu0 %v3385
    %3387 = vmatprep.subr.mxu0 0.0
    %v3388 = vand.u32 %v189, 4294901760
    %v3389 = vsub.f32 %v189, %v3388
    %3390 = vmatpush1.msra.mxu0 %v3389
    %3391 = vmatprep.subr.mxu0 0.0
    %v3392 = vand.u32 %v190, 4294901760
    %v3393 = vsub.f32 %v190, %v3392
    %3394 = vmatpush1.msra.mxu0 %v3393
    %3395 = vmatprep.subr.mxu0 0.0
    %v3396 = vand.u32 %v191, 4294901760
    %v3397 = vsub.f32 %v191, %v3396
    %3398 = vmatpush1.msra.mxu0 %v3397
    %3399 = vmatprep.subr.mxu0 0.0
    %v3400 = vand.u32 %v192, 4294901760
    %v3401 = vsub.f32 %v192, %v3400
    %3402 = vmatpush1.msra.mxu0 %v3401
    %3403 = vmatprep.subr.mxu0 0.0
    %v3404 = vand.u32 %v193, 4294901760
    %v3405 = vsub.f32 %v193, %v3404
    %3406 = vmatpush1.msra.mxu0 %v3405
    %3407 = vmatprep.subr.mxu0 0.0
    %3408 = vmatpush1.msra.mxu0 0.0
    %3409 = vmatprep.subr.mxu0 0.0
    %3410 = vmatpush1.msra.mxu0 0.0
    %3411 = vmatprep.subr.mxu0 0.0
    %3412 = vmatpush1.msra.mxu0 0.0
    %3413 = vmatprep.subr.mxu0 0.0
    %3414 = vmatpush1.msra.mxu0 0.0
    %3415 = vmatprep.subr.mxu0 0.0
    %3416 = vmatpush1.msra.mxu0 0.0
    %3417 = vmatprep.subr.mxu0 0.0
    %3418 = vmatpush1.msra.mxu0 0.0
    %3419 = vmatprep.subr.mxu0 0.0
    %3420 = vmatpush1.msra.mxu0 0.0
    %3421 = vmatprep.subr.mxu0 0.0
    %3422 = vmatpush1.msra.mxu0 0.0
    %3423 = vmatprep.subr.mxu0 0.0
    %3424 = vmatpush1.msra.mxu0 0.0
    %3425 = vmatprep.subr.mxu0 0.0
    %3426 = vmatpush1.msra.mxu0 0.0
    %3427 = vmatprep.subr.mxu0 0.0
    %3428 = vmatpush1.msra.mxu0 0.0
    %3429 = vmatprep.subr.mxu0 0.0
    %3430 = vmatpush1.msra.mxu0 0.0
    %3431 = vmatprep.subr.mxu0 0.0
    %3432 = vmatpush1.msra.mxu0 0.0
    %3433 = vmatprep.subr.mxu0 0.0
    %3434 = vmatpush1.msra.mxu0 0.0
    %3435 = vmatprep.subr.mxu0 0.0
    %3436 = vmatpush1.msra.mxu0 0.0
    %3437 = vmatprep.subr.mxu0 0.0
    %3438 = vmatpush1.msra.mxu0 0.0
    %3439 = vmatprep.subr.mxu0 0.0
    %3440 = vmatpush1.msra.mxu0 0.0
    %3441 = vmatprep.subr.mxu0 0.0
    %3442 = vmatpush1.msra.mxu0 0.0
    %3443 = vmatprep.subr.mxu0 0.0
    %3444 = vmatpush1.msra.mxu0 0.0
    %3445 = vmatprep.subr.mxu0 0.0
    %3446 = vmatpush1.msra.mxu0 0.0
    %3447 = vmatprep.subr.mxu0 0.0
    %3448 = vmatpush1.msra.mxu0 0.0
    %3449 = vmatprep.subr.mxu0 0.0
    %3450 = vmatpush1.msra.mxu0 0.0
    %3451 = vmatprep.subr.mxu0 0.0
    %3452 = vmatpush1.msra.mxu0 0.0
    %3453 = vmatprep.subr.mxu0 0.0
    %3454 = vmatpush1.msra.mxu0 0.0
    %3455 = vmatprep.mubr.f32.mxu0 0.0
    %v3456 = vand.u32 %v3046, 4294901760
    %v3457 = vsub.f32 %v3046, %v3456
    %3458 = vmatmul.mubr.f32.gmra.mrb[0].mxu0 %v3457
    %v3459 = vpop.f32.mrb[0].mxu0
    %v3460 = vadd.f32 %v3330, %v3459
    %v3461 = vpop.f32.mrb[0].mxu0
    %3462 = vmatprep.mubr.f32.mxu0 0.0
    %v3463 = vand.u32 %v3049, 4294901760
    %v3464 = vsub.f32 %v3049, %v3463
    %3465 = vmatmul.mubr.f32.gmra.mrb[0].mxu0 %v3464
    %v3466 = vpop.f32.mrb[0].mxu0
    %v3467 = vadd.f32 %v3336, %v3466
    %v3468 = vpop.f32.mrb[0].mxu0
    %3469 = vmatprep.mubr.f32.mxu0 0.0
    %v3470 = vand.u32 %v3052, 4294901760
    %v3471 = vsub.f32 %v3052, %v3470
    %3472 = vmatmul.mubr.f32.gmra.mrb[0].mxu0 %v3471
    %v3473 = vpop.f32.mrb[0].mxu0
    %v3474 = vadd.f32 %v3342, %v3473
    %v3475 = vpop.f32.mrb[0].mxu0
    %3476 = vmatprep.mubr.f32.mxu0 0.0
    %v3477 = vand.u32 %v3055, 4294901760
    %v3478 = vsub.f32 %v3055, %v3477
    %3479 = vmatmul.mubr.f32.gmra.mrb[0].mxu0 %v3478
    %v3480 = vpop.f32.mrb[0].mxu0
    %v3481 = vadd.f32 %v3348, %v3480
    %v3482 = vpop.f32.mrb[0].mxu0
    %3483 = vmatprep.mubr.f32.mxu0 0.0
    %v3484 = vand.u32 %v3058, 4294901760
    %v3485 = vsub.f32 %v3058, %v3484
    %3486 = vmatmul.mubr.f32.gmra.mrb[0].mxu0 %v3485
    %v3487 = vpop.f32.mrb[0].mxu0
    %v3488 = vadd.f32 %v3354, %v3487
    %v3489 = vpop.f32.mrb[0].mxu0
    %3490 = vmatprep.mubr.f32.mxu0 0.0
    %v3491 = vand.u32 %v3061, 4294901760
    %v3492 = vsub.f32 %v3061, %v3491
    %3493 = vmatmul.mubr.f32.gmra.mrb[0].mxu0 %v3492
    %v3494 = vpop.f32.mrb[0].mxu0
    %v3495 = vadd.f32 %v3360, %v3494
    %v3496 = vpop.f32.mrb[0].mxu0
    %3497 = vmatprep.mubr.f32.mxu0 0.0
    %v3498 = vand.u32 %v3064, 4294901760
    %v3499 = vsub.f32 %v3064, %v3498
    %3500 = vmatmul.mubr.f32.gmra.mrb[0].mxu0 %v3499
    %v3501 = vpop.f32.mrb[0].mxu0
    %v3502 = vadd.f32 %v3366, %v3501
    %v3503 = vpop.f32.mrb[0].mxu0
    %3504 = vmatprep.mubr.f32.mxu0 0.0
    %v3505 = vand.u32 %v3067, 4294901760
    %v3506 = vsub.f32 %v3067, %v3505
    %3507 = vmatmul.mubr.f32.gmra.mrb[0].mxu0 %v3506
    %v3508 = vpop.f32.mrb[0].mxu0
    %v3509 = vadd.f32 %v3372, %v3508
    %v3510 = vpop.f32.mrb[0].mxu0
    %3511 = vdwg.mxu0
    %3512 = vmatprep.subr.mxu0 0.0
    %v3513 = vand.u32 %v186, 4294901760
    %3514 = vmatpush1.msra.mxu0 %v3513
    %3515 = vmatprep.subr.mxu0 0.0
    %v3516 = vand.u32 %v187, 4294901760
    %3517 = vmatpush1.msra.mxu0 %v3516
    %3518 = vmatprep.subr.mxu0 0.0
    %v3519 = vand.u32 %v188, 4294901760
    %3520 = vmatpush1.msra.mxu0 %v3519
    %3521 = vmatprep.subr.mxu0 0.0
    %v3522 = vand.u32 %v189, 4294901760
    %3523 = vmatpush1.msra.mxu0 %v3522
    %3524 = vmatprep.subr.mxu0 0.0
    %v3525 = vand.u32 %v190, 4294901760
    %3526 = vmatpush1.msra.mxu0 %v3525
    %3527 = vmatprep.subr.mxu0 0.0
    %v3528 = vand.u32 %v191, 4294901760
    %3529 = vmatpush1.msra.mxu0 %v3528
    %3530 = vmatprep.subr.mxu0 0.0
    %v3531 = vand.u32 %v192, 4294901760
    %3532 = vmatpush1.msra.mxu0 %v3531
    %3533 = vmatprep.subr.mxu0 0.0
    %v3534 = vand.u32 %v193, 4294901760
    %3535 = vmatpush1.msra.mxu0 %v3534
    %3536 = vmatprep.subr.mxu0 0.0
    %3537 = vmatpush1.msra.mxu0 0.0
    %3538 = vmatprep.subr.mxu0 0.0
    %3539 = vmatpush1.msra.mxu0 0.0
    %3540 = vmatprep.subr.mxu0 0.0
    %3541 = vmatpush1.msra.mxu0 0.0
    %3542 = vmatprep.subr.mxu0 0.0
    %3543 = vmatpush1.msra.mxu0 0.0
    %3544 = vmatprep.subr.mxu0 0.0
    %3545 = vmatpush1.msra.mxu0 0.0
    %3546 = vmatprep.subr.mxu0 0.0
    %3547 = vmatpush1.msra.mxu0 0.0
    %3548 = vmatprep.subr.mxu0 0.0
    %3549 = vmatpush1.msra.mxu0 0.0
    %3550 = vmatprep.subr.mxu0 0.0
    %3551 = vmatpush1.msra.mxu0 0.0
    %3552 = vmatprep.subr.mxu0 0.0
    %3553 = vmatpush1.msra.mxu0 0.0
    %3554 = vmatprep.subr.mxu0 0.0
    %3555 = vmatpush1.msra.mxu0 0.0
    %3556 = vmatprep.subr.mxu0 0.0
    %3557 = vmatpush1.msra.mxu0 0.0
    %3558 = vmatprep.subr.mxu0 0.0
    %3559 = vmatpush1.msra.mxu0 0.0
    %3560 = vmatprep.subr.mxu0 0.0
    %3561 = vmatpush1.msra.mxu0 0.0
    %3562 = vmatprep.subr.mxu0 0.0
    %3563 = vmatpush1.msra.mxu0 0.0
    %3564 = vmatprep.subr.mxu0 0.0
    %3565 = vmatpush1.msra.mxu0 0.0
    %3566 = vmatprep.subr.mxu0 0.0
    %3567 = vmatpush1.msra.mxu0 0.0
    %3568 = vmatprep.subr.mxu0 0.0
    %3569 = vmatpush1.msra.mxu0 0.0
    %3570 = vmatprep.subr.mxu0 0.0
    %3571 = vmatpush1.msra.mxu0 0.0
    %3572 = vmatprep.subr.mxu0 0.0
    %3573 = vmatpush1.msra.mxu0 0.0
    %3574 = vmatprep.subr.mxu0 0.0
    %3575 = vmatpush1.msra.mxu0 0.0
    %3576 = vmatprep.subr.mxu0 0.0
    %3577 = vmatpush1.msra.mxu0 0.0
    %3578 = vmatprep.subr.mxu0 0.0
    %3579 = vmatpush1.msra.mxu0 0.0
    %3580 = vmatprep.subr.mxu0 0.0
    %3581 = vmatpush1.msra.mxu0 0.0
    %3582 = vmatprep.subr.mxu0 0.0
    %3583 = vmatpush1.msra.mxu0 0.0
    %3584 = vmatprep.mubr.f32.mxu0 0.0
    %v3585 = vand.u32 %v3046, 4294901760
    %v3586 = vsub.f32 %v3046, %v3585
    %v3587 = vand.u32 %v3586, 4294901760
    %3588 = vmatmul.mubr.f32.gmra.mrb[0].mxu0 %v3587
    %v3589 = vpop.f32.mrb[0].mxu0
    %v3590 = vadd.f32 %v3460, %v3589
    %v3591 = vpop.f32.mrb[0].mxu0
    %3592 = vmatprep.mubr.f32.mxu0 0.0
    %v3593 = vand.u32 %v3049, 4294901760
    %v3594 = vsub.f32 %v3049, %v3593
    %v3595 = vand.u32 %v3594, 4294901760
    %3596 = vmatmul.mubr.f32.gmra.mrb[0].mxu0 %v3595
    %v3597 = vpop.f32.mrb[0].mxu0
    %v3598 = vadd.f32 %v3467, %v3597
    %v3599 = vpop.f32.mrb[0].mxu0
    %3600 = vmatprep.mubr.f32.mxu0 0.0
    %v3601 = vand.u32 %v3052, 4294901760
    %v3602 = vsub.f32 %v3052, %v3601
    %v3603 = vand.u32 %v3602, 4294901760
    %3604 = vmatmul.mubr.f32.gmra.mrb[0].mxu0 %v3603
    %v3605 = vpop.f32.mrb[0].mxu0
    %v3606 = vadd.f32 %v3474, %v3605
    %v3607 = vpop.f32.mrb[0].mxu0
    %3608 = vmatprep.mubr.f32.mxu0 0.0
    %v3609 = vand.u32 %v3055, 4294901760
    %v3610 = vsub.f32 %v3055, %v3609
    %v3611 = vand.u32 %v3610, 4294901760
    %3612 = vmatmul.mubr.f32.gmra.mrb[0].mxu0 %v3611
    %v3613 = vpop.f32.mrb[0].mxu0
    %v3614 = vadd.f32 %v3481, %v3613
    %v3615 = vpop.f32.mrb[0].mxu0
    %3616 = vmatprep.mubr.f32.mxu0 0.0
    %v3617 = vand.u32 %v3058, 4294901760
    %v3618 = vsub.f32 %v3058, %v3617
    %v3619 = vand.u32 %v3618, 4294901760
    %3620 = vmatmul.mubr.f32.gmra.mrb[0].mxu0 %v3619
    %v3621 = vpop.f32.mrb[0].mxu0
    %v3622 = vadd.f32 %v3488, %v3621
    %v3623 = vpop.f32.mrb[0].mxu0
    %3624 = vmatprep.mubr.f32.mxu0 0.0
    %v3625 = vand.u32 %v3061, 4294901760
    %v3626 = vsub.f32 %v3061, %v3625
    %v3627 = vand.u32 %v3626, 4294901760
    %3628 = vmatmul.mubr.f32.gmra.mrb[0].mxu0 %v3627
    %v3629 = vpop.f32.mrb[0].mxu0
    %v3630 = vadd.f32 %v3495, %v3629
    %v3631 = vpop.f32.mrb[0].mxu0
    %3632 = vmatprep.mubr.f32.mxu0 0.0
    %v3633 = vand.u32 %v3064, 4294901760
    %v3634 = vsub.f32 %v3064, %v3633
    %v3635 = vand.u32 %v3634, 4294901760
    %3636 = vmatmul.mubr.f32.gmra.mrb[0].mxu0 %v3635
    %v3637 = vpop.f32.mrb[0].mxu0
    %v3638 = vadd.f32 %v3502, %v3637
    %v3639 = vpop.f32.mrb[0].mxu0
    %3640 = vmatprep.mubr.f32.mxu0 0.0
    %v3641 = vand.u32 %v3067, 4294901760
    %v3642 = vsub.f32 %v3067, %v3641
    %v3643 = vand.u32 %v3642, 4294901760
    %3644 = vmatmul.mubr.f32.gmra.mrb[0].mxu0 %v3643
    %v3645 = vpop.f32.mrb[0].mxu0
    %v3646 = vadd.f32 %v3509, %v3645
    %v3647 = vpop.f32.mrb[0].mxu0
    %3648 = vdwg.mxu0
    %3649 = vmatprep.subr.mxu0 0.0
    %v3650 = vand.u32 %v186, 4294901760
    %v3651 = vsub.f32 %v186, %v3650
    %v3652 = vand.u32 %v3651, 4294901760
    %3653 = vmatpush1.msra.mxu0 %v3652
    %3654 = vmatprep.subr.mxu0 0.0
    %v3655 = vand.u32 %v187, 4294901760
    %v3656 = vsub.f32 %v187, %v3655
    %v3657 = vand.u32 %v3656, 4294901760
    %3658 = vmatpush1.msra.mxu0 %v3657
    %3659 = vmatprep.subr.mxu0 0.0
    %v3660 = vand.u32 %v188, 4294901760
    %v3661 = vsub.f32 %v188, %v3660
    %v3662 = vand.u32 %v3661, 4294901760
    %3663 = vmatpush1.msra.mxu0 %v3662
    %3664 = vmatprep.subr.mxu0 0.0
    %v3665 = vand.u32 %v189, 4294901760
    %v3666 = vsub.f32 %v189, %v3665
    %v3667 = vand.u32 %v3666, 4294901760
    %3668 = vmatpush1.msra.mxu0 %v3667
    %3669 = vmatprep.subr.mxu0 0.0
    %v3670 = vand.u32 %v190, 4294901760
    %v3671 = vsub.f32 %v190, %v3670
    %v3672 = vand.u32 %v3671, 4294901760
    %3673 = vmatpush1.msra.mxu0 %v3672
    %3674 = vmatprep.subr.mxu0 0.0
    %v3675 = vand.u32 %v191, 4294901760
    %v3676 = vsub.f32 %v191, %v3675
    %v3677 = vand.u32 %v3676, 4294901760
    %3678 = vmatpush1.msra.mxu0 %v3677
    %3679 = vmatprep.subr.mxu0 0.0
    %v3680 = vand.u32 %v192, 4294901760
    %v3681 = vsub.f32 %v192, %v3680
    %v3682 = vand.u32 %v3681, 4294901760
    %3683 = vmatpush1.msra.mxu0 %v3682
    %3684 = vmatprep.subr.mxu0 0.0
    %v3685 = vand.u32 %v193, 4294901760
    %v3686 = vsub.f32 %v193, %v3685
    %v3687 = vand.u32 %v3686, 4294901760
    %3688 = vmatpush1.msra.mxu0 %v3687
    %3689 = vmatprep.subr.mxu0 0.0
    %3690 = vmatpush1.msra.mxu0 0.0
    %3691 = vmatprep.subr.mxu0 0.0
    %3692 = vmatpush1.msra.mxu0 0.0
    %3693 = vmatprep.subr.mxu0 0.0
    %3694 = vmatpush1.msra.mxu0 0.0
    %3695 = vmatprep.subr.mxu0 0.0
    %3696 = vmatpush1.msra.mxu0 0.0
    %3697 = vmatprep.subr.mxu0 0.0
    %3698 = vmatpush1.msra.mxu0 0.0
    %3699 = vmatprep.subr.mxu0 0.0
    %3700 = vmatpush1.msra.mxu0 0.0
    %3701 = vmatprep.subr.mxu0 0.0
    %3702 = vmatpush1.msra.mxu0 0.0
    %3703 = vmatprep.subr.mxu0 0.0
    %3704 = vmatpush1.msra.mxu0 0.0
    %3705 = vmatprep.subr.mxu0 0.0
    %3706 = vmatpush1.msra.mxu0 0.0
    %3707 = vmatprep.subr.mxu0 0.0
    %3708 = vmatpush1.msra.mxu0 0.0
    %3709 = vmatprep.subr.mxu0 0.0
    %3710 = vmatpush1.msra.mxu0 0.0
    %3711 = vmatprep.subr.mxu0 0.0
    %3712 = vmatpush1.msra.mxu0 0.0
    %3713 = vmatprep.subr.mxu0 0.0
    %3714 = vmatpush1.msra.mxu0 0.0
    %3715 = vmatprep.subr.mxu0 0.0
    %3716 = vmatpush1.msra.mxu0 0.0
    %3717 = vmatprep.subr.mxu0 0.0
    %3718 = vmatpush1.msra.mxu0 0.0
    %3719 = vmatprep.subr.mxu0 0.0
    %3720 = vmatpush1.msra.mxu0 0.0
    %3721 = vmatprep.subr.mxu0 0.0
    %3722 = vmatpush1.msra.mxu0 0.0
    %3723 = vmatprep.subr.mxu0 0.0
    %3724 = vmatpush1.msra.mxu0 0.0
    %3725 = vmatprep.subr.mxu0 0.0
    %3726 = vmatpush1.msra.mxu0 0.0
    %3727 = vmatprep.subr.mxu0 0.0
    %3728 = vmatpush1.msra.mxu0 0.0
    %3729 = vmatprep.subr.mxu0 0.0
    %3730 = vmatpush1.msra.mxu0 0.0
    %3731 = vmatprep.subr.mxu0 0.0
    %3732 = vmatpush1.msra.mxu0 0.0
    %3733 = vmatprep.subr.mxu0 0.0
    %3734 = vmatpush1.msra.mxu0 0.0
    %3735 = vmatprep.subr.mxu0 0.0
    %3736 = vmatpush1.msra.mxu0 0.0
    %3737 = vmatprep.mubr.f32.mxu0 0.0
    %v3738 = vand.u32 %v3046, 4294901760
    %3739 = vmatmul.mubr.f32.gmra.mrb[0].mxu0 %v3738
    %v3740 = vpop.f32.mrb[0].mxu0
    %v3741 = vadd.f32 %v3590, %v3740
    %v3742 = vpop.f32.mrb[0].mxu0
    %3743 = vmatprep.mubr.f32.mxu0 0.0
    %v3744 = vand.u32 %v3049, 4294901760
    %3745 = vmatmul.mubr.f32.gmra.mrb[0].mxu0 %v3744
    %v3746 = vpop.f32.mrb[0].mxu0
    %v3747 = vadd.f32 %v3598, %v3746
    %v3748 = vpop.f32.mrb[0].mxu0
    %3749 = vmatprep.mubr.f32.mxu0 0.0
    %v3750 = vand.u32 %v3052, 4294901760
    %3751 = vmatmul.mubr.f32.gmra.mrb[0].mxu0 %v3750
    %v3752 = vpop.f32.mrb[0].mxu0
    %v3753 = vadd.f32 %v3606, %v3752
    %v3754 = vpop.f32.mrb[0].mxu0
    %3755 = vmatprep.mubr.f32.mxu0 0.0
    %v3756 = vand.u32 %v3055, 4294901760
    %3757 = vmatmul.mubr.f32.gmra.mrb[0].mxu0 %v3756
    %v3758 = vpop.f32.mrb[0].mxu0
    %v3759 = vadd.f32 %v3614, %v3758
    %v3760 = vpop.f32.mrb[0].mxu0
    %3761 = vmatprep.mubr.f32.mxu0 0.0
    %v3762 = vand.u32 %v3058, 4294901760
    %3763 = vmatmul.mubr.f32.gmra.mrb[0].mxu0 %v3762
    %v3764 = vpop.f32.mrb[0].mxu0
    %v3765 = vadd.f32 %v3622, %v3764
    %v3766 = vpop.f32.mrb[0].mxu0
    %3767 = vmatprep.mubr.f32.mxu0 0.0
    %v3768 = vand.u32 %v3061, 4294901760
    %3769 = vmatmul.mubr.f32.gmra.mrb[0].mxu0 %v3768
    %v3770 = vpop.f32.mrb[0].mxu0
    %v3771 = vadd.f32 %v3630, %v3770
    %v3772 = vpop.f32.mrb[0].mxu0
    %3773 = vmatprep.mubr.f32.mxu0 0.0
    %v3774 = vand.u32 %v3064, 4294901760
    %3775 = vmatmul.mubr.f32.gmra.mrb[0].mxu0 %v3774
    %v3776 = vpop.f32.mrb[0].mxu0
    %v3777 = vadd.f32 %v3638, %v3776
    %v3778 = vpop.f32.mrb[0].mxu0
    %3779 = vmatprep.mubr.f32.mxu0 0.0
    %v3780 = vand.u32 %v3067, 4294901760
    %3781 = vmatmul.mubr.f32.gmra.mrb[0].mxu0 %v3780
    %v3782 = vpop.f32.mrb[0].mxu0
    %v3783 = vadd.f32 %v3646, %v3782
    %v3784 = vpop.f32.mrb[0].mxu0
    %3785 = vdwg.mxu0
    %3786 = vmatprep.subr.mxu0 0.0
    %v3787 = vand.u32 %v186, 4294901760
    %3788 = vmatpush1.msra.mxu0 %v3787
    %3789 = vmatprep.subr.mxu0 0.0
    %v3790 = vand.u32 %v187, 4294901760
    %3791 = vmatpush1.msra.mxu0 %v3790
    %3792 = vmatprep.subr.mxu0 0.0
    %v3793 = vand.u32 %v188, 4294901760
    %3794 = vmatpush1.msra.mxu0 %v3793
    %3795 = vmatprep.subr.mxu0 0.0
    %v3796 = vand.u32 %v189, 4294901760
    %3797 = vmatpush1.msra.mxu0 %v3796
    %3798 = vmatprep.subr.mxu0 0.0
    %v3799 = vand.u32 %v190, 4294901760
    %3800 = vmatpush1.msra.mxu0 %v3799
    %3801 = vmatprep.subr.mxu0 0.0
    %v3802 = vand.u32 %v191, 4294901760
    %3803 = vmatpush1.msra.mxu0 %v3802
    %3804 = vmatprep.subr.mxu0 0.0
    %v3805 = vand.u32 %v192, 4294901760
    %3806 = vmatpush1.msra.mxu0 %v3805
    %3807 = vmatprep.subr.mxu0 0.0
    %v3808 = vand.u32 %v193, 4294901760
    %3809 = vmatpush1.msra.mxu0 %v3808
    %3810 = vmatprep.subr.mxu0 0.0
    %3811 = vmatpush1.msra.mxu0 0.0
    %3812 = vmatprep.subr.mxu0 0.0
    %3813 = vmatpush1.msra.mxu0 0.0
    %3814 = vmatprep.subr.mxu0 0.0
    %3815 = vmatpush1.msra.mxu0 0.0
    %3816 = vmatprep.subr.mxu0 0.0
    %3817 = vmatpush1.msra.mxu0 0.0
    %3818 = vmatprep.subr.mxu0 0.0
    %3819 = vmatpush1.msra.mxu0 0.0
    %3820 = vmatprep.subr.mxu0 0.0
    %3821 = vmatpush1.msra.mxu0 0.0
    %3822 = vmatprep.subr.mxu0 0.0
    %3823 = vmatpush1.msra.mxu0 0.0
    %3824 = vmatprep.subr.mxu0 0.0
    %3825 = vmatpush1.msra.mxu0 0.0
    %3826 = vmatprep.subr.mxu0 0.0
    %3827 = vmatpush1.msra.mxu0 0.0
    %3828 = vmatprep.subr.mxu0 0.0
    %3829 = vmatpush1.msra.mxu0 0.0
    %3830 = vmatprep.subr.mxu0 0.0
    %3831 = vmatpush1.msra.mxu0 0.0
    %3832 = vmatprep.subr.mxu0 0.0
    %3833 = vmatpush1.msra.mxu0 0.0
    %3834 = vmatprep.subr.mxu0 0.0
    %3835 = vmatpush1.msra.mxu0 0.0
    %3836 = vmatprep.subr.mxu0 0.0
    %3837 = vmatpush1.msra.mxu0 0.0
    %3838 = vmatprep.subr.mxu0 0.0
    %3839 = vmatpush1.msra.mxu0 0.0
    %3840 = vmatprep.subr.mxu0 0.0
    %3841 = vmatpush1.msra.mxu0 0.0
    %3842 = vmatprep.subr.mxu0 0.0
    %3843 = vmatpush1.msra.mxu0 0.0
    %3844 = vmatprep.subr.mxu0 0.0
    %3845 = vmatpush1.msra.mxu0 0.0
    %3846 = vmatprep.subr.mxu0 0.0
    %3847 = vmatpush1.msra.mxu0 0.0
    %3848 = vmatprep.subr.mxu0 0.0
    %3849 = vmatpush1.msra.mxu0 0.0
    %3850 = vmatprep.subr.mxu0 0.0
    %3851 = vmatpush1.msra.mxu0 0.0
    %3852 = vmatprep.subr.mxu0 0.0
    %3853 = vmatpush1.msra.mxu0 0.0
    %3854 = vmatprep.subr.mxu0 0.0
    %3855 = vmatpush1.msra.mxu0 0.0
    %3856 = vmatprep.subr.mxu0 0.0
    %3857 = vmatpush1.msra.mxu0 0.0
    %3858 = vmatprep.mubr.f32.mxu0 0.0
    %v3859 = vand.u32 %v3046, 4294901760
    %3860 = vmatmul.mubr.f32.gmra.mrb[0].mxu0 %v3859
    %v3861 = vpop.f32.mrb[0].mxu0
    %v3862 = vadd.f32 %v3741, %v3861
    %v3863 = vpop.f32.mrb[0].mxu0
    %3864 = vmatprep.mubr.f32.mxu0 0.0
    %v3865 = vand.u32 %v3049, 4294901760
    %3866 = vmatmul.mubr.f32.gmra.mrb[0].mxu0 %v3865
    %v3867 = vpop.f32.mrb[0].mxu0
    %v3868 = vadd.f32 %v3747, %v3867
    %v3869 = vpop.f32.mrb[0].mxu0
    %3870 = vmatprep.mubr.f32.mxu0 0.0
    %v3871 = vand.u32 %v3052, 4294901760
    %3872 = vmatmul.mubr.f32.gmra.mrb[0].mxu0 %v3871
    %v3873 = vpop.f32.mrb[0].mxu0
    %v3874 = vadd.f32 %v3753, %v3873
    %v3875 = vpop.f32.mrb[0].mxu0
    %3876 = vmatprep.mubr.f32.mxu0 0.0
    %v3877 = vand.u32 %v3055, 4294901760
    %3878 = vmatmul.mubr.f32.gmra.mrb[0].mxu0 %v3877
    %v3879 = vpop.f32.mrb[0].mxu0
    %v3880 = vadd.f32 %v3759, %v3879
    %v3881 = vpop.f32.mrb[0].mxu0
    %3882 = vmatprep.mubr.f32.mxu0 0.0
    %v3883 = vand.u32 %v3058, 4294901760
    %3884 = vmatmul.mubr.f32.gmra.mrb[0].mxu0 %v3883
    %v3885 = vpop.f32.mrb[0].mxu0
    %v3886 = vadd.f32 %v3765, %v3885
    %v3887 = vpop.f32.mrb[0].mxu0
    %3888 = vmatprep.mubr.f32.mxu0 0.0
    %v3889 = vand.u32 %v3061, 4294901760
    %3890 = vmatmul.mubr.f32.gmra.mrb[0].mxu0 %v3889
    %v3891 = vpop.f32.mrb[0].mxu0
    %v3892 = vadd.f32 %v3771, %v3891
    %v3893 = vpop.f32.mrb[0].mxu0
    %3894 = vmatprep.mubr.f32.mxu0 0.0
    %v3895 = vand.u32 %v3064, 4294901760
    %3896 = vmatmul.mubr.f32.gmra.mrb[0].mxu0 %v3895
    %v3897 = vpop.f32.mrb[0].mxu0
    %v3898 = vadd.f32 %v3777, %v3897
    %v3899 = vpop.f32.mrb[0].mxu0
    %3900 = vmatprep.mubr.f32.mxu0 0.0
    %v3901 = vand.u32 %v3067, 4294901760
    %3902 = vmatmul.mubr.f32.gmra.mrb[0].mxu0 %v3901
    %v3903 = vpop.f32.mrb[0].mxu0
    %v3904 = vadd.f32 %v3783, %v3903
    %v3905 = vpop.f32.mrb[0].mxu0
    %3906 = vdwg.mxu0
    %v3907 = vadd.f32 %v3862, %v2010
    %v3908 = vadd.f32 %v3868, %v2010
    %v3909 = vadd.f32 %v3874, %v2010
    %v3910 = vadd.f32 %v3880, %v2010
    %v3911 = vadd.f32 %v3886, %v2010
    %v3912 = vadd.f32 %v3892, %v2010
    %v3913 = vadd.f32 %v3898, %v2010
    %v3914 = vadd.f32 %v3904, %v2010
    %3915 = vst [vmem:[%s4] sm:$0xff] %v2011
    %3916 = vst [vmem:[%s4 + $0x8] sm:$0xff] %v3907
    %3917 = vst [vmem:[%s4 + $0x10] sm:$0xff] %v2012
    %3918 = vst [vmem:[%s4 + $0x18] sm:$0xff] %v3908
    %3919 = vst [vmem:[%s4 + $0x20] sm:$0xff] %v2013
    %3920 = vst [vmem:[%s4 + $0x28] sm:$0xff] %v3909
    %3921 = vst [vmem:[%s4 + $0x30] sm:$0xff] %v2014
    %3922 = vst [vmem:[%s4 + $0x38] sm:$0xff] %v3910
    %3923 = vst [vmem:[%s4 + $0x40] sm:$0xff] %v2015
    %3924 = vst [vmem:[%s4 + $0x48] sm:$0xff] %v3911
    %3925 = vst [vmem:[%s4 + $0x50] sm:$0xff] %v2016
    %3926 = vst [vmem:[%s4 + $0x58] sm:$0xff] %v3912
    %3927 = vst [vmem:[%s4 + $0x60] sm:$0xff] %v2017
    %3928 = vst [vmem:[%s4 + $0x68] sm:$0xff] %v3913
    %3929 = vst [vmem:[%s4 + $0x70] sm:$0xff] %v2018
    %3930 = vst [vmem:[%s4 + $0x78] sm:$0xff] %v3914
    // Predicated region
    $region30: #{conv_transpose2d_s2k2.1} parent=1 // pred_check
      _
    $region31: #{conv_transpose2d_s2k2.1} parent=1 // pred_check_branch
      %3932 = sbr.rel (0) target = $region33
    $region32: #{conv_transpose2d_s2k2.1} parent=1 // pred_region
      _
    $region33: #{conv_transpose2d_s2k2.1} parent=1 // pred_fallthru
      _
    // Predicated region
    $region34: #{conv_transpose2d_s2k2.1} parent=1 // pred_check
      _
    $region35: #{conv_transpose2d_s2k2.1} parent=1 // pred_check_branch
      %3934 = sbr.rel (0) target = $region37
    $region36: #{conv_transpose2d_s2k2.1} parent=1 // pred_region
      _
    $region37: #{conv_transpose2d_s2k2.1} parent=1 // pred_fallthru
      _
    %3935 = vsyncpa [#allocation4], 1
    %3936 = vsyncpa [#allocation8], 1
    %3937 = vsyncpa [#allocation5], 1

</llo_original>
